<compile_context>
chip_gen: v7x
topology: tpu7x:2x2x1
jax: 0.10.0
libtpu: 0.0.40
codegen_flags: <defaults>
</compile_context>

<pallas_src>
import jax
import jax.numpy as jnp
import numpy as np
from jax import lax
from jax.experimental import pallas as pl
from jax.experimental.pallas import tpu as pltpu

_BN_EPS = 1e-5
_TARGET_TILE_M = 512          # rows (lanes) per grid step: ~85%+ of HBM roofline at 512-1024
_MIN_TILE_M = 128
_VMEM_FALLBACK_BYTES = 32 * 1024 * 1024
_vmem_cache = []


def _vmem_limit_bytes():
    if not _vmem_cache:
        try:
            cap = int(pltpu.get_tpu_info().vmem_capacity_bytes)
            # ~48 MiB on v7x (64 MiB/TC physical), ~96 MiB on v5e/v6e (128 MiB physical).
            _vmem_cache.append(min(cap * 3 // 4, 100 * 1024 * 1024))
        except Exception:
            _vmem_cache.append(_VMEM_FALLBACK_BYTES)
    return _vmem_cache[0]


def _mosaic_params():
    return pltpu.CompilerParams(
        dimension_semantics=("parallel",),          # pure map over row (lane) tiles
        vmem_limit_bytes=_vmem_limit_bytes())


def _plan_rows(m):
    """Pick (tile_m, padded_m) for the lane (row) axis.

    Keeps the grid >= 2 whenever m > _MIN_TILE_M (so v7x's two TensorCores both get work) and
    pads m up to a tile multiple instead of shrinking to tiny divisors or one giant block.
    """
    tm = _TARGET_TILE_M
    while tm > _MIN_TILE_M and m <= tm:
        tm //= 2
    m_pad = ((m + tm - 1) // tm) * tm
    return tm, m_pad


def _pad_cols(a, m_pad):
    m = a.shape[-1]
    return a if m == m_pad else jnp.pad(a, ((0, 0), (0, m_pad - m)))


# --------------------------- Pallas kernels ---------------------------------

def _conv_stats_kernel(w_ref, p_ref, y_ref, s_ref, ss_ref):
    """(C, TILE_M) conv-as-matmul (bf16 x bf16 -> f32 MXU) + per-tile BN partial statistics.

    The conv bias is intentionally omitted: it is exactly cancelled by the BatchNorm mean
    subtraction that always follows.  Zero-padded patch columns therefore produce zero outputs
    and do not perturb the statistics.
    """
    y = jnp.dot(w_ref[...], p_ref[...], preferred_element_type=jnp.float32)   # (C, TILE_M) f32
    y_ref[...] = y.astype(y_ref.dtype)                                        # bf16 writeback
    s_ref[...] = jnp.sum(y, axis=1, keepdims=True)[None]                      # (1, C, 1)
    ss_ref[...] = jnp.sum(y * y, axis=1, keepdims=True)[None]                 # (1, C, 1)


def _conv_bias_kernel(w_ref, b_ref, p_ref, o_ref):
    """Plain (C, TILE_M) conv-as-matmul + bias (coarse-resolution branch convs)."""
    o = jnp.dot(w_ref[...], p_ref[...], preferred_element_type=jnp.float32) + b_ref[...]
    o_ref[...] = o.astype(o_ref.dtype)


def _bn_relu_kernel(y_ref, sc_ref, sh_ref, o_ref):
    """BatchNorm (precomputed per-channel (C,1) scale/shift) + ReLU; f32 math, bf16 I/O."""
    y = y_ref[...].astype(jnp.float32)
    o_ref[...] = jnp.maximum(y * sc_ref[...] + sh_ref[...], 0.0).astype(o_ref.dtype)


def _bn_relu_res_kernel(y_ref, sc_ref, sh_ref, r_ref, o_ref):
    """BatchNorm + ReLU + residual add (final layer)."""
    y = y_ref[...].astype(jnp.float32)
    o = jnp.maximum(y * sc_ref[...] + sh_ref[...], 0.0) + r_ref[...].astype(jnp.float32)
    o_ref[...] = o.astype(o_ref.dtype)


def _gate_kernel(w_ref, b_ref, p_ref, x_ref, xc_ref, xg_ref):
    """conv_24 (mid->1) as a (1, TILE_M) matmul + bias, then the gated multiply x_c * x."""
    xc = jnp.dot(w_ref[...], p_ref[...], preferred_element_type=jnp.float32) + b_ref[...]
    xc_ref[...] = xc                                           # (1, TILE_M) lane-dense f32
    xg_ref[...] = (xc * x_ref[...].astype(jnp.float32)).astype(xg_ref.dtype)


# --------------------------- pallas_call wrappers ----------------------------

def conv_stats(w_bf16, patches_bf16, out_dtype=jnp.bfloat16):
    c, k = w_bf16.shape
    m = patches_bf16.shape[1]
    tm, m_pad = _plan_rows(m)
    nt = m_pad // tm
    p = _pad_cols(patches_bf16, m_pad)
    cost = pl.CostEstimate(
        flops=2 * m_pad * k * c, transcendentals=0,
        bytes_accessed=int(p.size * 2 + w_bf16.size * 2
                           + m_pad * c * np.dtype(out_dtype).itemsize + nt * c * 8))
    return pl.pallas_call(
        _conv_stats_kernel,
        grid=(nt,),
        out_shape=(jax.ShapeDtypeStruct((c, m_pad), out_dtype),
                   jax.ShapeDtypeStruct((nt, c, 1), jnp.float32),
                   jax.ShapeDtypeStruct((nt, c, 1), jnp.float32)),
        in_specs=[pl.BlockSpec((c, k), lambda i: (0, 0)),
                  pl.BlockSpec((k, tm), lambda i: (0, i))],
        out_specs=(pl.BlockSpec((c, tm), lambda i: (0, i)),
                   pl.BlockSpec((1, c, 1), lambda i: (i, 0, 0)),
                   pl.BlockSpec((1, c, 1), lambda i: (i, 0, 0))),
        compiler_params=_mosaic_params(),
        cost_estimate=cost,
    )(w_bf16, p)


def conv_bias(w_bf16, b_f32, patches_bf16, out_dtype=jnp.bfloat16):
    c, k = w_bf16.shape
    m = patches_bf16.shape[1]
    tm, m_pad = _plan_rows(m)
    nt = m_pad // tm
    p = _pad_cols(patches_bf16, m_pad)
    cost = pl.CostEstimate(
        flops=2 * m_pad * k * c, transcendentals=0,
        bytes_accessed=int(p.size * 2 + w_bf16.size * 2
                           + m_pad * c * np.dtype(out_dtype).itemsize))
    return pl.pallas_call(
        _conv_bias_kernel,
        grid=(nt,),
        out_shape=jax.ShapeDtypeStruct((c, m_pad), out_dtype),
        in_specs=[pl.BlockSpec((c, k), lambda i: (0, 0)),
                  pl.BlockSpec((c, 1), lambda i: (0, 0)),
                  pl.BlockSpec((k, tm), lambda i: (0, i))],
        out_specs=pl.BlockSpec((c, tm), lambda i: (0, i)),
        compiler_params=_mosaic_params(),
        cost_estimate=cost,
    )(w_bf16, b_f32, p)


def bn_relu(y, scale, shift, res=None, out_dtype=jnp.bfloat16):
    c, m_pad = y.shape
    tm, m_pad2 = _plan_rows(m_pad)
    assert m_pad2 == m_pad, "activation must arrive already padded to a tile multiple"
    nt = m_pad // tm
    row = pl.BlockSpec((c, tm), lambda i: (0, i))
    vec = pl.BlockSpec((c, 1), lambda i: (0, 0))
    alias = {0: 0} if np.dtype(out_dtype) == y.dtype else {}
    if res is None:
        return pl.pallas_call(
            _bn_relu_kernel,
            grid=(nt,),
            out_shape=jax.ShapeDtypeStruct((c, m_pad), out_dtype),
            in_specs=[row, vec, vec],
            out_specs=row,
            input_output_aliases=alias,
            compiler_params=_mosaic_params(),
        )(y, scale, shift)
    return pl.pallas_call(
        _bn_relu_res_kernel,
        grid=(nt,),
        out_shape=jax.ShapeDtypeStruct((c, m_pad), out_dtype),
        in_specs=[row, vec, vec, row],
        out_specs=row,
        compiler_params=_mosaic_params(),
    )(y, scale, shift, res)


def gate(w_bf16, b_f32, patches_bf16, x_pad_bf16):
    _, k = w_bf16.shape
    mid, m_pad = x_pad_bf16.shape
    m = patches_bf16.shape[1]
    tm, m_pad2 = _plan_rows(m)
    assert m_pad2 == m_pad, "gate input activation and patch slab must share the row padding"
    nt = m_pad // tm
    p = _pad_cols(patches_bf16, m_pad)
    return pl.pallas_call(
        _gate_kernel,
        grid=(nt,),
        out_shape=(jax.ShapeDtypeStruct((1, m_pad), jnp.float32),     # x_c, lane-dense
                   jax.ShapeDtypeStruct((mid, m_pad), jnp.bfloat16)),  # x_c * x
        in_specs=[pl.BlockSpec((1, k), lambda i: (0, 0)),
                  pl.BlockSpec((1, 1), lambda i: (0, 0)),
                  pl.BlockSpec((k, tm), lambda i: (0, i)),
                  pl.BlockSpec((mid, tm), lambda i: (0, i))],
        out_specs=(pl.BlockSpec((1, tm), lambda i: (0, i)),
                   pl.BlockSpec((mid, tm), lambda i: (0, i))),
        compiler_params=_mosaic_params(),
    )(w_bf16, b_f32, p, x_pad_bf16)


# --------------------------- JAX glue (channel-major) ------------------------

def _im2col_cm(x_cnhw, kh, kw, stride, pad, dil):
    """Channel-major im2col: (C, N, H, W) -> ((kh*kw*C, N*Ho*Wo) slab, Ho, Wo).

    Row (sublane) index is tap-major / channel-minor; column (lane) index flattens (N, Ho, Wo).
    """
    c, n, h, w = x_cnhw.shape
    xp = jnp.pad(x_cnhw, ((0, 0), (0, 0), (pad, pad), (pad, pad)))
    ho = (h + 2 * pad - dil * (kh - 1) - 1) // stride + 1
    wo = (w + 2 * pad - dil * (kw - 1) - 1) // stride + 1
    taps = []
    for ky in range(kh):
        for kx in range(kw):
            ys = slice(ky * dil, ky * dil + stride * (ho - 1) + 1, stride)
            xs = slice(kx * dil, kx * dil + stride * (wo - 1) + 1, stride)
            taps.append(xp[:, :, ys, xs])
    p = jnp.stack(taps, axis=0)                          # (kh*kw, C, N, Ho, Wo)
    return p.reshape(kh * kw * c, n * ho * wo), ho, wo


def _wmat_cm(w_oihw):
    """PyTorch (Cout, Cin, KH, KW) -> (Cout, KH*KW*Cin), matching _im2col_cm row ordering."""
    cout, cin, kh, kw = w_oihw.shape
    return jnp.transpose(w_oihw, (0, 2, 3, 1)).reshape(cout, kh * kw * cin)


def _nearest_resize_cm(x_cnhw, out_h, out_w):
    """F.interpolate(..., mode='nearest') on a channel-major tensor: src = floor(dst*in/out)."""
    _, _, h, w = x_cnhw.shape
    iy = (jnp.arange(out_h) * h) // out_h
    ix = (jnp.arange(out_w) * w) // out_w
    return x_cnhw[:, :, iy][:, :, :, ix]


def _bn_scale_shift(s, ss, m_total, gamma, beta):
    """Finish the cross-tile BN reduction (tiny, per-channel) -> fused (C, 1) scale/shift."""
    mean = jnp.sum(s, axis=0) / m_total                    # (C, 1)
    var = jnp.sum(ss, axis=0) / m_total - mean * mean      # biased, like PyTorch train-mode BN
    var = jnp.maximum(var, 0.0)
    scale = gamma.reshape(-1, 1) * lax.rsqrt(var + _BN_EPS)
    shift = beta.reshape(-1, 1) - mean * scale
    return scale, shift


# --------------------------- LRAMBlock forward (Pallas path) -----------------

def lram_block_forward(params, x_nchw):
    n, cin, h, w = x_nchw.shape
    mid = params["conv_2"]["w"].shape[0]
    out_c = params["conv_3"]["w"].shape[0]
    c3 = mid // 3
    m = n * h * w
    _, m_pad = _plan_rows(m)

    bf16 = jnp.bfloat16
    # Channel-major activations: (C, N, H, W); rows of every matmul flatten (N, H, W) on lanes.
    x_cm = jnp.transpose(x_nchw, (1, 0, 2, 3)).astype(jnp.float32)     # (Cin, N, H, W)
    x_cm_bf = x_cm.astype(bf16)
    short_pad = _pad_cols(x_cm.reshape(cin, m), m_pad)                 # f32 residual

    # conv_1 -> bn_1 -> relu_1  (two-pass: conv + partial stats, then normalize)
    p1, _, _ = _im2col_cm(x_cm_bf, 3, 3, 1, 1, 1)
    y1, s1, ss1 = conv_stats(_wmat_cm(params["conv_1"]["w"]).astype(bf16), p1)
    sc1, sh1 = _bn_scale_shift(s1, ss1, m, params["bn_1"]["g"], params["bn_1"]["b"])
    a1 = bn_relu(y1, sc1, sh1)                                         # (mid, m_pad) bf16

    # conv_2 -> bn_2 -> relu_2
    a1_sp = a1[:, :m].reshape(mid, n, h, w)
    p2, _, _ = _im2col_cm(a1_sp, 3, 3, 1, 1, 1)
    y2, s2, ss2 = conv_stats(_wmat_cm(params["conv_2"]["w"]).astype(bf16), p2)
    sc2, sh2 = _bn_scale_shift(s2, ss2, m, params["bn_2"]["g"], params["bn_2"]["b"])
    a2 = bn_relu(y2, sc2, sh2)                                         # (mid, m_pad) bf16
    a2_sp = a2[:, :m].reshape(mid, n, h, w)

    # conv_21/22/23 at native coarse resolution, then nearest-upsample the small outputs.
    def branch(ch_slice, wkey, stride, pad, dil):
        xb = a2_sp[ch_slice]
        pb, ho, wo = _im2col_cm(xb, 3, 3, stride, pad, dil)
        mb = n * ho * wo
        yb = conv_bias(_wmat_cm(params[wkey]["w"]).astype(bf16),
                       params[wkey]["b"].reshape(-1, 1), pb)
        yb = yb[:, :mb].reshape(-1, n, ho, wo)
        return _nearest_resize_cm(yb, h, w)

    xc_in = jnp.concatenate(
        [branch(slice(0, c3), "conv_21", 3, 1, 1),
         branch(slice(c3, 2 * c3), "conv_22", 5, 2, 2),
         branch(slice(2 * c3, mid), "conv_23", 9, 4, 4)], axis=0)      # (mid, N, H, W) bf16

    # conv_24 (mid -> 1) + gating multiply x = x_c * x
    p24, _, _ = _im2col_cm(xc_in, 3, 3, 1, 1, 1)
    xc_flat, xg = gate(_wmat_cm(params["conv_24"]["w"]).astype(bf16),
                       params["conv_24"]["b"].reshape(1, 1), p24, a2)

    # conv_3 -> bn_3 -> relu_3 (+ residual only when in_channels == out_channels)
    xg_sp = xg[:, :m].reshape(mid, n, h, w)
    p3, _, _ = _im2col_cm(xg_sp, 3, 3, 1, 1, 1)
    y3, s3, ss3 = conv_stats(_wmat_cm(params["conv_3"]["w"]).astype(bf16), p3)
    sc3, sh3 = _bn_scale_shift(s3, ss3, m, params["bn_3"]["g"], params["bn_3"]["b"])
    res = short_pad if cin == out_c else None
    out = bn_relu(y3, sc3, sh3, res=res, out_dtype=jnp.float32)        # (out_c, m_pad) f32

    out_nchw = jnp.transpose(out[:, :m].reshape(out_c, n, h, w), (1, 0, 2, 3))
    xc_nchw = jnp.transpose(xc_flat[:, :m].reshape(1, n, h, w), (1, 0, 2, 3))
    return out_nchw, xc_nchw


# --------------------------- pure-JAX reference (for validation) -------------

def _ref_conv(x_nhwc, w_oihw, b, stride, pad, dil):
    w_hwio = jnp.transpose(w_oihw, (2, 3, 1, 0))
    y = lax.conv_general_dilated(
        x_nhwc, w_hwio, window_strides=(stride, stride),
        padding=[(pad, pad), (pad, pad)], rhs_dilation=(dil, dil),
        dimension_numbers=("NHWC", "HWIO", "NHWC"),
        precision=lax.Precision.HIGHEST)
    return y + b.reshape(1, 1, 1, -1)


def _nearest_resize_nhwc(x_nhwc, out_h, out_w):
    _, h, w, _ = x_nhwc.shape
    iy = (jnp.arange(out_h) * h) // out_h
    ix = (jnp.arange(out_w) * w) // out_w
    return x_nhwc[:, iy][:, :, ix]


def _ref_bn_relu(x, g, b):
    mean = jnp.mean(x, axis=(0, 1, 2), keepdims=True)
    var = jnp.var(x, axis=(0, 1, 2), keepdims=True)        # biased, like PyTorch train-mode BN
    y = (x - mean) / jnp.sqrt(var + _BN_EPS)
    return jnp.maximum(y * g.reshape(1, 1, 1, -1) + b.reshape(1, 1, 1, -1), 0.0)


def lram_block_reference(params, x_nchw):
    n, cin, h, w = x_nchw.shape
    mid = params["conv_2"]["w"].shape[0]
    out_c = params["conv_3"]["w"].shape[0]
    c3 = mid // 3
    x = jnp.transpose(x_nchw, (0, 2, 3, 1)).astype(jnp.float32)
    short = x
    x = _ref_bn_relu(_ref_conv(x, params["conv_1"]["w"], params["conv_1"]["b"], 1, 1, 1),
                     params["bn_1"]["g"], params["bn_1"]["b"])
    x = _ref_bn_relu(_ref_conv(x, params["conv_2"]["w"], params["conv_2"]["b"], 1, 1, 1),
                     params["bn_2"]["g"], params["bn_2"]["b"])
    x1 = _ref_conv(x[..., :c3], params["conv_21"]["w"], params["conv_21"]["b"], 3, 1, 1)
    x2 = _ref_conv(x[..., c3:2 * c3], params["conv_22"]["w"], params["conv_22"]["b"], 5, 2, 2)
    x3 = _ref_conv(x[..., 2 * c3:mid], params["conv_23"]["w"], params["conv_23"]["b"], 9, 4, 4)
    xc_in = jnp.concatenate([_nearest_resize_nhwc(x1, h, w), _nearest_resize_nhwc(x2, h, w),
                             _nearest_resize_nhwc(x3, h, w)], axis=-1)
    xc = _ref_conv(xc_in, params["conv_24"]["w"], params["conv_24"]["b"], 1, 1, 1)
    x = xc * x
    x = _ref_bn_relu(_ref_conv(x, params["conv_3"]["w"], params["conv_3"]["b"], 1, 1, 1),
                     params["bn_3"]["g"], params["bn_3"]["b"])
    if cin == out_c:
        x = x + short
    return jnp.transpose(x, (0, 3, 1, 2)), jnp.transpose(xc, (0, 3, 1, 2))


# --------------------------- deterministic params ----------------------------

def init_params(key, in_c, mid_c, out_c):
    c3 = mid_c // 3
    c3b = mid_c - 2 * c3
    keys = jax.random.split(key, 10)

    def conv(k, co, ci):
        kw_, kb_ = jax.random.split(k)
        return {"w": 0.1 * jax.random.normal(kw_, (co, ci, 3, 3), jnp.float32),
                "b": 0.05 * jax.random.normal(kb_, (co,), jnp.float32)}

    def bn(k, c):
        kg, kb = jax.random.split(k)
        return {"g": 1.0 + 0.1 * jax.random.normal(kg, (c,), jnp.float32),
                "b": 0.1 * jax.random.normal(kb, (c,), jnp.float32)}

    return {
        "conv_1": conv(keys[0], mid_c, in_c), "bn_1": bn(keys[1], mid_c),
        "conv_2": conv(keys[2], mid_c, mid_c), "bn_2": bn(keys[3], mid_c),
        "conv_21": conv(keys[4], c3, c3),
        "conv_22": conv(keys[5], c3, c3),
        "conv_23": conv(keys[6], c3b, c3b),
        "conv_24": conv(keys[7], 1, mid_c),
        "conv_3": conv(keys[8], out_c, mid_c), "bn_3": bn(keys[9], out_c),
    }


# --------------------------- main ---------------------------------------------

if __name__ == "__main__":
    in_c, mid_c, out_c = 4, 6, 4            # in == out -> exercises the residual path
    n, h, w = 2, 16, 16                     # M = 512 -> 2 row tiles of 256 (tiled BN stats)

    root = jax.random.PRNGKey(0)
    k_x, k_p = jax.random.split(root)
    x = jax.random.normal(k_x, (n, in_c, h, w), jnp.float32)    # NCHW like PyTorch
    params = init_params(k_p, in_c, mid_c, out_c)

    fwd = jax.jit(lram_block_forward)
    out, xc = fwd(params, x)
    out = jax.block_until_ready(out)
    xc = jax.block_until_ready(xc)

    ref_out, ref_xc = lram_block_reference(params, x)
    # bf16 MXU operands and bf16 intermediate activations -> loose but meaningful tolerance.
    np.testing.assert_allclose(np.asarray(out), np.asarray(ref_out), rtol=5e-2, atol=5e-2)
    np.testing.assert_allclose(np.asarray(xc), np.asarray(ref_xc), rtol=5e-2, atol=5e-2)
    assert out.shape == (n, out_c, h, w) and xc.shape == (n, 1, h, w)

    print("KERNEL_OK")
</pallas_src>

<mosaic_0001>
module attributes {stable_mosaic.version = 11 : i64} {
  func.func @_conv_stats_kernel(%arg0: i32, %arg1: memref<6x36xbf16, #tpu.memory_space<vmem>>, %arg2: memref<36x256xbf16, #tpu.memory_space<vmem>>, %arg3: memref<6x256xbf16, #tpu.memory_space<vmem>>, %arg4: memref<1x6x1xf32, #tpu.memory_space<vmem>>, %arg5: memref<1x6x1xf32, #tpu.memory_space<vmem>>) attributes {dimension_semantics = [#tpu.dimension_semantics<parallel>], iteration_bounds = array<i64: 2>, scalar_prefetch = 0 : i64, scratch_operands = 0 : i64, tpu.core_type = #tpu.core_type<tc>, window_params = [{pipeline_mode = #tpu.pipeline_mode<synchronous>, transform_indices = @transform_0, window_bounds = array<i64: 6, 36>}, {transform_indices = @transform_1, window_bounds = array<i64: 36, 256>}, {transform_indices = @transform_2, window_bounds = array<i64: 6, 256>}, {transform_indices = @transform_3, window_bounds = array<i64: 1, 6, 1>}, {transform_indices = @transform_4, window_bounds = array<i64: 1, 6, 1>}]} {
    %c0 = arith.constant 0 : index
    %c0_0 = arith.constant 0 : index
    %0 = vector.load %arg1[%c0, %c0_0] : memref<6x36xbf16, #tpu.memory_space<vmem>>, vector<6x36xbf16>
    %c0_1 = arith.constant 0 : index
    %c0_2 = arith.constant 0 : index
    %1 = vector.load %arg2[%c0_1, %c0_2] : memref<36x256xbf16, #tpu.memory_space<vmem>>, vector<36x256xbf16>
    %cst = arith.constant dense<0.000000e+00> : vector<6x256xf32>
    %2 = tpu.matmul %0, %1, %cst {dimension_numbers = #tpu.dot_dimension_numbers<[1], [0], [0], [1], [0, 0, 1, 1], [], []>} : vector<6x36xbf16>, vector<36x256xbf16>, vector<6x256xf32> -> vector<6x256xf32>
    %3 = arith.truncf %2 : vector<6x256xf32> to vector<6x256xbf16>
    %c0_3 = arith.constant 0 : index
    %c0_4 = arith.constant 0 : index
    %4 = vector.load %arg3[%c0_3, %c0_4] : memref<6x256xbf16, #tpu.memory_space<vmem>>, vector<6x256xbf16>
    tpu.vector_store %arg3[%c0_3, %c0_4], %3 {strides = array<i32>} : memref<6x256xbf16, #tpu.memory_space<vmem>>, vector<6x256xbf16>,
    %cst_5 = arith.constant dense<0.000000e+00> : vector<6xf32>
    %5 = vector.multi_reduction <add>, %2, %cst_5 [1] : vector<6x256xf32> to vector<6xf32>
    %6 = vector.shape_cast %5 : vector<6xf32> to vector<6x1xf32>
    %7 = vector.shape_cast %6 : vector<6x1xf32> to vector<1x6x1xf32>
    %c0_6 = arith.constant 0 : index
    %c0_7 = arith.constant 0 : index
    %c0_8 = arith.constant 0 : index
    %8 = vector.load %arg4[%c0_6, %c0_7, %c0_8] : memref<1x6x1xf32, #tpu.memory_space<vmem>>, vector<1x6x1xf32>
    tpu.vector_store %arg4[%c0_6, %c0_7, %c0_8], %7 {strides = array<i32>} : memref<1x6x1xf32, #tpu.memory_space<vmem>>, vector<1x6x1xf32>,
    %9 = arith.mulf %2, %2 : vector<6x256xf32>
    %cst_9 = arith.constant dense<0.000000e+00> : vector<6xf32>
    %10 = vector.multi_reduction <add>, %9, %cst_9 [1] : vector<6x256xf32> to vector<6xf32>
    %11 = vector.shape_cast %10 : vector<6xf32> to vector<6x1xf32>
    %12 = vector.shape_cast %11 : vector<6x1xf32> to vector<1x6x1xf32>
    %c0_10 = arith.constant 0 : index
    %c0_11 = arith.constant 0 : index
    %c0_12 = arith.constant 0 : index
    %13 = vector.load %arg5[%c0_10, %c0_11, %c0_12] : memref<1x6x1xf32, #tpu.memory_space<vmem>>, vector<1x6x1xf32>
    tpu.vector_store %arg5[%c0_10, %c0_11, %c0_12], %12 {strides = array<i32>} : memref<1x6x1xf32, #tpu.memory_space<vmem>>, vector<1x6x1xf32>,
    return
  }
  func.func @transform_0(%arg0: i32) -> (i32, i32) {
    %c0_i32 = arith.constant 0 : i32
    %c0_i32_0 = arith.constant 0 : i32
    %c0_i32_1 = arith.constant 0 : i32
    return %c0_i32, %c0_i32_0 : i32, i32
  }
  func.func @transform_1(%arg0: i32) -> (i32, i32) {
    %c0_i32 = arith.constant 0 : i32
    %c0_i32_0 = arith.constant 0 : i32
    return %c0_i32, %arg0 : i32, i32
  }
  func.func @transform_2(%arg0: i32) -> (i32, i32) {
    %c0_i32 = arith.constant 0 : i32
    %c0_i32_0 = arith.constant 0 : i32
    return %c0_i32, %arg0 : i32, i32
  }
  func.func @transform_3(%arg0: i32) -> (i32, i32, i32) {
    %c0_i32 = arith.constant 0 : i32
    %c0_i32_0 = arith.constant 0 : i32
    %c0_i32_1 = arith.constant 0 : i32
    return %arg0, %c0_i32, %c0_i32_0 : i32, i32, i32
  }
  func.func @transform_4(%arg0: i32) -> (i32, i32, i32) {
    %c0_i32 = arith.constant 0 : i32
    %c0_i32_0 = arith.constant 0 : i32
    %c0_i32_1 = arith.constant 0 : i32
    return %arg0, %c0_i32, %c0_i32_0 : i32, i32, i32
  }
}

module attributes {stable_mosaic.version = 11 : i64} {
  func.func @_bn_relu_kernel(%arg0: i32, %arg1: memref<6x256xbf16, #tpu.memory_space<vmem>>, %arg2: memref<6x1xf32, #tpu.memory_space<vmem>>, %arg3: memref<6x1xf32, #tpu.memory_space<vmem>>, %arg4: memref<6x256xbf16, #tpu.memory_space<vmem>>) attributes {dimension_semantics = [#tpu.dimension_semantics<parallel>], iteration_bounds = array<i64: 2>, scalar_prefetch = 0 : i64, scratch_operands = 0 : i64, tpu.core_type = #tpu.core_type<tc>, window_params = [{transform_indices = @transform_0, window_bounds = array<i64: 6, 256>}, {pipeline_mode = #tpu.pipeline_mode<synchronous>, transform_indices = @transform_1, window_bounds = array<i64: 6, 1>}, {pipeline_mode = #tpu.pipeline_mode<synchronous>, transform_indices = @transform_2, window_bounds = array<i64: 6, 1>}, {transform_indices = @transform_3, window_bounds = array<i64: 6, 256>}]} {
    %c0 = arith.constant 0 : index
    %c0_0 = arith.constant 0 : index
    %0 = vector.load %arg1[%c0, %c0_0] : memref<6x256xbf16, #tpu.memory_space<vmem>>, vector<6x256xbf16>
    %1 = arith.extf %0 : vector<6x256xbf16> to vector<6x256xf32>
    %c0_1 = arith.constant 0 : index
    %c0_2 = arith.constant 0 : index
    %2 = vector.load %arg2[%c0_1, %c0_2] : memref<6x1xf32, #tpu.memory_space<vmem>>, vector<6x1xf32>
    %3 = vector.broadcast %2 : vector<6x1xf32> to vector<6x256xf32>
    %4 = arith.mulf %1, %3 : vector<6x256xf32>
    %c0_3 = arith.constant 0 : index
    %c0_4 = arith.constant 0 : index
    %5 = vector.load %arg3[%c0_3, %c0_4] : memref<6x1xf32, #tpu.memory_space<vmem>>, vector<6x1xf32>
    %6 = vector.broadcast %5 : vector<6x1xf32> to vector<6x256xf32>
    %7 = arith.addf %4, %6 : vector<6x256xf32>
    %cst = arith.constant 0.000000e+00 : f32
    %8 = vector.broadcast %cst : f32 to vector<6x256xf32>
    %9 = arith.maximumf %7, %8 : vector<6x256xf32>
    %10 = arith.truncf %9 : vector<6x256xf32> to vector<6x256xbf16>
    %c0_5 = arith.constant 0 : index
    %c0_6 = arith.constant 0 : index
    %11 = vector.load %arg4[%c0_5, %c0_6] : memref<6x256xbf16, #tpu.memory_space<vmem>>, vector<6x256xbf16>
    tpu.vector_store %arg4[%c0_5, %c0_6], %10 {strides = array<i32>} : memref<6x256xbf16, #tpu.memory_space<vmem>>, vector<6x256xbf16>,
    return
  }
  func.func @transform_0(%arg0: i32) -> (i32, i32) {
    %c0_i32 = arith.constant 0 : i32
    %c0_i32_0 = arith.constant 0 : i32
    return %c0_i32, %arg0 : i32, i32
  }
  func.func @transform_1(%arg0: i32) -> (i32, i32) {
    %c0_i32 = arith.constant 0 : i32
    %c0_i32_0 = arith.constant 0 : i32
    %c0_i32_1 = arith.constant 0 : i32
    return %c0_i32, %c0_i32_0 : i32, i32
  }
  func.func @transform_2(%arg0: i32) -> (i32, i32) {
    %c0_i32 = arith.constant 0 : i32
    %c0_i32_0 = arith.constant 0 : i32
    %c0_i32_1 = arith.constant 0 : i32
    return %c0_i32, %c0_i32_0 : i32, i32
  }
  func.func @transform_3(%arg0: i32) -> (i32, i32) {
    %c0_i32 = arith.constant 0 : i32
    %c0_i32_0 = arith.constant 0 : i32
    return %c0_i32, %arg0 : i32, i32
  }
}

module attributes {stable_mosaic.version = 11 : i64} {
  func.func @_conv_stats_kernel(%arg0: i32, %arg1: memref<6x54xbf16, #tpu.memory_space<vmem>>, %arg2: memref<54x256xbf16, #tpu.memory_space<vmem>>, %arg3: memref<6x256xbf16, #tpu.memory_space<vmem>>, %arg4: memref<1x6x1xf32, #tpu.memory_space<vmem>>, %arg5: memref<1x6x1xf32, #tpu.memory_space<vmem>>) attributes {dimension_semantics = [#tpu.dimension_semantics<parallel>], iteration_bounds = array<i64: 2>, scalar_prefetch = 0 : i64, scratch_operands = 0 : i64, tpu.core_type = #tpu.core_type<tc>, window_params = [{pipeline_mode = #tpu.pipeline_mode<synchronous>, transform_indices = @transform_0, window_bounds = array<i64: 6, 54>}, {transform_indices = @transform_1, window_bounds = array<i64: 54, 256>}, {transform_indices = @transform_2, window_bounds = array<i64: 6, 256>}, {transform_indices = @transform_3, window_bounds = array<i64: 1, 6, 1>}, {transform_indices = @transform_4, window_bounds = array<i64: 1, 6, 1>}]} {
    %c0 = arith.constant 0 : index
    %c0_0 = arith.constant 0 : index
    %0 = vector.load %arg1[%c0, %c0_0] : memref<6x54xbf16, #tpu.memory_space<vmem>>, vector<6x54xbf16>
    %c0_1 = arith.constant 0 : index
    %c0_2 = arith.constant 0 : index
    %1 = vector.load %arg2[%c0_1, %c0_2] : memref<54x256xbf16, #tpu.memory_space<vmem>>, vector<54x256xbf16>
    %cst = arith.constant dense<0.000000e+00> : vector<6x256xf32>
    %2 = tpu.matmul %0, %1, %cst {dimension_numbers = #tpu.dot_dimension_numbers<[1], [0], [0], [1], [0, 0, 1, 1], [], []>} : vector<6x54xbf16>, vector<54x256xbf16>, vector<6x256xf32> -> vector<6x256xf32>
    %3 = arith.truncf %2 : vector<6x256xf32> to vector<6x256xbf16>
    %c0_3 = arith.constant 0 : index
    %c0_4 = arith.constant 0 : index
    %4 = vector.load %arg3[%c0_3, %c0_4] : memref<6x256xbf16, #tpu.memory_space<vmem>>, vector<6x256xbf16>
    tpu.vector_store %arg3[%c0_3, %c0_4], %3 {strides = array<i32>} : memref<6x256xbf16, #tpu.memory_space<vmem>>, vector<6x256xbf16>,
    %cst_5 = arith.constant dense<0.000000e+00> : vector<6xf32>
    %5 = vector.multi_reduction <add>, %2, %cst_5 [1] : vector<6x256xf32> to vector<6xf32>
    %6 = vector.shape_cast %5 : vector<6xf32> to vector<6x1xf32>
    %7 = vector.shape_cast %6 : vector<6x1xf32> to vector<1x6x1xf32>
    %c0_6 = arith.constant 0 : index
    %c0_7 = arith.constant 0 : index
    %c0_8 = arith.constant 0 : index
    %8 = vector.load %arg4[%c0_6, %c0_7, %c0_8] : memref<1x6x1xf32, #tpu.memory_space<vmem>>, vector<1x6x1xf32>
    tpu.vector_store %arg4[%c0_6, %c0_7, %c0_8], %7 {strides = array<i32>} : memref<1x6x1xf32, #tpu.memory_space<vmem>>, vector<1x6x1xf32>,
    %9 = arith.mulf %2, %2 : vector<6x256xf32>
    %cst_9 = arith.constant dense<0.000000e+00> : vector<6xf32>
    %10 = vector.multi_reduction <add>, %9, %cst_9 [1] : vector<6x256xf32> to vector<6xf32>
    %11 = vector.shape_cast %10 : vector<6xf32> to vector<6x1xf32>
    %12 = vector.shape_cast %11 : vector<6x1xf32> to vector<1x6x1xf32>
    %c0_10 = arith.constant 0 : index
    %c0_11 = arith.constant 0 : index
    %c0_12 = arith.constant 0 : index
    %13 = vector.load %arg5[%c0_10, %c0_11, %c0_12] : memref<1x6x1xf32, #tpu.memory_space<vmem>>, vector<1x6x1xf32>
    tpu.vector_store %arg5[%c0_10, %c0_11, %c0_12], %12 {strides = array<i32>} : memref<1x6x1xf32, #tpu.memory_space<vmem>>, vector<1x6x1xf32>,
    return
  }
  func.func @transform_0(%arg0: i32) -> (i32, i32) {
    %c0_i32 = arith.constant 0 : i32
    %c0_i32_0 = arith.constant 0 : i32
    %c0_i32_1 = arith.constant 0 : i32
    return %c0_i32, %c0_i32_0 : i32, i32
  }
  func.func @transform_1(%arg0: i32) -> (i32, i32) {
    %c0_i32 = arith.constant 0 : i32
    %c0_i32_0 = arith.constant 0 : i32
    return %c0_i32, %arg0 : i32, i32
  }
  func.func @transform_2(%arg0: i32) -> (i32, i32) {
    %c0_i32 = arith.constant 0 : i32
    %c0_i32_0 = arith.constant 0 : i32
    return %c0_i32, %arg0 : i32, i32
  }
  func.func @transform_3(%arg0: i32) -> (i32, i32, i32) {
    %c0_i32 = arith.constant 0 : i32
    %c0_i32_0 = arith.constant 0 : i32
    %c0_i32_1 = arith.constant 0 : i32
    return %arg0, %c0_i32, %c0_i32_0 : i32, i32, i32
  }
  func.func @transform_4(%arg0: i32) -> (i32, i32, i32) {
    %c0_i32 = arith.constant 0 : i32
    %c0_i32_0 = arith.constant 0 : i32
    %c0_i32_1 = arith.constant 0 : i32
    return %arg0, %c0_i32, %c0_i32_0 : i32, i32, i32
  }
}

module attributes {stable_mosaic.version = 11 : i64} {
  func.func @_conv_bias_kernel(%arg0: i32, %arg1: memref<2x18xbf16, #tpu.memory_space<vmem>>, %arg2: memref<2x1xf32, #tpu.memory_space<vmem>>, %arg3: memref<18x128xbf16, #tpu.memory_space<vmem>>, %arg4: memref<2x128xbf16, #tpu.memory_space<vmem>>) attributes {dimension_semantics = [#tpu.dimension_semantics<parallel>], iteration_bounds = array<i64: 1>, scalar_prefetch = 0 : i64, scratch_operands = 0 : i64, tpu.core_type = #tpu.core_type<tc>, window_params = [{pipeline_mode = #tpu.pipeline_mode<synchronous>, transform_indices = @transform_0, window_bounds = array<i64: 2, 18>}, {pipeline_mode = #tpu.pipeline_mode<synchronous>, transform_indices = @transform_1, window_bounds = array<i64: 2, 1>}, {transform_indices = @transform_2, window_bounds = array<i64: 18, 128>}, {transform_indices = @transform_3, window_bounds = array<i64: 2, 128>}]} {
    %c0 = arith.constant 0 : index
    %c0_0 = arith.constant 0 : index
    %0 = vector.load %arg1[%c0, %c0_0] : memref<2x18xbf16, #tpu.memory_space<vmem>>, vector<2x18xbf16>
    %c0_1 = arith.constant 0 : index
    %c0_2 = arith.constant 0 : index
    %1 = vector.load %arg3[%c0_1, %c0_2] : memref<18x128xbf16, #tpu.memory_space<vmem>>, vector<18x128xbf16>
    %cst = arith.constant dense<0.000000e+00> : vector<2x128xf32>
    %2 = tpu.matmul %0, %1, %cst {dimension_numbers = #tpu.dot_dimension_numbers<[1], [0], [0], [1], [0, 0, 1, 1], [], []>} : vector<2x18xbf16>, vector<18x128xbf16>, vector<2x128xf32> -> vector<2x128xf32>
    %c0_3 = arith.constant 0 : index
    %c0_4 = arith.constant 0 : index
    %3 = vector.load %arg2[%c0_3, %c0_4] : memref<2x1xf32, #tpu.memory_space<vmem>>, vector<2x1xf32>
    %4 = vector.broadcast %3 : vector<2x1xf32> to vector<2x128xf32>
    %5 = arith.addf %2, %4 : vector<2x128xf32>
    %6 = arith.truncf %5 : vector<2x128xf32> to vector<2x128xbf16>
    %c0_5 = arith.constant 0 : index
    %c0_6 = arith.constant 0 : index
    %7 = vector.load %arg4[%c0_5, %c0_6] : memref<2x128xbf16, #tpu.memory_space<vmem>>, vector<2x128xbf16>
    tpu.vector_store %arg4[%c0_5, %c0_6], %6 {strides = array<i32>} : memref<2x128xbf16, #tpu.memory_space<vmem>>, vector<2x128xbf16>,
    return
  }
  func.func @transform_0(%arg0: i32) -> (i32, i32) {
    %c0_i32 = arith.constant 0 : i32
    %c0_i32_0 = arith.constant 0 : i32
    %c0_i32_1 = arith.constant 0 : i32
    return %c0_i32, %c0_i32_0 : i32, i32
  }
  func.func @transform_1(%arg0: i32) -> (i32, i32) {
    %c0_i32 = arith.constant 0 : i32
    %c0_i32_0 = arith.constant 0 : i32
    %c0_i32_1 = arith.constant 0 : i32
    return %c0_i32, %c0_i32_0 : i32, i32
  }
  func.func @transform_2(%arg0: i32) -> (i32, i32) {
    %c0_i32 = arith.constant 0 : i32
    %c0_i32_0 = arith.constant 0 : i32
    return %c0_i32, %arg0 : i32, i32
  }
  func.func @transform_3(%arg0: i32) -> (i32, i32) {
    %c0_i32 = arith.constant 0 : i32
    %c0_i32_0 = arith.constant 0 : i32
    return %c0_i32, %arg0 : i32, i32
  }
}

module attributes {stable_mosaic.version = 11 : i64} {
  func.func @_gate_kernel(%arg0: i32, %arg1: memref<1x54xbf16, #tpu.memory_space<vmem>>, %arg2: memref<1x1xf32, #tpu.memory_space<vmem>>, %arg3: memref<54x256xbf16, #tpu.memory_space<vmem>>, %arg4: memref<6x256xbf16, #tpu.memory_space<vmem>>, %arg5: memref<1x256xf32, #tpu.memory_space<vmem>>, %arg6: memref<6x256xbf16, #tpu.memory_space<vmem>>) attributes {dimension_semantics = [#tpu.dimension_semantics<parallel>], iteration_bounds = array<i64: 2>, scalar_prefetch = 0 : i64, scratch_operands = 0 : i64, tpu.core_type = #tpu.core_type<tc>, window_params = [{pipeline_mode = #tpu.pipeline_mode<synchronous>, transform_indices = @transform_0, window_bounds = array<i64: 1, 54>}, {pipeline_mode = #tpu.pipeline_mode<synchronous>, transform_indices = @transform_1, window_bounds = array<i64: 1, 1>}, {transform_indices = @transform_2, window_bounds = array<i64: 54, 256>}, {transform_indices = @transform_3, window_bounds = array<i64: 6, 256>}, {transform_indices = @transform_4, window_bounds = array<i64: 1, 256>}, {transform_indices = @transform_5, window_bounds = array<i64: 6, 256>}]} {
    %c0 = arith.constant 0 : index
    %c0_0 = arith.constant 0 : index
    %0 = vector.load %arg1[%c0, %c0_0] : memref<1x54xbf16, #tpu.memory_space<vmem>>, vector<1x54xbf16>
    %c0_1 = arith.constant 0 : index
    %c0_2 = arith.constant 0 : index
    %1 = vector.load %arg3[%c0_1, %c0_2] : memref<54x256xbf16, #tpu.memory_space<vmem>>, vector<54x256xbf16>
    %cst = arith.constant dense<0.000000e+00> : vector<1x256xf32>
    %2 = tpu.matmul %0, %1, %cst {dimension_numbers = #tpu.dot_dimension_numbers<[1], [0], [0], [1], [0, 0, 1, 1], [], []>} : vector<1x54xbf16>, vector<54x256xbf16>, vector<1x256xf32> -> vector<1x256xf32>
    %c0_3 = arith.constant 0 : index
    %c0_4 = arith.constant 0 : index
    %3 = vector.load %arg2[%c0_3, %c0_4] : memref<1x1xf32, #tpu.memory_space<vmem>>, vector<1x1xf32>
    %4 = vector.broadcast %3 : vector<1x1xf32> to vector<1x256xf32>
    %5 = arith.addf %2, %4 : vector<1x256xf32>
    %c0_5 = arith.constant 0 : index
    %c0_6 = arith.constant 0 : index
    %6 = vector.load %arg5[%c0_5, %c0_6] : memref<1x256xf32, #tpu.memory_space<vmem>>, vector<1x256xf32>
    tpu.vector_store %arg5[%c0_5, %c0_6], %5 {strides = array<i32>} : memref<1x256xf32, #tpu.memory_space<vmem>>, vector<1x256xf32>,
    %c0_7 = arith.constant 0 : index
    %c0_8 = arith.constant 0 : index
    %7 = vector.load %arg4[%c0_7, %c0_8] : memref<6x256xbf16, #tpu.memory_space<vmem>>, vector<6x256xbf16>
    %8 = arith.extf %7 : vector<6x256xbf16> to vector<6x256xf32>
    %9 = vector.broadcast %5 : vector<1x256xf32> to vector<6x256xf32>
    %10 = arith.mulf %9, %8 : vector<6x256xf32>
    %11 = arith.truncf %10 : vector<6x256xf32> to vector<6x256xbf16>
    %c0_9 = arith.constant 0 : index
    %c0_10 = arith.constant 0 : index
    %12 = vector.load %arg6[%c0_9, %c0_10] : memref<6x256xbf16, #tpu.memory_space<vmem>>, vector<6x256xbf16>
    tpu.vector_store %arg6[%c0_9, %c0_10], %11 {strides = array<i32>} : memref<6x256xbf16, #tpu.memory_space<vmem>>, vector<6x256xbf16>,
    return
  }
  func.func @transform_0(%arg0: i32) -> (i32, i32) {
    %c0_i32 = arith.constant 0 : i32
    %c0_i32_0 = arith.constant 0 : i32
    %c0_i32_1 = arith.constant 0 : i32
    return %c0_i32, %c0_i32_0 : i32, i32
  }
  func.func @transform_1(%arg0: i32) -> (i32, i32) {
    %c0_i32 = arith.constant 0 : i32
    %c0_i32_0 = arith.constant 0 : i32
    %c0_i32_1 = arith.constant 0 : i32
    return %c0_i32, %c0_i32_0 : i32, i32
  }
  func.func @transform_2(%arg0: i32) -> (i32, i32) {
    %c0_i32 = arith.constant 0 : i32
    %c0_i32_0 = arith.constant 0 : i32
    return %c0_i32, %arg0 : i32, i32
  }
  func.func @transform_3(%arg0: i32) -> (i32, i32) {
    %c0_i32 = arith.constant 0 : i32
    %c0_i32_0 = arith.constant 0 : i32
    return %c0_i32, %arg0 : i32, i32
  }
  func.func @transform_4(%arg0: i32) -> (i32, i32) {
    %c0_i32 = arith.constant 0 : i32
    %c0_i32_0 = arith.constant 0 : i32
    return %c0_i32, %arg0 : i32, i32
  }
  func.func @transform_5(%arg0: i32) -> (i32, i32) {
    %c0_i32 = arith.constant 0 : i32
    %c0_i32_0 = arith.constant 0 : i32
    return %c0_i32, %arg0 : i32, i32
  }
}

module attributes {stable_mosaic.version = 11 : i64} {
  func.func @_conv_stats_kernel(%arg0: i32, %arg1: memref<4x54xbf16, #tpu.memory_space<vmem>>, %arg2: memref<54x256xbf16, #tpu.memory_space<vmem>>, %arg3: memref<4x256xbf16, #tpu.memory_space<vmem>>, %arg4: memref<1x4x1xf32, #tpu.memory_space<vmem>>, %arg5: memref<1x4x1xf32, #tpu.memory_space<vmem>>) attributes {dimension_semantics = [#tpu.dimension_semantics<parallel>], iteration_bounds = array<i64: 2>, scalar_prefetch = 0 : i64, scratch_operands = 0 : i64, tpu.core_type = #tpu.core_type<tc>, window_params = [{pipeline_mode = #tpu.pipeline_mode<synchronous>, transform_indices = @transform_0, window_bounds = array<i64: 4, 54>}, {transform_indices = @transform_1, window_bounds = array<i64: 54, 256>}, {transform_indices = @transform_2, window_bounds = array<i64: 4, 256>}, {transform_indices = @transform_3, window_bounds = array<i64: 1, 4, 1>}, {transform_indices = @transform_4, window_bounds = array<i64: 1, 4, 1>}]} {
    %c0 = arith.constant 0 : index
    %c0_0 = arith.constant 0 : index
    %0 = vector.load %arg1[%c0, %c0_0] : memref<4x54xbf16, #tpu.memory_space<vmem>>, vector<4x54xbf16>
    %c0_1 = arith.constant 0 : index
    %c0_2 = arith.constant 0 : index
    %1 = vector.load %arg2[%c0_1, %c0_2] : memref<54x256xbf16, #tpu.memory_space<vmem>>, vector<54x256xbf16>
    %cst = arith.constant dense<0.000000e+00> : vector<4x256xf32>
    %2 = tpu.matmul %0, %1, %cst {dimension_numbers = #tpu.dot_dimension_numbers<[1], [0], [0], [1], [0, 0, 1, 1], [], []>} : vector<4x54xbf16>, vector<54x256xbf16>, vector<4x256xf32> -> vector<4x256xf32>
    %3 = arith.truncf %2 : vector<4x256xf32> to vector<4x256xbf16>
    %c0_3 = arith.constant 0 : index
    %c0_4 = arith.constant 0 : index
    %4 = vector.load %arg3[%c0_3, %c0_4] : memref<4x256xbf16, #tpu.memory_space<vmem>>, vector<4x256xbf16>
    tpu.vector_store %arg3[%c0_3, %c0_4], %3 {strides = array<i32>} : memref<4x256xbf16, #tpu.memory_space<vmem>>, vector<4x256xbf16>,
    %cst_5 = arith.constant dense<0.000000e+00> : vector<4xf32>
    %5 = vector.multi_reduction <add>, %2, %cst_5 [1] : vector<4x256xf32> to vector<4xf32>
    %6 = vector.shape_cast %5 : vector<4xf32> to vector<4x1xf32>
    %7 = vector.shape_cast %6 : vector<4x1xf32> to vector<1x4x1xf32>
    %c0_6 = arith.constant 0 : index
    %c0_7 = arith.constant 0 : index
    %c0_8 = arith.constant 0 : index
    %8 = vector.load %arg4[%c0_6, %c0_7, %c0_8] : memref<1x4x1xf32, #tpu.memory_space<vmem>>, vector<1x4x1xf32>
    tpu.vector_store %arg4[%c0_6, %c0_7, %c0_8], %7 {strides = array<i32>} : memref<1x4x1xf32, #tpu.memory_space<vmem>>, vector<1x4x1xf32>,
    %9 = arith.mulf %2, %2 : vector<4x256xf32>
    %cst_9 = arith.constant dense<0.000000e+00> : vector<4xf32>
    %10 = vector.multi_reduction <add>, %9, %cst_9 [1] : vector<4x256xf32> to vector<4xf32>
    %11 = vector.shape_cast %10 : vector<4xf32> to vector<4x1xf32>
    %12 = vector.shape_cast %11 : vector<4x1xf32> to vector<1x4x1xf32>
    %c0_10 = arith.constant 0 : index
    %c0_11 = arith.constant 0 : index
    %c0_12 = arith.constant 0 : index
    %13 = vector.load %arg5[%c0_10, %c0_11, %c0_12] : memref<1x4x1xf32, #tpu.memory_space<vmem>>, vector<1x4x1xf32>
    tpu.vector_store %arg5[%c0_10, %c0_11, %c0_12], %12 {strides = array<i32>} : memref<1x4x1xf32, #tpu.memory_space<vmem>>, vector<1x4x1xf32>,
    return
  }
  func.func @transform_0(%arg0: i32) -> (i32, i32) {
    %c0_i32 = arith.constant 0 : i32
    %c0_i32_0 = arith.constant 0 : i32
    %c0_i32_1 = arith.constant 0 : i32
    return %c0_i32, %c0_i32_0 : i32, i32
  }
  func.func @transform_1(%arg0: i32) -> (i32, i32) {
    %c0_i32 = arith.constant 0 : i32
    %c0_i32_0 = arith.constant 0 : i32
    return %c0_i32, %arg0 : i32, i32
  }
  func.func @transform_2(%arg0: i32) -> (i32, i32) {
    %c0_i32 = arith.constant 0 : i32
    %c0_i32_0 = arith.constant 0 : i32
    return %c0_i32, %arg0 : i32, i32
  }
  func.func @transform_3(%arg0: i32) -> (i32, i32, i32) {
    %c0_i32 = arith.constant 0 : i32
    %c0_i32_0 = arith.constant 0 : i32
    %c0_i32_1 = arith.constant 0 : i32
    return %arg0, %c0_i32, %c0_i32_0 : i32, i32, i32
  }
  func.func @transform_4(%arg0: i32) -> (i32, i32, i32) {
    %c0_i32 = arith.constant 0 : i32
    %c0_i32_0 = arith.constant 0 : i32
    %c0_i32_1 = arith.constant 0 : i32
    return %arg0, %c0_i32, %c0_i32_0 : i32, i32, i32
  }
}

module attributes {stable_mosaic.version = 11 : i64} {
  func.func @_bn_relu_res_kernel(%arg0: i32, %arg1: memref<4x256xbf16, #tpu.memory_space<vmem>>, %arg2: memref<4x1xf32, #tpu.memory_space<vmem>>, %arg3: memref<4x1xf32, #tpu.memory_space<vmem>>, %arg4: memref<4x256xf32, #tpu.memory_space<vmem>>, %arg5: memref<4x256xf32, #tpu.memory_space<vmem>>) attributes {dimension_semantics = [#tpu.dimension_semantics<parallel>], iteration_bounds = array<i64: 2>, scalar_prefetch = 0 : i64, scratch_operands = 0 : i64, tpu.core_type = #tpu.core_type<tc>, window_params = [{transform_indices = @transform_0, window_bounds = array<i64: 4, 256>}, {pipeline_mode = #tpu.pipeline_mode<synchronous>, transform_indices = @transform_1, window_bounds = array<i64: 4, 1>}, {pipeline_mode = #tpu.pipeline_mode<synchronous>, transform_indices = @transform_2, window_bounds = array<i64: 4, 1>}, {transform_indices = @transform_3, window_bounds = array<i64: 4, 256>}, {transform_indices = @transform_4, window_bounds = array<i64: 4, 256>}]} {
    %c0 = arith.constant 0 : index
    %c0_0 = arith.constant 0 : index
    %0 = vector.load %arg1[%c0, %c0_0] : memref<4x256xbf16, #tpu.memory_space<vmem>>, vector<4x256xbf16>
    %1 = arith.extf %0 : vector<4x256xbf16> to vector<4x256xf32>
    %c0_1 = arith.constant 0 : index
    %c0_2 = arith.constant 0 : index
    %2 = vector.load %arg2[%c0_1, %c0_2] : memref<4x1xf32, #tpu.memory_space<vmem>>, vector<4x1xf32>
    %3 = vector.broadcast %2 : vector<4x1xf32> to vector<4x256xf32>
    %4 = arith.mulf %1, %3 : vector<4x256xf32>
    %c0_3 = arith.constant 0 : index
    %c0_4 = arith.constant 0 : index
    %5 = vector.load %arg3[%c0_3, %c0_4] : memref<4x1xf32, #tpu.memory_space<vmem>>, vector<4x1xf32>
    %6 = vector.broadcast %5 : vector<4x1xf32> to vector<4x256xf32>
    %7 = arith.addf %4, %6 : vector<4x256xf32>
    %cst = arith.constant 0.000000e+00 : f32
    %8 = vector.broadcast %cst : f32 to vector<4x256xf32>
    %9 = arith.maximumf %7, %8 : vector<4x256xf32>
    %c0_5 = arith.constant 0 : index
    %c0_6 = arith.constant 0 : index
    %10 = vector.load %arg4[%c0_5, %c0_6] : memref<4x256xf32, #tpu.memory_space<vmem>>, vector<4x256xf32>
    %11 = arith.addf %9, %10 : vector<4x256xf32>
    %c0_7 = arith.constant 0 : index
    %c0_8 = arith.constant 0 : index
    %12 = vector.load %arg5[%c0_7, %c0_8] : memref<4x256xf32, #tpu.memory_space<vmem>>, vector<4x256xf32>
    tpu.vector_store %arg5[%c0_7, %c0_8], %11 {strides = array<i32>} : memref<4x256xf32, #tpu.memory_space<vmem>>, vector<4x256xf32>,
    return
  }
  func.func @transform_0(%arg0: i32) -> (i32, i32) {
    %c0_i32 = arith.constant 0 : i32
    %c0_i32_0 = arith.constant 0 : i32
    return %c0_i32, %arg0 : i32, i32
  }
  func.func @transform_1(%arg0: i32) -> (i32, i32) {
    %c0_i32 = arith.constant 0 : i32
    %c0_i32_0 = arith.constant 0 : i32
    %c0_i32_1 = arith.constant 0 : i32
    return %c0_i32, %c0_i32_0 : i32, i32
  }
  func.func @transform_2(%arg0: i32) -> (i32, i32) {
    %c0_i32 = arith.constant 0 : i32
    %c0_i32_0 = arith.constant 0 : i32
    %c0_i32_1 = arith.constant 0 : i32
    return %c0_i32, %c0_i32_0 : i32, i32
  }
  func.func @transform_3(%arg0: i32) -> (i32, i32) {
    %c0_i32 = arith.constant 0 : i32
    %c0_i32_0 = arith.constant 0 : i32
    return %c0_i32, %arg0 : i32, i32
  }
  func.func @transform_4(%arg0: i32) -> (i32, i32) {
    %c0_i32 = arith.constant 0 : i32
    %c0_i32_0 = arith.constant 0 : i32
    return %c0_i32, %arg0 : i32, i32
  }
}

</mosaic_0001>

<llo_original>
// kernel: lram_block_forward.11
$region0: #{lram_block_forward.11}
  #allocation0 [shape = 'u32[]', space=smem, size = 0x4, offset = 0x4, fixed_abs, tag = 'smem constant byte address 0x4 - core index']
  #allocation1 [shape = 'u32[144,128]{1,0:T(1,128)}', space=vmem, size = 0x12000, scoped, tag = 'internal scratch']
  %s0 = inlined_call_operand.vmem [shape: bf16[6,512], index: 0, kind: input, shape index: {}, may-alias: {0,3}]
  %s1 = inlined_call_operand.vmem [shape: f32[6,1], index: 1, kind: input, shape index: {}]
  %s2 = inlined_call_operand.vmem [shape: f32[6,1], index: 2, kind: input, shape index: {}]
  %s3 = inlined_call_operand.vmem [shape: bf16[6,512], index: 3, kind: output, shape index: {}, may-alias: {0,3}]
  %s4 = sld [smem:[#allocation0]]
  $region45: #{lram_block_forward.11} parent=0
    _
  %s6 = ssub.s32 1, %s4
  %s7 = scalar_select 0, %s6, %s4
  loop: start=0, step=1, limit=4
  $region2: #{lram_block_forward.11} parent=0 // loop_pre_header
    _
  $region3: #{lram_block_forward.11} parent=0 // loop_header
    %s9 = sphi 0, %s13
    %p10 = scmp.ge.s32.totalorder %s9, 4
    %s19 = sphi 0, %s21
    %s22 = sphi 0, %s19
    %s23 = sphi 0, %s22
    %s39 = sphi 0, %s23
    %s43 = sphi 0, %s43
    %s45 = sphi 0, %s43
    %s46 = sphi 0, %s45
    %s60 = sphi 0, %s46
    %s64 = sphi 0, %s64
    %s66 = sphi 0, %s64
    %s67 = sphi 0, %s66
    %s81 = sphi 0, %s67
    %s87 = sphi 0, %s89
    %s90 = sphi 0, %s87
    %s91 = sphi 0, %s90
    %s107 = sphi 0, %s91
  $region4: #{lram_block_forward.11} parent=0 // loop_header_branch
    %12 = sbr.rel (%p10) target = $region8
  $region5: #{lram_block_forward.11} parent=0 // loop_body
    %s14 = ssub.s32 %s9, 1
    %s15 = ssub.s32 %s9, 2
    %s16 = sadd.s32 %s9, 1
    %s17 = ssub.s32 %s9, %s16
    %p18 = scmp.eq.s32.totalorder %s17, 0
    %s20 = sadd.s32 %s19, 1
    %s21 = scalar_select %p18, %s19, %s20
    %p24 = pneg %p18
    %p25 = scmp.eq.s32.totalorder %s9, 1
    %p26 = por %p24, %p25
    %p27 = scmp.ne.s32.totalorder %s19, %s22
    %p28 = scmp.eq.s32.totalorder %s9, 0
    %p29 = por %p27, %p28
    %p30 = scmp.ne.s32.totalorder %s19, %s22
    %p31 = scmp.eq.s32.totalorder %s14, 1
    %p32 = por %p30, %p31
    %p33 = scmp.ne.s32.totalorder %s22, %s23
    %p34 = scmp.eq.s32.totalorder %s14, 0
    %p35 = por %p33, %p34
    %p36 = scmp.ne.s32.totalorder %s22, %s23
    %p37 = scmp.eq.s32.totalorder %s15, 1
    %p38 = por %p36, %p37
    %p40 = scmp.ne.s32.totalorder %s23, %s39
    %p41 = scmp.eq.s32.totalorder %s15, 0
    %p42 = por %p40, %p41
    %s44 = sadd.s32 %s43, 1
    %p47 = scmp.eq.s32.totalorder %s9, 1
    %p48 = scmp.ne.s32.totalorder %s43, %s45
    %p49 = scmp.eq.s32.totalorder %s9, 0
    %p50 = por %p48, %p49
    %p51 = scmp.ne.s32.totalorder %s43, %s45
    %p52 = scmp.eq.s32.totalorder %s14, 1
    %p53 = por %p51, %p52
    %p54 = scmp.ne.s32.totalorder %s45, %s46
    %p55 = scmp.eq.s32.totalorder %s14, 0
    %p56 = por %p54, %p55
    %p57 = scmp.ne.s32.totalorder %s45, %s46
    %p58 = scmp.eq.s32.totalorder %s15, 1
    %p59 = por %p57, %p58
    %p61 = scmp.ne.s32.totalorder %s46, %s60
    %p62 = scmp.eq.s32.totalorder %s15, 0
    %p63 = por %p61, %p62
    %s65 = sadd.s32 %s64, 1
    %p68 = scmp.eq.s32.totalorder %s9, 1
    %p69 = scmp.ne.s32.totalorder %s64, %s66
    %p70 = scmp.eq.s32.totalorder %s9, 0
    %p71 = por %p69, %p70
    %p72 = scmp.ne.s32.totalorder %s64, %s66
    %p73 = scmp.eq.s32.totalorder %s14, 1
    %p74 = por %p72, %p73
    %p75 = scmp.ne.s32.totalorder %s66, %s67
    %p76 = scmp.eq.s32.totalorder %s14, 0
    %p77 = por %p75, %p76
    %p78 = scmp.ne.s32.totalorder %s66, %s67
    %p79 = scmp.eq.s32.totalorder %s15, 1
    %p80 = por %p78, %p79
    %p82 = scmp.ne.s32.totalorder %s67, %s81
    %p83 = scmp.eq.s32.totalorder %s15, 0
    %p84 = por %p82, %p83
    %s85 = ssub.s32 %s9, %s16
    %p86 = scmp.eq.s32.totalorder %s85, 0
    %s88 = sadd.s32 %s87, 1
    %s89 = scalar_select %p86, %s87, %s88
    %p92 = pneg %p86
    %p93 = scmp.eq.s32.totalorder %s9, 1
    %p94 = por %p92, %p93
    %p95 = scmp.ne.s32.totalorder %s87, %s90
    %p96 = scmp.eq.s32.totalorder %s9, 0
    %p97 = por %p95, %p96
    %p98 = scmp.ne.s32.totalorder %s87, %s90
    %p99 = scmp.eq.s32.totalorder %s14, 1
    %p100 = por %p98, %p99
    %p101 = scmp.ne.s32.totalorder %s90, %s91
    %p102 = scmp.eq.s32.totalorder %s14, 0
    %p103 = por %p101, %p102
    %p104 = scmp.ne.s32.totalorder %s90, %s91
    %p105 = scmp.eq.s32.totalorder %s15, 1
    %p106 = por %p104, %p105
    %p108 = scmp.ne.s32.totalorder %s91, %s107
    %p109 = scmp.eq.s32.totalorder %s15, 0
    %p110 = por %p108, %p109
    %p111 = scmp.le.s32.totalorder 1, %s9
    %p112 = scmp.lt.s32.totalorder %s9, 3
    %p113 = pnand %p111, %p112
    %p114 = pneg %p113
    // Predicated region
    $region9: #{lram_block_forward.11} parent=5 // pred_check
      _
    $region10: #{lram_block_forward.11} parent=5 // pred_check_branch
      %116 = sbr.rel (%p113) target = $region12
    $region11: #{lram_block_forward.11} parent=5 // pred_region
      %s117 = ssub.s32 %s9, 1
      // Predicated region
      $region13: #{lram_block_forward.11} parent=11 // pred_check
        %p118 = pneg %p56
      $region14: #{lram_block_forward.11} parent=11 // pred_check_branch
        %120 = sbr.rel (%p118) target = $region16
      $region15: #{lram_block_forward.11} parent=11 // pred_region
        _
      $region16: #{lram_block_forward.11} parent=11 // pred_fallthru
        _
      // Predicated region
      $region17: #{lram_block_forward.11} parent=11 // pred_check
        %p121 = pneg %p77
      $region18: #{lram_block_forward.11} parent=11 // pred_check_branch
        %123 = sbr.rel (%p121) target = $region20
      $region19: #{lram_block_forward.11} parent=11 // pred_region
        _
      $region20: #{lram_block_forward.11} parent=11 // pred_fallthru
        _
    $region12: #{lram_block_forward.11} parent=5 // pred_fallthru
      _
    %p124 = scmp.lt.s32.totalorder %s9, 2
    // Predicated region
    $region21: #{lram_block_forward.11} parent=5 // pred_check
      %p125 = pneg %p124
    $region22: #{lram_block_forward.11} parent=5 // pred_check_branch
      %127 = sbr.rel (%p125) target = $region24
    $region23: #{lram_block_forward.11} parent=5 // pred_region
      // Predicated region
      $region25: #{lram_block_forward.11} parent=23 // pred_check
        %p128 = pneg %p29
      $region26: #{lram_block_forward.11} parent=23 // pred_check_branch
        %130 = sbr.rel (%p128) target = $region28
      $region27: #{lram_block_forward.11} parent=23 // pred_region
        %s131 = smul.u32 2, %s9
        %p132 = scmp.lt.s32.totalorder %s131, 3
        %s133 = scalar_select %p132, %s131, 3
        %s134 = smul.addr %s133, 4
        %s135 = scalar_lea.vmem %s0, %s134
        %s136 = smul.u32 2, %s9
      $region28: #{lram_block_forward.11} parent=23 // pred_fallthru
        _
    $region24: #{lram_block_forward.11} parent=5 // pred_fallthru
      _
    %p137 = scmp.le.s32.totalorder 1, %s9
    %p138 = scmp.lt.s32.totalorder %s9, 3
    %p139 = pnand %p137, %p138
    %p140 = pneg %p139
    // Predicated region
    $region29: #{lram_block_forward.11} parent=5 // pred_check
      _
    $region30: #{lram_block_forward.11} parent=5 // pred_check_branch
      %142 = sbr.rel (%p139) target = $region32
    $region31: #{lram_block_forward.11} parent=5 // pred_region
      %s143 = ssub.s32 %s9, 1
      %s144 = smul.u32 2, %s14
      %p145 = scmp.lt.s32.totalorder %s144, 3
      %s146 = scalar_select %p145, %s144, 3
      %s147 = smul.addr %s146, 4
      %s148 = scalar_lea.vmem %s0, %s147
      %p149 = pneg %p35
      %p150 = pneg %p32
      %p151 = pneg %p56
      %p152 = pneg %p53
      %p153 = pneg %p77
      %p154 = pneg %p74
      %p155 = pneg %p103
      %p156 = pneg %p100
      %s157 = smul.u32 2, %s14
      %p158 = scmp.lt.s32.totalorder %s157, 3
      %s159 = scalar_select %p158, %s157, 3
      %s160 = smul.addr %s159, 4
      %s161 = scalar_lea.vmem %s3, %s160
      %s162 = smul.u32 2, %s14
      %p163 = scmp.lt.s32.totalorder %s162, 3
      %s164 = scalar_select %p163, %s162, 3
      %s165 = smul.addr %s164, 4
      %s166 = scalar_lea.vmem %s0, %s165
      %s167 = smul.u32 2, %s14
      %s168 = smul.u32 2, %s14
      %p169 = scmp.lt.s32.totalorder %s168, 3
      %s170 = scalar_select %p169, %s168, 3
      %s171 = smul.addr %s170, 4
      %s172 = scalar_lea.vmem %s3, %s171
      %s173 = smul.u32 2, %s14
      %v174 = vld [vmem:[%s166] sm:$0x77]
      %v175 = vunpack.c.l.bf16 %v174
      %v176 = vunpack.c.h.bf16 %v174
      %v177 = vld [vmem:[%s1] sm:$0x3f]
      %179 = vset.pattern.permute.xlu0 0
      %180 = vperm.xlu0 %179, %v177
      %v181 = vpop.permute.xlu0 %180
      %v183 = vmul.f32 %v175, %v181
      %v184 = vmul.f32 %v176, %v181
      %v185 = vld [vmem:[%s2] sm:$0x3f]
      %187 = vset.pattern.permute.xlu0 0
      %188 = vperm.xlu0 %187, %v185
      %v189 = vpop.permute.xlu0 %188
      %v191 = vadd.f32 %v183, %v189
      %v192 = vadd.f32 %v184, %v189
      %v193 = vmax.f32 %v191, 0.0
      %v194 = vmax.f32 %v192, 0.0
      %v195 = vpack.c.bf16 %v193, %v193
      %v196 = vpack.c.bf16 %v194, %v194
      %v199 = vunpack.c.l.b16 %v195
      %v200 = vunpack.c.l.b16 %v196
      %v201 = vpack.c.b16 %v200, %v199
      %203 = vst [vmem:[%s172] sm:$0x77] %v201
      %s204 = smul.u32 2, %s14
      %p205 = scmp.lt.s32.totalorder %s204, 3
      %s206 = scalar_select %p205, %s204, 3
      %s207 = smul.addr %s206, 4
      %s208 = scalar_lea.vmem %s3, %s207
      // Predicated region
      $region33: #{lram_block_forward.11} parent=31 // pred_check
        %p209 = pneg %p100
      $region34: #{lram_block_forward.11} parent=31 // pred_check_branch
        %211 = sbr.rel (%p209) target = $region36
      $region35: #{lram_block_forward.11} parent=31 // pred_region
        %s212 = smul.u32 2, %s14
      $region36: #{lram_block_forward.11} parent=31 // pred_fallthru
        _
    $region32: #{lram_block_forward.11} parent=5 // pred_fallthru
      _
    %p213 = scmp.le.s32.totalorder 2, %s9
    // Predicated region
    $region37: #{lram_block_forward.11} parent=5 // pred_check
      %p214 = pneg %p213
    $region38: #{lram_block_forward.11} parent=5 // pred_check_branch
      %216 = sbr.rel (%p214) target = $region40
    $region39: #{lram_block_forward.11} parent=5 // pred_region
      %s217 = ssub.s32 %s9, 2
      // Predicated region
      $region41: #{lram_block_forward.11} parent=39 // pred_check
        %p218 = pneg %p106
      $region42: #{lram_block_forward.11} parent=39 // pred_check_branch
        %220 = sbr.rel (%p218) target = $region44
      $region43: #{lram_block_forward.11} parent=39 // pred_region
        %s221 = smul.u32 2, %s15
        %p222 = scmp.lt.s32.totalorder %s221, 3
        %s223 = scalar_select %p222, %s221, 3
        %s224 = smul.addr %s223, 4
        %s225 = scalar_lea.vmem %s3, %s224
      $region44: #{lram_block_forward.11} parent=39 // pred_fallthru
        _
    $region40: #{lram_block_forward.11} parent=5 // pred_fallthru
      _
  $region6: #{lram_block_forward.11} parent=0 // loop_footer
    %s13 = sadd.s32 1, %s9
  $region7: #{lram_block_forward.11} parent=0 // loop_footer_branch
    %8 = sbr.rel target = $region3
  $region8: #{lram_block_forward.11} parent=0 // loop_exit
    _

// kernel: lram_block_forward.10
$region0: #{lram_block_forward.10}
  #allocation0 [shape = 'u32[]', space=smem, size = 0x4, offset = 0x4, fixed_abs, tag = 'smem constant byte address 0x4 - core index']
  #allocation1 [shape = 'u32[144,128]{1,0:T(1,128)}', space=vmem, size = 0x12000, scoped, tag = 'internal scratch']
  %s0 = inlined_call_operand.vmem [shape: bf16[6,36], index: 0, kind: input, shape index: {}]
  %s1 = inlined_call_operand.vmem [shape: bf16[36,512], index: 1, kind: input, shape index: {}]
  %s2 = inlined_call_operand.vmem [shape: bf16[6,512], index: 2, kind: output, shape index: {0}]
  %s3 = inlined_call_operand.vmem [shape: f32[2,6,1], index: 3, kind: output, shape index: {1}]
  %s4 = inlined_call_operand.vmem [shape: f32[2,6,1], index: 4, kind: output, shape index: {2}]
  %5 = xla_tuple %s2, %s3, %s4
  %s6 = sld [smem:[#allocation0]]
  $region95: #{lram_block_forward.10} parent=0
    _
  %s8 = ssub.s32 1, %s6
  %s9 = scalar_select 0, %s8, %s6
  $region1: #{lram_block_forward.10} parent=0
    #allocation2 [shape = 'u8[40960]{0}', space=vmem, size = 0xa000, scoped, tag = 'input window, operand 1']
    loop: start=0, step=1, limit=4
    $region2: #{lram_block_forward.10} parent=1 // loop_pre_header
      _
    $region3: #{lram_block_forward.10} parent=1 // loop_header
      %s11 = sphi 0, %s15
      %p12 = scmp.ge.s32.totalorder %s11, 4
      %s19 = sphi 0, %s19
      %s21 = sphi 0, %s19
      %s22 = sphi 0, %s21
      %s36 = sphi 0, %s22
      %s42 = sphi 0, %s44
      %s45 = sphi 0, %s42
      %s46 = sphi 0, %s45
      %s62 = sphi 0, %s46
      %s68 = sphi 0, %s70
      %s71 = sphi 0, %s68
      %s72 = sphi 0, %s71
      %s88 = sphi 0, %s72
      %s94 = sphi 0, %s96
      %s97 = sphi 0, %s94
      %s98 = sphi 0, %s97
      %s114 = sphi 0, %s98
      %s120 = sphi 0, %s122
      %s123 = sphi 0, %s120
      %s124 = sphi 0, %s123
      %s140 = sphi 0, %s124
    $region4: #{lram_block_forward.10} parent=1 // loop_header_branch
      %14 = sbr.rel (%p12) target = $region8
    $region5: #{lram_block_forward.10} parent=1 // loop_body
      %s16 = ssub.s32 %s11, 1
      %s17 = ssub.s32 %s11, 2
      %s18 = sadd.s32 %s11, 1
      %s20 = sadd.s32 %s19, 1
      %p23 = scmp.eq.s32.totalorder %s11, 1
      %p24 = scmp.ne.s32.totalorder %s19, %s21
      %p25 = scmp.eq.s32.totalorder %s11, 0
      %p26 = por %p24, %p25
      %p27 = scmp.ne.s32.totalorder %s19, %s21
      %p28 = scmp.eq.s32.totalorder %s16, 1
      %p29 = por %p27, %p28
      %p30 = scmp.ne.s32.totalorder %s21, %s22
      %p31 = scmp.eq.s32.totalorder %s16, 0
      %p32 = por %p30, %p31
      %p33 = scmp.ne.s32.totalorder %s21, %s22
      %p34 = scmp.eq.s32.totalorder %s17, 1
      %p35 = por %p33, %p34
      %p37 = scmp.ne.s32.totalorder %s22, %s36
      %p38 = scmp.eq.s32.totalorder %s17, 0
      %p39 = por %p37, %p38
      %s40 = ssub.s32 %s11, %s18
      %p41 = scmp.eq.s32.totalorder %s40, 0
      %s43 = sadd.s32 %s42, 1
      %s44 = scalar_select %p41, %s42, %s43
      %p47 = pneg %p41
      %p48 = scmp.eq.s32.totalorder %s11, 1
      %p49 = por %p47, %p48
      %p50 = scmp.ne.s32.totalorder %s42, %s45
      %p51 = scmp.eq.s32.totalorder %s11, 0
      %p52 = por %p50, %p51
      %p53 = scmp.ne.s32.totalorder %s42, %s45
      %p54 = scmp.eq.s32.totalorder %s16, 1
      %p55 = por %p53, %p54
      %p56 = scmp.ne.s32.totalorder %s45, %s46
      %p57 = scmp.eq.s32.totalorder %s16, 0
      %p58 = por %p56, %p57
      %p59 = scmp.ne.s32.totalorder %s45, %s46
      %p60 = scmp.eq.s32.totalorder %s17, 1
      %p61 = por %p59, %p60
      %p63 = scmp.ne.s32.totalorder %s46, %s62
      %p64 = scmp.eq.s32.totalorder %s17, 0
      %p65 = por %p63, %p64
      %s66 = ssub.s32 %s11, %s18
      %p67 = scmp.eq.s32.totalorder %s66, 0
      %s69 = sadd.s32 %s68, 1
      %s70 = scalar_select %p67, %s68, %s69
      %p73 = pneg %p67
      %p74 = scmp.eq.s32.totalorder %s11, 1
      %p75 = por %p73, %p74
      %p76 = scmp.ne.s32.totalorder %s68, %s71
      %p77 = scmp.eq.s32.totalorder %s11, 0
      %p78 = por %p76, %p77
      %p79 = scmp.ne.s32.totalorder %s68, %s71
      %p80 = scmp.eq.s32.totalorder %s16, 1
      %p81 = por %p79, %p80
      %p82 = scmp.ne.s32.totalorder %s71, %s72
      %p83 = scmp.eq.s32.totalorder %s16, 0
      %p84 = por %p82, %p83
      %p85 = scmp.ne.s32.totalorder %s71, %s72
      %p86 = scmp.eq.s32.totalorder %s17, 1
      %p87 = por %p85, %p86
      %p89 = scmp.ne.s32.totalorder %s72, %s88
      %p90 = scmp.eq.s32.totalorder %s17, 0
      %p91 = por %p89, %p90
      %s92 = ssub.s32 %s11, %s18
      %p93 = scmp.eq.s32.totalorder %s92, 0
      %s95 = sadd.s32 %s94, 1
      %s96 = scalar_select %p93, %s94, %s95
      %p99 = pneg %p93
      %p100 = scmp.eq.s32.totalorder %s11, 1
      %p101 = por %p99, %p100
      %p102 = scmp.ne.s32.totalorder %s94, %s97
      %p103 = scmp.eq.s32.totalorder %s11, 0
      %p104 = por %p102, %p103
      %p105 = scmp.ne.s32.totalorder %s94, %s97
      %p106 = scmp.eq.s32.totalorder %s16, 1
      %p107 = por %p105, %p106
      %p108 = scmp.ne.s32.totalorder %s97, %s98
      %p109 = scmp.eq.s32.totalorder %s16, 0
      %p110 = por %p108, %p109
      %p111 = scmp.ne.s32.totalorder %s97, %s98
      %p112 = scmp.eq.s32.totalorder %s17, 1
      %p113 = por %p111, %p112
      %p115 = scmp.ne.s32.totalorder %s98, %s114
      %p116 = scmp.eq.s32.totalorder %s17, 0
      %p117 = por %p115, %p116
      %s118 = ssub.s32 %s11, %s18
      %p119 = scmp.eq.s32.totalorder %s118, 0
      %s121 = sadd.s32 %s120, 1
      %s122 = scalar_select %p119, %s120, %s121
      %p125 = pneg %p119
      %p126 = scmp.eq.s32.totalorder %s11, 1
      %p127 = por %p125, %p126
      %p128 = scmp.ne.s32.totalorder %s120, %s123
      %p129 = scmp.eq.s32.totalorder %s11, 0
      %p130 = por %p128, %p129
      %p131 = scmp.ne.s32.totalorder %s120, %s123
      %p132 = scmp.eq.s32.totalorder %s16, 1
      %p133 = por %p131, %p132
      %p134 = scmp.ne.s32.totalorder %s123, %s124
      %p135 = scmp.eq.s32.totalorder %s16, 0
      %p136 = por %p134, %p135
      %p137 = scmp.ne.s32.totalorder %s123, %s124
      %p138 = scmp.eq.s32.totalorder %s17, 1
      %p139 = por %p137, %p138
      %p141 = scmp.ne.s32.totalorder %s124, %s140
      %p142 = scmp.eq.s32.totalorder %s17, 0
      %p143 = por %p141, %p142
      %p144 = scmp.le.s32.totalorder 1, %s11
      %p145 = scmp.lt.s32.totalorder %s11, 3
      %p146 = pnand %p144, %p145
      %p147 = pneg %p146
      // Predicated region
      $region9: #{lram_block_forward.10} parent=5 // pred_check
        _
      $region10: #{lram_block_forward.10} parent=5 // pred_check_branch
        %149 = sbr.rel (%p146) target = $region12
      $region11: #{lram_block_forward.10} parent=5 // pred_region
        %s150 = ssub.s32 %s11, 1
        // Predicated region
        $region13: #{lram_block_forward.10} parent=11 // pred_check
          %p151 = pneg %p32
        $region14: #{lram_block_forward.10} parent=11 // pred_check_branch
          %153 = sbr.rel (%p151) target = $region16
        $region15: #{lram_block_forward.10} parent=11 // pred_region
          _
        $region16: #{lram_block_forward.10} parent=11 // pred_fallthru
          _
      $region12: #{lram_block_forward.10} parent=5 // pred_fallthru
        _
      %p154 = scmp.lt.s32.totalorder %s11, 2
      // Predicated region
      $region17: #{lram_block_forward.10} parent=5 // pred_check
        %p155 = pneg %p154
      $region18: #{lram_block_forward.10} parent=5 // pred_check_branch
        %157 = sbr.rel (%p155) target = $region20
      $region19: #{lram_block_forward.10} parent=5 // pred_region
        // Predicated region
        $region21: #{lram_block_forward.10} parent=19 // pred_check
          %p158 = pneg %p52
        $region22: #{lram_block_forward.10} parent=19 // pred_check_branch
          %160 = sbr.rel (%p158) target = $region24
        $region23: #{lram_block_forward.10} parent=19 // pred_region
          %s161 = sand.u32 %s42, 1
          %s162 = sand.u32 %s42, 1
          %s163 = smul.addr %s162, 40
          %s164 = scalar_lea.vmem [#allocation2], %s163
          %s165 = smul.u32 2, %s11
          %s166 = smul.addr %s165, 4
          %s167 = scalar_lea.vmem %s1, %s166
          // Predicated region
          $region25: #{lram_block_forward.10} parent=23 // pred_check
            _
          $region26: #{lram_block_forward.10} parent=23 // pred_check_branch
            %169 = sbr.rel (0) target = $region28
          $region27: #{lram_block_forward.10} parent=23 // pred_region
            // Predicated region
            $region29: #{lram_block_forward.10} parent=27 // pred_check
              _
            $region30: #{lram_block_forward.10} parent=27 // pred_check_branch
              %171 = sbr.rel (0) target = $region32
            $region31: #{lram_block_forward.10} parent=27 // pred_region
              // Predicated region
              $region44: #{lram_block_forward.10} parent=31 // pred_check
                _
              $region45: #{lram_block_forward.10} parent=31 // pred_check_branch
                %194 = sbr.rel (0) target = $region47
              $region46: #{lram_block_forward.10} parent=31 // pred_region
                loop: start=0, step=1, limit=1
                $region48: #{lram_block_forward.10} parent=46 // loop_pre_header
                  _
                $region49: #{lram_block_forward.10} parent=46 // loop_header
                  %s196 = sphi 0, %s200
                  %p197 = scmp.ge.s32.totalorder %s196, 1
                  %s201 = sphi %s167, %s167
                  %s202 = sphi %s164, %s164
                $region50: #{lram_block_forward.10} parent=46 // loop_header_branch
                  %199 = sbr.rel (%p197) target = $region54
                $region51: #{lram_block_forward.10} parent=46 // loop_body
                  %v203 = vld [vmem:[%s201] sm:$0xff]
                  %204 = vst [vmem:[%s202] sm:$0xff] %v203
                  %v205 = vld [vmem:[%s201 + $0x10] sm:$0xff]
                  %206 = vst [vmem:[%s202 + $0x8] sm:$0xff] %v205
                  %v207 = vld [vmem:[%s201 + $0x20] sm:$0xff]
                  %208 = vst [vmem:[%s202 + $0x10] sm:$0xff] %v207
                  %v209 = vld [vmem:[%s201 + $0x30] sm:$0xff]
                  %210 = vst [vmem:[%s202 + $0x18] sm:$0xff] %v209
                  %v211 = vld [vmem:[%s201 + $0x40] sm:$0xff]
                  %212 = vst [vmem:[%s202 + $0x20] sm:$0xff] %v211
                $region52: #{lram_block_forward.10} parent=46 // loop_footer
                  %s200 = sadd.s32 1, %s196
                $region53: #{lram_block_forward.10} parent=46 // loop_footer_branch
                  %195 = sbr.rel target = $region49
                $region54: #{lram_block_forward.10} parent=46 // loop_exit
                  _
              $region47: #{lram_block_forward.10} parent=31 // pred_fallthru
                _
              // Predicated region
              $region55: #{lram_block_forward.10} parent=31 // pred_check
                _
              $region56: #{lram_block_forward.10} parent=31 // pred_check_branch
                %214 = sbr.rel target = $region58
              $region57: #{lram_block_forward.10} parent=31 // pred_region
                _
              $region58: #{lram_block_forward.10} parent=31 // pred_fallthru
                _
            $region32: #{lram_block_forward.10} parent=27 // pred_fallthru
              _
            // Predicated region
            $region33: #{lram_block_forward.10} parent=27 // pred_check
              _
            $region34: #{lram_block_forward.10} parent=27 // pred_check_branch
              %173 = sbr.rel target = $region36
            $region35: #{lram_block_forward.10} parent=27 // pred_region
              loop: start=0, step=1, limit=1
              $region37: #{lram_block_forward.10} parent=35 // loop_pre_header
                _
              $region38: #{lram_block_forward.10} parent=35 // loop_header
                %s176 = sphi 0, %s180
                %p177 = scmp.ge.s32.totalorder %s176, 1
                %s181 = sphi %s167, %s167
                %s182 = sphi %s164, %s164
              $region39: #{lram_block_forward.10} parent=35 // loop_header_branch
                %179 = sbr.rel (%p177) target = $region43
              $region40: #{lram_block_forward.10} parent=35 // loop_body
                %v183 = vld [vmem:[%s181] sm:$0xff]
                %184 = vst [vmem:[%s182] sm:$0xff] %v183
                %v185 = vld [vmem:[%s181 + $0x10] sm:$0xff]
                %186 = vst [vmem:[%s182 + $0x8] sm:$0xff] %v185
                %v187 = vld [vmem:[%s181 + $0x20] sm:$0xff]
                %188 = vst [vmem:[%s182 + $0x10] sm:$0xff] %v187
                %v189 = vld [vmem:[%s181 + $0x30] sm:$0xff]
                %190 = vst [vmem:[%s182 + $0x18] sm:$0xff] %v189
                %v191 = vld [vmem:[%s181 + $0x40] sm:$0xff]
                %192 = vst [vmem:[%s182 + $0x20] sm:$0xff] %v191
              $region41: #{lram_block_forward.10} parent=35 // loop_footer
                %s180 = sadd.s32 1, %s176
              $region42: #{lram_block_forward.10} parent=35 // loop_footer_branch
                %175 = sbr.rel target = $region38
              $region43: #{lram_block_forward.10} parent=35 // loop_exit
                _
            $region36: #{lram_block_forward.10} parent=27 // pred_fallthru
              _
          $region28: #{lram_block_forward.10} parent=23 // pred_fallthru
            _
          %215 = vnop
        $region24: #{lram_block_forward.10} parent=19 // pred_fallthru
          _
      $region20: #{lram_block_forward.10} parent=5 // pred_fallthru
        _
      %p216 = scmp.le.s32.totalorder 1, %s11
      %p217 = scmp.lt.s32.totalorder %s11, 3
      %p218 = pnand %p216, %p217
      %p219 = pneg %p218
      // Predicated region
      $region59: #{lram_block_forward.10} parent=5 // pred_check
        _
      $region60: #{lram_block_forward.10} parent=5 // pred_check_branch
        %221 = sbr.rel (%p218) target = $region62
      $region61: #{lram_block_forward.10} parent=5 // pred_region
        %s222 = ssub.s32 %s11, 1
        %s223 = sand.u32 %s45, 1
        %s224 = sand.u32 %s45, 1
        %s225 = smul.addr %s224, 40
        %s226 = scalar_lea.vmem [#allocation2], %s225
        // Predicated region
        $region63: #{lram_block_forward.10} parent=61 // pred_check
          %p227 = pneg %p58
        $region64: #{lram_block_forward.10} parent=61 // pred_check_branch
          %229 = sbr.rel (%p227) target = $region66
        $region65: #{lram_block_forward.10} parent=61 // pred_region
          _
        $region66: #{lram_block_forward.10} parent=61 // pred_fallthru
          _
        %p230 = pneg %p32
        %p231 = pneg %p29
        %s232 = sand.u32 %s45, 1
        %s233 = sand.u32 %s45, 1
        %s234 = smul.addr %s233, 40
        %s235 = scalar_lea.vmem [#allocation2], %s234
        %p236 = pneg %p58
        %p237 = pneg %p55
        %p238 = pneg %p84
        %p239 = pneg %p81
        %s240 = smul.u32 2, %s16
        %p241 = scmp.lt.s32.totalorder %s240, 3
        %s242 = scalar_select %p241, %s240, 3
        %s243 = smul.addr %s242, 4
        %s244 = scalar_lea.vmem %s2, %s243
        %p245 = pneg %p110
        %p246 = pneg %p107
        %p247 = scmp.lt.s32.totalorder %s16, 1
        %s248 = scalar_select %p247, %s16, 1
        %s249 = smul.addr %s248, 8
        %s250 = scalar_lea.vmem %s3, %s249
        %p251 = pneg %p136
        %p252 = pneg %p133
        %p253 = scmp.lt.s32.totalorder %s16, 1
        %s254 = scalar_select %p253, %s16, 1
        %s255 = smul.addr %s254, 8
        %s256 = scalar_lea.vmem %s4, %s255
        %s257 = smul.u32 2, %s16
        %s258 = smul.u32 2, %s16
        %p259 = scmp.lt.s32.totalorder %s258, 3
        %s260 = scalar_select %p259, %s258, 3
        %s261 = smul.addr %s260, 4
        %s262 = scalar_lea.vmem %s2, %s261
        %s263 = smul.u32 2, %s16
        %p264 = scmp.lt.s32.totalorder %s16, 1
        %s265 = scalar_select %p264, %s16, 1
        %s266 = smul.addr %s265, 8
        %s267 = scalar_lea.vmem %s3, %s266
        %p268 = scmp.lt.s32.totalorder %s16, 1
        %s269 = scalar_select %p268, %s16, 1
        %s270 = smul.addr %s269, 8
        %s271 = scalar_lea.vmem %s4, %s270
        %v273 = vld [vmem:[%s0] sm:$0x7]
        %v274 = vld [vmem:[%s226] sm:$0xff]
        %v275 = vld [vmem:[%s226 + $0x8] sm:$0xff]
        %v276 = vld [vmem:[%s226 + $0x10] sm:$0xff]
        %v277 = vld [vmem:[%s226 + $0x18] sm:$0xff]
        %v278 = vld [vmem:[%s226 + $0x20] sm:$0x33]
        %v284 = vunpack.c.l.b16 %v274
        %v285 = vunpack.c.h.b16 %v274
        %v286 = vunpack.c.l.b16 %v275
        %v287 = vunpack.c.h.b16 %v275
        %v288 = vunpack.c.l.b16 %v276
        %v289 = vunpack.c.h.b16 %v276
        %v290 = vunpack.c.l.b16 %v277
        %v291 = vunpack.c.h.b16 %v277
        %v292 = vunpack.c.l.b16 %v278
        %v293 = vunpack.c.h.b16 %v278
        %v294 = vpack.c.b16 %v286, %v284
        %v295 = vpack.c.b16 %v287, %v285
        %v296 = vpack.c.b16 %v290, %v288
        %v297 = vpack.c.b16 %v291, %v289
        %v298 = vpack.c.b16 %v292, %v292
        %v299 = vpack.c.b16 %v293, %v293
        %vm304 = vcmask 293888
        %v306 = vsel %vm304, %v273, 0
        %vm308 = vcmask 1041408
        %v310 = vsel %vm308, %v298, 0
        %v313 = vsel %vm308, %v299, 0
        %315 = vmatprep.subr.bf16.mxu0 %v295
        %316 = vmatpush1.bf16.msra.mxu0 %v294
        %317 = vmatprep.subr.bf16.mxu0 %v297
        %318 = vmatpush1.bf16.msra.mxu0 %v296
        %319 = vmatprep.subr.bf16.mxu0 %v313
        %320 = vmatpush1.bf16.msra.mxu0 %v310
        %321 = vmatprep.subr.bf16.mxu0 0
        %322 = vmatpush1.bf16.msra.mxu0 0
        %323 = vmatprep.subr.bf16.mxu0 0
        %324 = vmatpush1.bf16.msra.mxu0 0
        %325 = vmatprep.subr.bf16.mxu0 0
        %326 = vmatpush1.bf16.msra.mxu0 0
        %327 = vmatprep.subr.bf16.mxu0 0
        %328 = vmatpush1.bf16.msra.mxu0 0
        %329 = vmatprep.subr.bf16.mxu0 0
        %330 = vmatpush1.bf16.msra.mxu0 0
        %331 = vmatprep.subr.bf16.mxu0 0
        %332 = vmatpush1.bf16.msra.mxu0 0
        %333 = vmatprep.subr.bf16.mxu0 0
        %334 = vmatpush1.bf16.msra.mxu0 0
        %335 = vmatprep.subr.bf16.mxu0 0
        %336 = vmatpush1.bf16.msra.mxu0 0
        %337 = vmatprep.subr.bf16.mxu0 0
        %338 = vmatpush1.bf16.msra.mxu0 0
        %339 = vmatprep.subr.bf16.mxu0 0
        %340 = vmatpush1.bf16.msra.mxu0 0
        %341 = vmatprep.subr.bf16.mxu0 0
        %342 = vmatpush1.bf16.msra.mxu0 0
        %343 = vmatprep.subr.bf16.mxu0 0
        %344 = vmatpush1.bf16.msra.mxu0 0
        %345 = vmatprep.subr.bf16.mxu0 0
        %346 = vmatpush1.bf16.msra.mxu0 0
        %347 = vmatprep.mubr.bf16.mxu0 0
        %348 = vmatmul.mubr.bf16.gmra.mrb[0].mxu0 %v306
        %v349 = vpop.f32.mrb[0].mxu0
        %v350 = vadd.f32 0.0, %v349
        %v351 = vpop.f32.mrb[0].mxu0
        %v352 = vadd.f32 0.0, %v351
        %v353 = vpop.f32.mrb[0].mxu0
        %v354 = vpop.f32.mrb[0].mxu0
        %355 = vdwg.mxu0
        %v356 = vpack.c.bf16 %v350, %v350
        %v357 = vpack.c.bf16 %v352, %v352
        %v360 = vunpack.c.l.b16 %v356
        %v361 = vunpack.c.l.b16 %v357
        %v362 = vpack.c.b16 %v361, %v360
        %364 = vst [vmem:[%s262] sm:$0x77] %v362
        %vm365 = vcmask 1045504
        %v366 = vsel %vm365, %v350, 0.0
        %v367 = vsel %vm365, %v352, 0.0
        %v368 = vadd.f32 %v366, %v367
        %369 = vadd.xlane.f32.xlu0 %v368
        %v370 = vpop.xlane.xlu0 %369
        %vm371 = vcmask 5120
        %372 = vst.msk [vmem:[%s267] sm:$0x3f] %vm371, %v370
        %v373 = vmul.f32 %v350, %v350
        %v374 = vmul.f32 %v352, %v352
        %v375 = vsel %vm365, %v373, 0.0
        %v376 = vsel %vm365, %v374, 0.0
        %v377 = vadd.f32 %v375, %v376
        %378 = vadd.xlane.f32.xlu0 %v377
        %v379 = vpop.xlane.xlu0 %378
        %380 = vst.msk [vmem:[%s271] sm:$0x3f] %vm371, %v379
        %s381 = smul.u32 2, %s16
        %p382 = scmp.lt.s32.totalorder %s381, 3
        %s383 = scalar_select %p382, %s381, 3
        %s384 = smul.addr %s383, 4
        %s385 = scalar_lea.vmem %s2, %s384
        %p386 = scmp.lt.s32.totalorder %s16, 1
        %s387 = scalar_select %p386, %s16, 1
        %s388 = smul.addr %s387, 8
        %s389 = scalar_lea.vmem %s3, %s388
        %p390 = scmp.lt.s32.totalorder %s16, 1
        %s391 = scalar_select %p390, %s16, 1
        %s392 = smul.addr %s391, 8
        %s393 = scalar_lea.vmem %s4, %s392
        // Predicated region
        $region67: #{lram_block_forward.10} parent=61 // pred_check
          %p394 = pneg %p81
        $region68: #{lram_block_forward.10} parent=61 // pred_check_branch
          %396 = sbr.rel (%p394) target = $region70
        $region69: #{lram_block_forward.10} parent=61 // pred_region
          %s397 = smul.u32 2, %s16
        $region70: #{lram_block_forward.10} parent=61 // pred_fallthru
          _
        // Predicated region
        $region71: #{lram_block_forward.10} parent=61 // pred_check
          %p398 = pneg %p107
        $region72: #{lram_block_forward.10} parent=61 // pred_check_branch
          %400 = sbr.rel (%p398) target = $region74
        $region73: #{lram_block_forward.10} parent=61 // pred_region
          _
        $region74: #{lram_block_forward.10} parent=61 // pred_fallthru
          _
        // Predicated region
        $region75: #{lram_block_forward.10} parent=61 // pred_check
          %p401 = pneg %p133
        $region76: #{lram_block_forward.10} parent=61 // pred_check_branch
          %403 = sbr.rel (%p401) target = $region78
        $region77: #{lram_block_forward.10} parent=61 // pred_region
          _
        $region78: #{lram_block_forward.10} parent=61 // pred_fallthru
          _
      $region62: #{lram_block_forward.10} parent=5 // pred_fallthru
        _
      %p404 = scmp.le.s32.totalorder 2, %s11
      // Predicated region
      $region79: #{lram_block_forward.10} parent=5 // pred_check
        %p405 = pneg %p404
      $region80: #{lram_block_forward.10} parent=5 // pred_check_branch
        %407 = sbr.rel (%p405) target = $region82
      $region81: #{lram_block_forward.10} parent=5 // pred_region
        %s408 = ssub.s32 %s11, 2
        // Predicated region
        $region83: #{lram_block_forward.10} parent=81 // pred_check
          %p409 = pneg %p87
        $region84: #{lram_block_forward.10} parent=81 // pred_check_branch
          %411 = sbr.rel (%p409) target = $region86
        $region85: #{lram_block_forward.10} parent=81 // pred_region
          %s412 = smul.u32 2, %s17
          %p413 = scmp.lt.s32.totalorder %s412, 3
          %s414 = scalar_select %p413, %s412, 3
          %s415 = smul.addr %s414, 4
          %s416 = scalar_lea.vmem %s2, %s415
        $region86: #{lram_block_forward.10} parent=81 // pred_fallthru
          _
        // Predicated region
        $region87: #{lram_block_forward.10} parent=81 // pred_check
          %p417 = pneg %p113
        $region88: #{lram_block_forward.10} parent=81 // pred_check_branch
          %419 = sbr.rel (%p417) target = $region90
        $region89: #{lram_block_forward.10} parent=81 // pred_region
          %p420 = scmp.lt.s32.totalorder %s17, 1
          %s421 = scalar_select %p420, %s17, 1
          %s422 = smul.addr %s421, 8
          %s423 = scalar_lea.vmem %s3, %s422
        $region90: #{lram_block_forward.10} parent=81 // pred_fallthru
          _
        // Predicated region
        $region91: #{lram_block_forward.10} parent=81 // pred_check
          %p424 = pneg %p139
        $region92: #{lram_block_forward.10} parent=81 // pred_check_branch
          %426 = sbr.rel (%p424) target = $region94
        $region93: #{lram_block_forward.10} parent=81 // pred_region
          %p427 = scmp.lt.s32.totalorder %s17, 1
          %s428 = scalar_select %p427, %s17, 1
          %s429 = smul.addr %s428, 8
          %s430 = scalar_lea.vmem %s4, %s429
        $region94: #{lram_block_forward.10} parent=81 // pred_fallthru
          _
      $region82: #{lram_block_forward.10} parent=5 // pred_fallthru
        _
    $region6: #{lram_block_forward.10} parent=1 // loop_footer
      %s15 = sadd.s32 1, %s11
    $region7: #{lram_block_forward.10} parent=1 // loop_footer_branch
      %10 = sbr.rel target = $region3
    $region8: #{lram_block_forward.10} parent=1 // loop_exit
      _

// kernel: lram_block_forward.12
$region0: #{lram_block_forward.12}
  #allocation0 [shape = 'u32[]', space=smem, size = 0x4, offset = 0x4, fixed_abs, tag = 'smem constant byte address 0x4 - core index']
  #allocation1 [shape = 'u32[144,128]{1,0:T(1,128)}', space=vmem, size = 0x12000, scoped, tag = 'internal scratch']
  %s0 = inlined_call_operand.vmem [shape: bf16[6,54], index: 0, kind: input, shape index: {}]
  %s1 = inlined_call_operand.vmem [shape: bf16[54,512], index: 1, kind: input, shape index: {}]
  %s2 = inlined_call_operand.vmem [shape: bf16[6,512], index: 2, kind: output, shape index: {0}]
  %s3 = inlined_call_operand.vmem [shape: f32[2,6,1], index: 3, kind: output, shape index: {1}]
  %s4 = inlined_call_operand.vmem [shape: f32[2,6,1], index: 4, kind: output, shape index: {2}]
  %5 = xla_tuple %s2, %s3, %s4
  %s6 = sld [smem:[#allocation0]]
  $region95: #{lram_block_forward.12} parent=0
    _
  %s8 = ssub.s32 1, %s6
  %s9 = scalar_select 0, %s8, %s6
  $region1: #{lram_block_forward.12} parent=0
    #allocation2 [shape = 'u8[57344]{0}', space=vmem, size = 0xe000, scoped, tag = 'input window, operand 1']
    loop: start=0, step=1, limit=4
    $region2: #{lram_block_forward.12} parent=1 // loop_pre_header
      _
    $region3: #{lram_block_forward.12} parent=1 // loop_header
      %s11 = sphi 0, %s15
      %p12 = scmp.ge.s32.totalorder %s11, 4
      %s19 = sphi 0, %s19
      %s21 = sphi 0, %s19
      %s22 = sphi 0, %s21
      %s36 = sphi 0, %s22
      %s42 = sphi 0, %s44
      %s45 = sphi 0, %s42
      %s46 = sphi 0, %s45
      %s62 = sphi 0, %s46
      %s68 = sphi 0, %s70
      %s71 = sphi 0, %s68
      %s72 = sphi 0, %s71
      %s88 = sphi 0, %s72
      %s94 = sphi 0, %s96
      %s97 = sphi 0, %s94
      %s98 = sphi 0, %s97
      %s114 = sphi 0, %s98
      %s120 = sphi 0, %s122
      %s123 = sphi 0, %s120
      %s124 = sphi 0, %s123
      %s140 = sphi 0, %s124
    $region4: #{lram_block_forward.12} parent=1 // loop_header_branch
      %14 = sbr.rel (%p12) target = $region8
    $region5: #{lram_block_forward.12} parent=1 // loop_body
      %s16 = ssub.s32 %s11, 1
      %s17 = ssub.s32 %s11, 2
      %s18 = sadd.s32 %s11, 1
      %s20 = sadd.s32 %s19, 1
      %p23 = scmp.eq.s32.totalorder %s11, 1
      %p24 = scmp.ne.s32.totalorder %s19, %s21
      %p25 = scmp.eq.s32.totalorder %s11, 0
      %p26 = por %p24, %p25
      %p27 = scmp.ne.s32.totalorder %s19, %s21
      %p28 = scmp.eq.s32.totalorder %s16, 1
      %p29 = por %p27, %p28
      %p30 = scmp.ne.s32.totalorder %s21, %s22
      %p31 = scmp.eq.s32.totalorder %s16, 0
      %p32 = por %p30, %p31
      %p33 = scmp.ne.s32.totalorder %s21, %s22
      %p34 = scmp.eq.s32.totalorder %s17, 1
      %p35 = por %p33, %p34
      %p37 = scmp.ne.s32.totalorder %s22, %s36
      %p38 = scmp.eq.s32.totalorder %s17, 0
      %p39 = por %p37, %p38
      %s40 = ssub.s32 %s11, %s18
      %p41 = scmp.eq.s32.totalorder %s40, 0
      %s43 = sadd.s32 %s42, 1
      %s44 = scalar_select %p41, %s42, %s43
      %p47 = pneg %p41
      %p48 = scmp.eq.s32.totalorder %s11, 1
      %p49 = por %p47, %p48
      %p50 = scmp.ne.s32.totalorder %s42, %s45
      %p51 = scmp.eq.s32.totalorder %s11, 0
      %p52 = por %p50, %p51
      %p53 = scmp.ne.s32.totalorder %s42, %s45
      %p54 = scmp.eq.s32.totalorder %s16, 1
      %p55 = por %p53, %p54
      %p56 = scmp.ne.s32.totalorder %s45, %s46
      %p57 = scmp.eq.s32.totalorder %s16, 0
      %p58 = por %p56, %p57
      %p59 = scmp.ne.s32.totalorder %s45, %s46
      %p60 = scmp.eq.s32.totalorder %s17, 1
      %p61 = por %p59, %p60
      %p63 = scmp.ne.s32.totalorder %s46, %s62
      %p64 = scmp.eq.s32.totalorder %s17, 0
      %p65 = por %p63, %p64
      %s66 = ssub.s32 %s11, %s18
      %p67 = scmp.eq.s32.totalorder %s66, 0
      %s69 = sadd.s32 %s68, 1
      %s70 = scalar_select %p67, %s68, %s69
      %p73 = pneg %p67
      %p74 = scmp.eq.s32.totalorder %s11, 1
      %p75 = por %p73, %p74
      %p76 = scmp.ne.s32.totalorder %s68, %s71
      %p77 = scmp.eq.s32.totalorder %s11, 0
      %p78 = por %p76, %p77
      %p79 = scmp.ne.s32.totalorder %s68, %s71
      %p80 = scmp.eq.s32.totalorder %s16, 1
      %p81 = por %p79, %p80
      %p82 = scmp.ne.s32.totalorder %s71, %s72
      %p83 = scmp.eq.s32.totalorder %s16, 0
      %p84 = por %p82, %p83
      %p85 = scmp.ne.s32.totalorder %s71, %s72
      %p86 = scmp.eq.s32.totalorder %s17, 1
      %p87 = por %p85, %p86
      %p89 = scmp.ne.s32.totalorder %s72, %s88
      %p90 = scmp.eq.s32.totalorder %s17, 0
      %p91 = por %p89, %p90
      %s92 = ssub.s32 %s11, %s18
      %p93 = scmp.eq.s32.totalorder %s92, 0
      %s95 = sadd.s32 %s94, 1
      %s96 = scalar_select %p93, %s94, %s95
      %p99 = pneg %p93
      %p100 = scmp.eq.s32.totalorder %s11, 1
      %p101 = por %p99, %p100
      %p102 = scmp.ne.s32.totalorder %s94, %s97
      %p103 = scmp.eq.s32.totalorder %s11, 0
      %p104 = por %p102, %p103
      %p105 = scmp.ne.s32.totalorder %s94, %s97
      %p106 = scmp.eq.s32.totalorder %s16, 1
      %p107 = por %p105, %p106
      %p108 = scmp.ne.s32.totalorder %s97, %s98
      %p109 = scmp.eq.s32.totalorder %s16, 0
      %p110 = por %p108, %p109
      %p111 = scmp.ne.s32.totalorder %s97, %s98
      %p112 = scmp.eq.s32.totalorder %s17, 1
      %p113 = por %p111, %p112
      %p115 = scmp.ne.s32.totalorder %s98, %s114
      %p116 = scmp.eq.s32.totalorder %s17, 0
      %p117 = por %p115, %p116
      %s118 = ssub.s32 %s11, %s18
      %p119 = scmp.eq.s32.totalorder %s118, 0
      %s121 = sadd.s32 %s120, 1
      %s122 = scalar_select %p119, %s120, %s121
      %p125 = pneg %p119
      %p126 = scmp.eq.s32.totalorder %s11, 1
      %p127 = por %p125, %p126
      %p128 = scmp.ne.s32.totalorder %s120, %s123
      %p129 = scmp.eq.s32.totalorder %s11, 0
      %p130 = por %p128, %p129
      %p131 = scmp.ne.s32.totalorder %s120, %s123
      %p132 = scmp.eq.s32.totalorder %s16, 1
      %p133 = por %p131, %p132
      %p134 = scmp.ne.s32.totalorder %s123, %s124
      %p135 = scmp.eq.s32.totalorder %s16, 0
      %p136 = por %p134, %p135
      %p137 = scmp.ne.s32.totalorder %s123, %s124
      %p138 = scmp.eq.s32.totalorder %s17, 1
      %p139 = por %p137, %p138
      %p141 = scmp.ne.s32.totalorder %s124, %s140
      %p142 = scmp.eq.s32.totalorder %s17, 0
      %p143 = por %p141, %p142
      %p144 = scmp.le.s32.totalorder 1, %s11
      %p145 = scmp.lt.s32.totalorder %s11, 3
      %p146 = pnand %p144, %p145
      %p147 = pneg %p146
      // Predicated region
      $region9: #{lram_block_forward.12} parent=5 // pred_check
        _
      $region10: #{lram_block_forward.12} parent=5 // pred_check_branch
        %149 = sbr.rel (%p146) target = $region12
      $region11: #{lram_block_forward.12} parent=5 // pred_region
        %s150 = ssub.s32 %s11, 1
        // Predicated region
        $region13: #{lram_block_forward.12} parent=11 // pred_check
          %p151 = pneg %p32
        $region14: #{lram_block_forward.12} parent=11 // pred_check_branch
          %153 = sbr.rel (%p151) target = $region16
        $region15: #{lram_block_forward.12} parent=11 // pred_region
          _
        $region16: #{lram_block_forward.12} parent=11 // pred_fallthru
          _
      $region12: #{lram_block_forward.12} parent=5 // pred_fallthru
        _
      %p154 = scmp.lt.s32.totalorder %s11, 2
      // Predicated region
      $region17: #{lram_block_forward.12} parent=5 // pred_check
        %p155 = pneg %p154
      $region18: #{lram_block_forward.12} parent=5 // pred_check_branch
        %157 = sbr.rel (%p155) target = $region20
      $region19: #{lram_block_forward.12} parent=5 // pred_region
        // Predicated region
        $region21: #{lram_block_forward.12} parent=19 // pred_check
          %p158 = pneg %p52
        $region22: #{lram_block_forward.12} parent=19 // pred_check_branch
          %160 = sbr.rel (%p158) target = $region24
        $region23: #{lram_block_forward.12} parent=19 // pred_region
          %s161 = sand.u32 %s42, 1
          %s162 = sand.u32 %s42, 1
          %s163 = smul.addr %s162, 56
          %s164 = scalar_lea.vmem [#allocation2], %s163
          %s165 = smul.u32 2, %s11
          %s166 = smul.addr %s165, 4
          %s167 = scalar_lea.vmem %s1, %s166
          // Predicated region
          $region25: #{lram_block_forward.12} parent=23 // pred_check
            _
          $region26: #{lram_block_forward.12} parent=23 // pred_check_branch
            %169 = sbr.rel (0) target = $region28
          $region27: #{lram_block_forward.12} parent=23 // pred_region
            // Predicated region
            $region29: #{lram_block_forward.12} parent=27 // pred_check
              _
            $region30: #{lram_block_forward.12} parent=27 // pred_check_branch
              %171 = sbr.rel (0) target = $region32
            $region31: #{lram_block_forward.12} parent=27 // pred_region
              // Predicated region
              $region44: #{lram_block_forward.12} parent=31 // pred_check
                _
              $region45: #{lram_block_forward.12} parent=31 // pred_check_branch
                %198 = sbr.rel (0) target = $region47
              $region46: #{lram_block_forward.12} parent=31 // pred_region
                loop: start=0, step=1, limit=1
                $region48: #{lram_block_forward.12} parent=46 // loop_pre_header
                  _
                $region49: #{lram_block_forward.12} parent=46 // loop_header
                  %s200 = sphi 0, %s204
                  %p201 = scmp.ge.s32.totalorder %s200, 1
                  %s205 = sphi %s167, %s167
                  %s206 = sphi %s164, %s164
                $region50: #{lram_block_forward.12} parent=46 // loop_header_branch
                  %203 = sbr.rel (%p201) target = $region54
                $region51: #{lram_block_forward.12} parent=46 // loop_body
                  %v207 = vld [vmem:[%s205] sm:$0xff]
                  %208 = vst [vmem:[%s206] sm:$0xff] %v207
                  %v209 = vld [vmem:[%s205 + $0x10] sm:$0xff]
                  %210 = vst [vmem:[%s206 + $0x8] sm:$0xff] %v209
                  %v211 = vld [vmem:[%s205 + $0x20] sm:$0xff]
                  %212 = vst [vmem:[%s206 + $0x10] sm:$0xff] %v211
                  %v213 = vld [vmem:[%s205 + $0x30] sm:$0xff]
                  %214 = vst [vmem:[%s206 + $0x18] sm:$0xff] %v213
                  %v215 = vld [vmem:[%s205 + $0x40] sm:$0xff]
                  %216 = vst [vmem:[%s206 + $0x20] sm:$0xff] %v215
                  %v217 = vld [vmem:[%s205 + $0x50] sm:$0xff]
                  %218 = vst [vmem:[%s206 + $0x28] sm:$0xff] %v217
                  %v219 = vld [vmem:[%s205 + $0x60] sm:$0xff]
                  %220 = vst [vmem:[%s206 + $0x30] sm:$0xff] %v219
                $region52: #{lram_block_forward.12} parent=46 // loop_footer
                  %s204 = sadd.s32 1, %s200
                $region53: #{lram_block_forward.12} parent=46 // loop_footer_branch
                  %199 = sbr.rel target = $region49
                $region54: #{lram_block_forward.12} parent=46 // loop_exit
                  _
              $region47: #{lram_block_forward.12} parent=31 // pred_fallthru
                _
              // Predicated region
              $region55: #{lram_block_forward.12} parent=31 // pred_check
                _
              $region56: #{lram_block_forward.12} parent=31 // pred_check_branch
                %222 = sbr.rel target = $region58
              $region57: #{lram_block_forward.12} parent=31 // pred_region
                _
              $region58: #{lram_block_forward.12} parent=31 // pred_fallthru
                _
            $region32: #{lram_block_forward.12} parent=27 // pred_fallthru
              _
            // Predicated region
            $region33: #{lram_block_forward.12} parent=27 // pred_check
              _
            $region34: #{lram_block_forward.12} parent=27 // pred_check_branch
              %173 = sbr.rel target = $region36
            $region35: #{lram_block_forward.12} parent=27 // pred_region
              loop: start=0, step=1, limit=1
              $region37: #{lram_block_forward.12} parent=35 // loop_pre_header
                _
              $region38: #{lram_block_forward.12} parent=35 // loop_header
                %s176 = sphi 0, %s180
                %p177 = scmp.ge.s32.totalorder %s176, 1
                %s181 = sphi %s167, %s167
                %s182 = sphi %s164, %s164
              $region39: #{lram_block_forward.12} parent=35 // loop_header_branch
                %179 = sbr.rel (%p177) target = $region43
              $region40: #{lram_block_forward.12} parent=35 // loop_body
                %v183 = vld [vmem:[%s181] sm:$0xff]
                %184 = vst [vmem:[%s182] sm:$0xff] %v183
                %v185 = vld [vmem:[%s181 + $0x10] sm:$0xff]
                %186 = vst [vmem:[%s182 + $0x8] sm:$0xff] %v185
                %v187 = vld [vmem:[%s181 + $0x20] sm:$0xff]
                %188 = vst [vmem:[%s182 + $0x10] sm:$0xff] %v187
                %v189 = vld [vmem:[%s181 + $0x30] sm:$0xff]
                %190 = vst [vmem:[%s182 + $0x18] sm:$0xff] %v189
                %v191 = vld [vmem:[%s181 + $0x40] sm:$0xff]
                %192 = vst [vmem:[%s182 + $0x20] sm:$0xff] %v191
                %v193 = vld [vmem:[%s181 + $0x50] sm:$0xff]
                %194 = vst [vmem:[%s182 + $0x28] sm:$0xff] %v193
                %v195 = vld [vmem:[%s181 + $0x60] sm:$0xff]
                %196 = vst [vmem:[%s182 + $0x30] sm:$0xff] %v195
              $region41: #{lram_block_forward.12} parent=35 // loop_footer
                %s180 = sadd.s32 1, %s176
              $region42: #{lram_block_forward.12} parent=35 // loop_footer_branch
                %175 = sbr.rel target = $region38
              $region43: #{lram_block_forward.12} parent=35 // loop_exit
                _
            $region36: #{lram_block_forward.12} parent=27 // pred_fallthru
              _
          $region28: #{lram_block_forward.12} parent=23 // pred_fallthru
            _
          %223 = vnop
        $region24: #{lram_block_forward.12} parent=19 // pred_fallthru
          _
      $region20: #{lram_block_forward.12} parent=5 // pred_fallthru
        _
      %p224 = scmp.le.s32.totalorder 1, %s11
      %p225 = scmp.lt.s32.totalorder %s11, 3
      %p226 = pnand %p224, %p225
      %p227 = pneg %p226
      // Predicated region
      $region59: #{lram_block_forward.12} parent=5 // pred_check
        _
      $region60: #{lram_block_forward.12} parent=5 // pred_check_branch
        %229 = sbr.rel (%p226) target = $region62
      $region61: #{lram_block_forward.12} parent=5 // pred_region
        %s230 = ssub.s32 %s11, 1
        %s231 = sand.u32 %s45, 1
        %s232 = sand.u32 %s45, 1
        %s233 = smul.addr %s232, 56
        %s234 = scalar_lea.vmem [#allocation2], %s233
        // Predicated region
        $region63: #{lram_block_forward.12} parent=61 // pred_check
          %p235 = pneg %p58
        $region64: #{lram_block_forward.12} parent=61 // pred_check_branch
          %237 = sbr.rel (%p235) target = $region66
        $region65: #{lram_block_forward.12} parent=61 // pred_region
          _
        $region66: #{lram_block_forward.12} parent=61 // pred_fallthru
          _
        %p238 = pneg %p32
        %p239 = pneg %p29
        %s240 = sand.u32 %s45, 1
        %s241 = sand.u32 %s45, 1
        %s242 = smul.addr %s241, 56
        %s243 = scalar_lea.vmem [#allocation2], %s242
        %p244 = pneg %p58
        %p245 = pneg %p55
        %p246 = pneg %p84
        %p247 = pneg %p81
        %s248 = smul.u32 2, %s16
        %p249 = scmp.lt.s32.totalorder %s248, 3
        %s250 = scalar_select %p249, %s248, 3
        %s251 = smul.addr %s250, 4
        %s252 = scalar_lea.vmem %s2, %s251
        %p253 = pneg %p110
        %p254 = pneg %p107
        %p255 = scmp.lt.s32.totalorder %s16, 1
        %s256 = scalar_select %p255, %s16, 1
        %s257 = smul.addr %s256, 8
        %s258 = scalar_lea.vmem %s3, %s257
        %p259 = pneg %p136
        %p260 = pneg %p133
        %p261 = scmp.lt.s32.totalorder %s16, 1
        %s262 = scalar_select %p261, %s16, 1
        %s263 = smul.addr %s262, 8
        %s264 = scalar_lea.vmem %s4, %s263
        %s265 = smul.u32 2, %s16
        %s266 = smul.u32 2, %s16
        %p267 = scmp.lt.s32.totalorder %s266, 3
        %s268 = scalar_select %p267, %s266, 3
        %s269 = smul.addr %s268, 4
        %s270 = scalar_lea.vmem %s2, %s269
        %s271 = smul.u32 2, %s16
        %p272 = scmp.lt.s32.totalorder %s16, 1
        %s273 = scalar_select %p272, %s16, 1
        %s274 = smul.addr %s273, 8
        %s275 = scalar_lea.vmem %s3, %s274
        %p276 = scmp.lt.s32.totalorder %s16, 1
        %s277 = scalar_select %p276, %s16, 1
        %s278 = smul.addr %s277, 8
        %s279 = scalar_lea.vmem %s4, %s278
        %v281 = vld [vmem:[%s0] sm:$0x7]
        %v282 = vld [vmem:[%s234] sm:$0xff]
        %v283 = vld [vmem:[%s234 + $0x8] sm:$0xff]
        %v284 = vld [vmem:[%s234 + $0x10] sm:$0xff]
        %v285 = vld [vmem:[%s234 + $0x18] sm:$0xff]
        %v286 = vld [vmem:[%s234 + $0x20] sm:$0xff]
        %v287 = vld [vmem:[%s234 + $0x28] sm:$0xff]
        %v288 = vld [vmem:[%s234 + $0x30] sm:$0x77]
        %v296 = vunpack.c.l.b16 %v282
        %v297 = vunpack.c.h.b16 %v282
        %v298 = vunpack.c.l.b16 %v283
        %v299 = vunpack.c.h.b16 %v283
        %v300 = vunpack.c.l.b16 %v284
        %v301 = vunpack.c.h.b16 %v284
        %v302 = vunpack.c.l.b16 %v285
        %v303 = vunpack.c.h.b16 %v285
        %v304 = vunpack.c.l.b16 %v286
        %v305 = vunpack.c.h.b16 %v286
        %v306 = vunpack.c.l.b16 %v287
        %v307 = vunpack.c.h.b16 %v287
        %v308 = vunpack.c.l.b16 %v288
        %v309 = vunpack.c.h.b16 %v288
        %v310 = vpack.c.b16 %v298, %v296
        %v311 = vpack.c.b16 %v299, %v297
        %v312 = vpack.c.b16 %v302, %v300
        %v313 = vpack.c.b16 %v303, %v301
        %v314 = vpack.c.b16 %v306, %v304
        %v315 = vpack.c.b16 %v307, %v305
        %v316 = vpack.c.b16 %v308, %v308
        %v317 = vpack.c.b16 %v309, %v309
        %vm324 = vcmask 441344
        %v326 = vsel %vm324, %v281, 0
        %vm328 = vcmask 1042432
        %v330 = vsel %vm328, %v316, 0
        %v333 = vsel %vm328, %v317, 0
        %335 = vmatprep.subr.bf16.mxu0 %v311
        %336 = vmatpush1.bf16.msra.mxu0 %v310
        %337 = vmatprep.subr.bf16.mxu0 %v313
        %338 = vmatpush1.bf16.msra.mxu0 %v312
        %339 = vmatprep.subr.bf16.mxu0 %v315
        %340 = vmatpush1.bf16.msra.mxu0 %v314
        %341 = vmatprep.subr.bf16.mxu0 %v333
        %342 = vmatpush1.bf16.msra.mxu0 %v330
        %343 = vmatprep.subr.bf16.mxu0 0
        %344 = vmatpush1.bf16.msra.mxu0 0
        %345 = vmatprep.subr.bf16.mxu0 0
        %346 = vmatpush1.bf16.msra.mxu0 0
        %347 = vmatprep.subr.bf16.mxu0 0
        %348 = vmatpush1.bf16.msra.mxu0 0
        %349 = vmatprep.subr.bf16.mxu0 0
        %350 = vmatpush1.bf16.msra.mxu0 0
        %351 = vmatprep.subr.bf16.mxu0 0
        %352 = vmatpush1.bf16.msra.mxu0 0
        %353 = vmatprep.subr.bf16.mxu0 0
        %354 = vmatpush1.bf16.msra.mxu0 0
        %355 = vmatprep.subr.bf16.mxu0 0
        %356 = vmatpush1.bf16.msra.mxu0 0
        %357 = vmatprep.subr.bf16.mxu0 0
        %358 = vmatpush1.bf16.msra.mxu0 0
        %359 = vmatprep.subr.bf16.mxu0 0
        %360 = vmatpush1.bf16.msra.mxu0 0
        %361 = vmatprep.subr.bf16.mxu0 0
        %362 = vmatpush1.bf16.msra.mxu0 0
        %363 = vmatprep.subr.bf16.mxu0 0
        %364 = vmatpush1.bf16.msra.mxu0 0
        %365 = vmatprep.subr.bf16.mxu0 0
        %366 = vmatpush1.bf16.msra.mxu0 0
        %367 = vmatprep.mubr.bf16.mxu0 0
        %368 = vmatmul.mubr.bf16.gmra.mrb[0].mxu0 %v326
        %v369 = vpop.f32.mrb[0].mxu0
        %v370 = vadd.f32 0.0, %v369
        %v371 = vpop.f32.mrb[0].mxu0
        %v372 = vadd.f32 0.0, %v371
        %v373 = vpop.f32.mrb[0].mxu0
        %v374 = vpop.f32.mrb[0].mxu0
        %375 = vdwg.mxu0
        %v376 = vpack.c.bf16 %v370, %v370
        %v377 = vpack.c.bf16 %v372, %v372
        %v380 = vunpack.c.l.b16 %v376
        %v381 = vunpack.c.l.b16 %v377
        %v382 = vpack.c.b16 %v381, %v380
        %384 = vst [vmem:[%s270] sm:$0x77] %v382
        %vm385 = vcmask 1045504
        %v386 = vsel %vm385, %v370, 0.0
        %v387 = vsel %vm385, %v372, 0.0
        %v388 = vadd.f32 %v386, %v387
        %389 = vadd.xlane.f32.xlu0 %v388
        %v390 = vpop.xlane.xlu0 %389
        %vm391 = vcmask 5120
        %392 = vst.msk [vmem:[%s275] sm:$0x3f] %vm391, %v390
        %v393 = vmul.f32 %v370, %v370
        %v394 = vmul.f32 %v372, %v372
        %v395 = vsel %vm385, %v393, 0.0
        %v396 = vsel %vm385, %v394, 0.0
        %v397 = vadd.f32 %v395, %v396
        %398 = vadd.xlane.f32.xlu0 %v397
        %v399 = vpop.xlane.xlu0 %398
        %400 = vst.msk [vmem:[%s279] sm:$0x3f] %vm391, %v399
        %s401 = smul.u32 2, %s16
        %p402 = scmp.lt.s32.totalorder %s401, 3
        %s403 = scalar_select %p402, %s401, 3
        %s404 = smul.addr %s403, 4
        %s405 = scalar_lea.vmem %s2, %s404
        %p406 = scmp.lt.s32.totalorder %s16, 1
        %s407 = scalar_select %p406, %s16, 1
        %s408 = smul.addr %s407, 8
        %s409 = scalar_lea.vmem %s3, %s408
        %p410 = scmp.lt.s32.totalorder %s16, 1
        %s411 = scalar_select %p410, %s16, 1
        %s412 = smul.addr %s411, 8
        %s413 = scalar_lea.vmem %s4, %s412
        // Predicated region
        $region67: #{lram_block_forward.12} parent=61 // pred_check
          %p414 = pneg %p81
        $region68: #{lram_block_forward.12} parent=61 // pred_check_branch
          %416 = sbr.rel (%p414) target = $region70
        $region69: #{lram_block_forward.12} parent=61 // pred_region
          %s417 = smul.u32 2, %s16
        $region70: #{lram_block_forward.12} parent=61 // pred_fallthru
          _
        // Predicated region
        $region71: #{lram_block_forward.12} parent=61 // pred_check
          %p418 = pneg %p107
        $region72: #{lram_block_forward.12} parent=61 // pred_check_branch
          %420 = sbr.rel (%p418) target = $region74
        $region73: #{lram_block_forward.12} parent=61 // pred_region
          _
        $region74: #{lram_block_forward.12} parent=61 // pred_fallthru
          _
        // Predicated region
        $region75: #{lram_block_forward.12} parent=61 // pred_check
          %p421 = pneg %p133
        $region76: #{lram_block_forward.12} parent=61 // pred_check_branch
          %423 = sbr.rel (%p421) target = $region78
        $region77: #{lram_block_forward.12} parent=61 // pred_region
          _
        $region78: #{lram_block_forward.12} parent=61 // pred_fallthru
          _
      $region62: #{lram_block_forward.12} parent=5 // pred_fallthru
        _
      %p424 = scmp.le.s32.totalorder 2, %s11
      // Predicated region
      $region79: #{lram_block_forward.12} parent=5 // pred_check
        %p425 = pneg %p424
      $region80: #{lram_block_forward.12} parent=5 // pred_check_branch
        %427 = sbr.rel (%p425) target = $region82
      $region81: #{lram_block_forward.12} parent=5 // pred_region
        %s428 = ssub.s32 %s11, 2
        // Predicated region
        $region83: #{lram_block_forward.12} parent=81 // pred_check
          %p429 = pneg %p87
        $region84: #{lram_block_forward.12} parent=81 // pred_check_branch
          %431 = sbr.rel (%p429) target = $region86
        $region85: #{lram_block_forward.12} parent=81 // pred_region
          %s432 = smul.u32 2, %s17
          %p433 = scmp.lt.s32.totalorder %s432, 3
          %s434 = scalar_select %p433, %s432, 3
          %s435 = smul.addr %s434, 4
          %s436 = scalar_lea.vmem %s2, %s435
        $region86: #{lram_block_forward.12} parent=81 // pred_fallthru
          _
        // Predicated region
        $region87: #{lram_block_forward.12} parent=81 // pred_check
          %p437 = pneg %p113
        $region88: #{lram_block_forward.12} parent=81 // pred_check_branch
          %439 = sbr.rel (%p437) target = $region90
        $region89: #{lram_block_forward.12} parent=81 // pred_region
          %p440 = scmp.lt.s32.totalorder %s17, 1
          %s441 = scalar_select %p440, %s17, 1
          %s442 = smul.addr %s441, 8
          %s443 = scalar_lea.vmem %s3, %s442
        $region90: #{lram_block_forward.12} parent=81 // pred_fallthru
          _
        // Predicated region
        $region91: #{lram_block_forward.12} parent=81 // pred_check
          %p444 = pneg %p139
        $region92: #{lram_block_forward.12} parent=81 // pred_check_branch
          %446 = sbr.rel (%p444) target = $region94
        $region93: #{lram_block_forward.12} parent=81 // pred_region
          %p447 = scmp.lt.s32.totalorder %s17, 1
          %s448 = scalar_select %p447, %s17, 1
          %s449 = smul.addr %s448, 8
          %s450 = scalar_lea.vmem %s4, %s449
        $region94: #{lram_block_forward.12} parent=81 // pred_fallthru
          _
      $region82: #{lram_block_forward.12} parent=5 // pred_fallthru
        _
    $region6: #{lram_block_forward.12} parent=1 // loop_footer
      %s15 = sadd.s32 1, %s11
    $region7: #{lram_block_forward.12} parent=1 // loop_footer_branch
      %10 = sbr.rel target = $region3
    $region8: #{lram_block_forward.12} parent=1 // loop_exit
      _

// kernel: lram_block_forward.14
$region0: #{lram_block_forward.14}
  #allocation0 [shape = 'u32[]', space=smem, size = 0x4, offset = 0x4, fixed_abs, tag = 'smem constant byte address 0x4 - core index']
  #allocation1 [shape = 'u32[144,128]{1,0:T(1,128)}', space=vmem, size = 0x12000, scoped, tag = 'internal scratch']
  %s0 = inlined_call_operand.vmem [shape: bf16[2,18], index: 0, kind: input, shape index: {}]
  %s1 = inlined_call_operand.vmem [shape: f32[2,1], index: 1, kind: input, shape index: {}]
  %s2 = inlined_call_operand.vmem [shape: bf16[18,128], index: 2, kind: input, shape index: {}]
  %s3 = inlined_call_operand.vmem [shape: bf16[2,128], index: 3, kind: output, shape index: {}]
  %s4 = sld [smem:[#allocation0]]
  $region22: #{lram_block_forward.14} parent=0
    _
  %s6 = ssub.s32 1, %s4
  %s7 = scalar_select 0, %s6, %s4
  // Predicated region
  $region2: #{lram_block_forward.14} parent=0 // pred_check
    _
  $region3: #{lram_block_forward.14} parent=0 // pred_check_branch
    %9 = sbr.rel (0) target = $region5
  $region4: #{lram_block_forward.14} parent=0 // pred_region
    _
  $region5: #{lram_block_forward.14} parent=0 // pred_fallthru
    _
  // Predicated region
  $region6: #{lram_block_forward.14} parent=0 // pred_check
    _
  $region7: #{lram_block_forward.14} parent=0 // pred_check_branch
    %11 = sbr.rel (0) target = $region9
  $region8: #{lram_block_forward.14} parent=0 // pred_region
    _
  $region9: #{lram_block_forward.14} parent=0 // pred_fallthru
    _
  // Predicated region
  $region10: #{lram_block_forward.14} parent=0 // pred_check
    _
  $region11: #{lram_block_forward.14} parent=0 // pred_check_branch
    %13 = sbr.rel (0) target = $region13
  $region12: #{lram_block_forward.14} parent=0 // pred_region
    _
  $region13: #{lram_block_forward.14} parent=0 // pred_fallthru
    _
  %v15 = vld [vmem:[%s0] sm:$0x1]
  %v16 = vld [vmem:[%s2] sm:$0xf]
  %v17 = vld [vmem:[%s2 + $0x4] sm:$0xf]
  %v18 = vld [vmem:[%s2 + $0x8] sm:$0x1]
  %v19 = vld [vmem:[%s1] sm:$0x3]
  %21 = vset.pattern.permute.xlu0 0
  %22 = vperm.xlu0 %21, %v19
  %v23 = vpop.permute.xlu0 %22
  %v28 = vunpack.c.l.b16 %v16
  %v29 = vunpack.c.l.b16 %v17
  %v30 = vunpack.c.l.b16 %v18
  %v31 = vpack.c.b16 %v29, %v28
  %v32 = vpack.c.b16 %v30, %v30
  %vm34 = vcmask 146432
  %v36 = vsel %vm34, %v15, 0
  %vm38 = vcmask 1040384
  %v40 = vsel %vm38, %v32, 0
  %42 = vmatprep.subr.bf16.mxu0 0
  %43 = vmatpush1.bf16.msra.mxu0 %v31
  %44 = vmatprep.subr.bf16.mxu0 0
  %45 = vmatpush1.bf16.msra.mxu0 %v40
  %46 = vmatprep.subr.bf16.mxu0 0
  %47 = vmatpush1.bf16.msra.mxu0 0
  %48 = vmatprep.subr.bf16.mxu0 0
  %49 = vmatpush1.bf16.msra.mxu0 0
  %50 = vmatprep.subr.bf16.mxu0 0
  %51 = vmatpush1.bf16.msra.mxu0 0
  %52 = vmatprep.subr.bf16.mxu0 0
  %53 = vmatpush1.bf16.msra.mxu0 0
  %54 = vmatprep.subr.bf16.mxu0 0
  %55 = vmatpush1.bf16.msra.mxu0 0
  %56 = vmatprep.subr.bf16.mxu0 0
  %57 = vmatpush1.bf16.msra.mxu0 0
  %58 = vmatprep.subr.bf16.mxu0 0
  %59 = vmatpush1.bf16.msra.mxu0 0
  %60 = vmatprep.subr.bf16.mxu0 0
  %61 = vmatpush1.bf16.msra.mxu0 0
  %62 = vmatprep.subr.bf16.mxu0 0
  %63 = vmatpush1.bf16.msra.mxu0 0
  %64 = vmatprep.subr.bf16.mxu0 0
  %65 = vmatpush1.bf16.msra.mxu0 0
  %66 = vmatprep.subr.bf16.mxu0 0
  %67 = vmatpush1.bf16.msra.mxu0 0
  %68 = vmatprep.subr.bf16.mxu0 0
  %69 = vmatpush1.bf16.msra.mxu0 0
  %70 = vmatprep.subr.bf16.mxu0 0
  %71 = vmatpush1.bf16.msra.mxu0 0
  %72 = vmatprep.subr.bf16.mxu0 0
  %73 = vmatpush1.bf16.msra.mxu0 0
  %74 = vmatprep.mubr.bf16.mxu0 0
  %75 = vmatmul.mubr.bf16.gmra.mrb[0].mxu0 %v36
  %v76 = vpop.f32.mrb[0].mxu0
  %v77 = vadd.f32 %v23, %v76
  %v78 = vpop.f32.mrb[0].mxu0
  %v79 = vpop.f32.mrb[0].mxu0
  %v80 = vpop.f32.mrb[0].mxu0
  %81 = vdwg.mxu0
  %v82 = vpack.c.bf16 %v77, %v77
  %83 = vst [vmem:[%s3] sm:$0x1] %v82
  // Predicated region
  $region14: #{lram_block_forward.14} parent=0 // pred_check
    _
  $region15: #{lram_block_forward.14} parent=0 // pred_check_branch
    %85 = sbr.rel (0) target = $region17
  $region16: #{lram_block_forward.14} parent=0 // pred_region
    _
  $region17: #{lram_block_forward.14} parent=0 // pred_fallthru
    _
  // Predicated region
  $region18: #{lram_block_forward.14} parent=0 // pred_check
    _
  $region19: #{lram_block_forward.14} parent=0 // pred_check_branch
    %87 = sbr.rel (0) target = $region21
  $region20: #{lram_block_forward.14} parent=0 // pred_region
    _
  $region21: #{lram_block_forward.14} parent=0 // pred_fallthru
    _

// kernel: lram_block_forward.17
$region0: #{lram_block_forward.17}
  #allocation0 [shape = 'u32[]', space=smem, size = 0x4, offset = 0x4, fixed_abs, tag = 'smem constant byte address 0x4 - core index']
  #allocation1 [shape = 'u32[144,128]{1,0:T(1,128)}', space=vmem, size = 0x12000, scoped, tag = 'internal scratch']
  #allocation2 [shape = 'f32[1,1]{1,0:T(1,128)S(1)}', space=vmem, size = 0x200, scoped, tag = 'scoped memory for lram_block_forward.17']
  %s0 = inlined_call_operand.vmem [shape: bf16[1,54], index: 0, kind: input, shape index: {}]
  %s1 = inlined_call_operand.<no memory space> [shape: f32[1,1], index: 1, kind: input, shape index: {}]
  %s2 = inlined_call_operand.vmem [shape: bf16[54,512], index: 2, kind: input, shape index: {}]
  %s3 = inlined_call_operand.vmem [shape: bf16[6,512], index: 3, kind: input, shape index: {}]
  %s4 = inlined_call_operand.vmem [shape: f32[1,512], index: 4, kind: output, shape index: {0}]
  %s5 = inlined_call_operand.vmem [shape: bf16[6,512], index: 5, kind: output, shape index: {1}]
  %6 = xla_tuple %s4, %s5
  %s7 = sld [smem:[#allocation0]]
  $region95: #{lram_block_forward.17} parent=0
    _
  %s9 = ssub.s32 1, %s7
  %s10 = scalar_select 0, %s9, %s7
  %v11 = vstv %s1
  %12 = vst [vmem:[#allocation2] sm:$0x1] %v11
  $region1: #{lram_block_forward.17} parent=0
    #allocation3 [shape = 'u8[57344]{0}', space=vmem, size = 0xe000, scoped, tag = 'input window, operand 2']
    loop: start=0, step=1, limit=4
    $region2: #{lram_block_forward.17} parent=1 // loop_pre_header
      _
    $region3: #{lram_block_forward.17} parent=1 // loop_header
      %s14 = sphi 0, %s18
      %p15 = scmp.ge.s32.totalorder %s14, 4
      %s22 = sphi 0, %s22
      %s24 = sphi 0, %s22
      %s25 = sphi 0, %s24
      %s39 = sphi 0, %s25
      %s43 = sphi 0, %s43
      %s45 = sphi 0, %s43
      %s46 = sphi 0, %s45
      %s60 = sphi 0, %s46
      %s66 = sphi 0, %s68
      %s69 = sphi 0, %s66
      %s70 = sphi 0, %s69
      %s86 = sphi 0, %s70
      %s92 = sphi 0, %s94
      %s95 = sphi 0, %s92
      %s96 = sphi 0, %s95
      %s112 = sphi 0, %s96
      %s118 = sphi 0, %s120
      %s121 = sphi 0, %s118
      %s122 = sphi 0, %s121
      %s138 = sphi 0, %s122
      %s144 = sphi 0, %s146
      %s147 = sphi 0, %s144
      %s148 = sphi 0, %s147
      %s164 = sphi 0, %s148
    $region4: #{lram_block_forward.17} parent=1 // loop_header_branch
      %17 = sbr.rel (%p15) target = $region8
    $region5: #{lram_block_forward.17} parent=1 // loop_body
      %s19 = ssub.s32 %s14, 1
      %s20 = ssub.s32 %s14, 2
      %s21 = sadd.s32 %s14, 1
      %s23 = sadd.s32 %s22, 1
      %p26 = scmp.eq.s32.totalorder %s14, 1
      %p27 = scmp.ne.s32.totalorder %s22, %s24
      %p28 = scmp.eq.s32.totalorder %s14, 0
      %p29 = por %p27, %p28
      %p30 = scmp.ne.s32.totalorder %s22, %s24
      %p31 = scmp.eq.s32.totalorder %s19, 1
      %p32 = por %p30, %p31
      %p33 = scmp.ne.s32.totalorder %s24, %s25
      %p34 = scmp.eq.s32.totalorder %s19, 0
      %p35 = por %p33, %p34
      %p36 = scmp.ne.s32.totalorder %s24, %s25
      %p37 = scmp.eq.s32.totalorder %s20, 1
      %p38 = por %p36, %p37
      %p40 = scmp.ne.s32.totalorder %s25, %s39
      %p41 = scmp.eq.s32.totalorder %s20, 0
      %p42 = por %p40, %p41
      %s44 = sadd.s32 %s43, 1
      %p47 = scmp.eq.s32.totalorder %s14, 1
      %p48 = scmp.ne.s32.totalorder %s43, %s45
      %p49 = scmp.eq.s32.totalorder %s14, 0
      %p50 = por %p48, %p49
      %p51 = scmp.ne.s32.totalorder %s43, %s45
      %p52 = scmp.eq.s32.totalorder %s19, 1
      %p53 = por %p51, %p52
      %p54 = scmp.ne.s32.totalorder %s45, %s46
      %p55 = scmp.eq.s32.totalorder %s19, 0
      %p56 = por %p54, %p55
      %p57 = scmp.ne.s32.totalorder %s45, %s46
      %p58 = scmp.eq.s32.totalorder %s20, 1
      %p59 = por %p57, %p58
      %p61 = scmp.ne.s32.totalorder %s46, %s60
      %p62 = scmp.eq.s32.totalorder %s20, 0
      %p63 = por %p61, %p62
      %s64 = ssub.s32 %s14, %s21
      %p65 = scmp.eq.s32.totalorder %s64, 0
      %s67 = sadd.s32 %s66, 1
      %s68 = scalar_select %p65, %s66, %s67
      %p71 = pneg %p65
      %p72 = scmp.eq.s32.totalorder %s14, 1
      %p73 = por %p71, %p72
      %p74 = scmp.ne.s32.totalorder %s66, %s69
      %p75 = scmp.eq.s32.totalorder %s14, 0
      %p76 = por %p74, %p75
      %p77 = scmp.ne.s32.totalorder %s66, %s69
      %p78 = scmp.eq.s32.totalorder %s19, 1
      %p79 = por %p77, %p78
      %p80 = scmp.ne.s32.totalorder %s69, %s70
      %p81 = scmp.eq.s32.totalorder %s19, 0
      %p82 = por %p80, %p81
      %p83 = scmp.ne.s32.totalorder %s69, %s70
      %p84 = scmp.eq.s32.totalorder %s20, 1
      %p85 = por %p83, %p84
      %p87 = scmp.ne.s32.totalorder %s70, %s86
      %p88 = scmp.eq.s32.totalorder %s20, 0
      %p89 = por %p87, %p88
      %s90 = ssub.s32 %s14, %s21
      %p91 = scmp.eq.s32.totalorder %s90, 0
      %s93 = sadd.s32 %s92, 1
      %s94 = scalar_select %p91, %s92, %s93
      %p97 = pneg %p91
      %p98 = scmp.eq.s32.totalorder %s14, 1
      %p99 = por %p97, %p98
      %p100 = scmp.ne.s32.totalorder %s92, %s95
      %p101 = scmp.eq.s32.totalorder %s14, 0
      %p102 = por %p100, %p101
      %p103 = scmp.ne.s32.totalorder %s92, %s95
      %p104 = scmp.eq.s32.totalorder %s19, 1
      %p105 = por %p103, %p104
      %p106 = scmp.ne.s32.totalorder %s95, %s96
      %p107 = scmp.eq.s32.totalorder %s19, 0
      %p108 = por %p106, %p107
      %p109 = scmp.ne.s32.totalorder %s95, %s96
      %p110 = scmp.eq.s32.totalorder %s20, 1
      %p111 = por %p109, %p110
      %p113 = scmp.ne.s32.totalorder %s96, %s112
      %p114 = scmp.eq.s32.totalorder %s20, 0
      %p115 = por %p113, %p114
      %s116 = ssub.s32 %s14, %s21
      %p117 = scmp.eq.s32.totalorder %s116, 0
      %s119 = sadd.s32 %s118, 1
      %s120 = scalar_select %p117, %s118, %s119
      %p123 = pneg %p117
      %p124 = scmp.eq.s32.totalorder %s14, 1
      %p125 = por %p123, %p124
      %p126 = scmp.ne.s32.totalorder %s118, %s121
      %p127 = scmp.eq.s32.totalorder %s14, 0
      %p128 = por %p126, %p127
      %p129 = scmp.ne.s32.totalorder %s118, %s121
      %p130 = scmp.eq.s32.totalorder %s19, 1
      %p131 = por %p129, %p130
      %p132 = scmp.ne.s32.totalorder %s121, %s122
      %p133 = scmp.eq.s32.totalorder %s19, 0
      %p134 = por %p132, %p133
      %p135 = scmp.ne.s32.totalorder %s121, %s122
      %p136 = scmp.eq.s32.totalorder %s20, 1
      %p137 = por %p135, %p136
      %p139 = scmp.ne.s32.totalorder %s122, %s138
      %p140 = scmp.eq.s32.totalorder %s20, 0
      %p141 = por %p139, %p140
      %s142 = ssub.s32 %s14, %s21
      %p143 = scmp.eq.s32.totalorder %s142, 0
      %s145 = sadd.s32 %s144, 1
      %s146 = scalar_select %p143, %s144, %s145
      %p149 = pneg %p143
      %p150 = scmp.eq.s32.totalorder %s14, 1
      %p151 = por %p149, %p150
      %p152 = scmp.ne.s32.totalorder %s144, %s147
      %p153 = scmp.eq.s32.totalorder %s14, 0
      %p154 = por %p152, %p153
      %p155 = scmp.ne.s32.totalorder %s144, %s147
      %p156 = scmp.eq.s32.totalorder %s19, 1
      %p157 = por %p155, %p156
      %p158 = scmp.ne.s32.totalorder %s147, %s148
      %p159 = scmp.eq.s32.totalorder %s19, 0
      %p160 = por %p158, %p159
      %p161 = scmp.ne.s32.totalorder %s147, %s148
      %p162 = scmp.eq.s32.totalorder %s20, 1
      %p163 = por %p161, %p162
      %p165 = scmp.ne.s32.totalorder %s148, %s164
      %p166 = scmp.eq.s32.totalorder %s20, 0
      %p167 = por %p165, %p166
      %p168 = scmp.le.s32.totalorder 1, %s14
      %p169 = scmp.lt.s32.totalorder %s14, 3
      %p170 = pnand %p168, %p169
      %p171 = pneg %p170
      // Predicated region
      $region9: #{lram_block_forward.17} parent=5 // pred_check
        _
      $region10: #{lram_block_forward.17} parent=5 // pred_check_branch
        %173 = sbr.rel (%p170) target = $region12
      $region11: #{lram_block_forward.17} parent=5 // pred_region
        %s174 = ssub.s32 %s14, 1
        // Predicated region
        $region13: #{lram_block_forward.17} parent=11 // pred_check
          %p175 = pneg %p35
        $region14: #{lram_block_forward.17} parent=11 // pred_check_branch
          %177 = sbr.rel (%p175) target = $region16
        $region15: #{lram_block_forward.17} parent=11 // pred_region
          _
        $region16: #{lram_block_forward.17} parent=11 // pred_fallthru
          _
        // Predicated region
        $region17: #{lram_block_forward.17} parent=11 // pred_check
          %p178 = pneg %p56
        $region18: #{lram_block_forward.17} parent=11 // pred_check_branch
          %180 = sbr.rel (%p178) target = $region20
        $region19: #{lram_block_forward.17} parent=11 // pred_region
          _
        $region20: #{lram_block_forward.17} parent=11 // pred_fallthru
          _
      $region12: #{lram_block_forward.17} parent=5 // pred_fallthru
        _
      %p181 = scmp.lt.s32.totalorder %s14, 2
      // Predicated region
      $region21: #{lram_block_forward.17} parent=5 // pred_check
        %p182 = pneg %p181
      $region22: #{lram_block_forward.17} parent=5 // pred_check_branch
        %184 = sbr.rel (%p182) target = $region24
      $region23: #{lram_block_forward.17} parent=5 // pred_region
        // Predicated region
        $region25: #{lram_block_forward.17} parent=23 // pred_check
          %p185 = pneg %p76
        $region26: #{lram_block_forward.17} parent=23 // pred_check_branch
          %187 = sbr.rel (%p185) target = $region28
        $region27: #{lram_block_forward.17} parent=23 // pred_region
          %s188 = sand.u32 %s66, 1
          %s189 = sand.u32 %s66, 1
          %s190 = smul.addr %s189, 56
          %s191 = scalar_lea.vmem [#allocation3], %s190
          %s192 = smul.u32 2, %s14
          %s193 = smul.addr %s192, 4
          %s194 = scalar_lea.vmem %s2, %s193
          // Predicated region
          $region29: #{lram_block_forward.17} parent=27 // pred_check
            _
          $region30: #{lram_block_forward.17} parent=27 // pred_check_branch
            %196 = sbr.rel (0) target = $region32
          $region31: #{lram_block_forward.17} parent=27 // pred_region
            // Predicated region
            $region33: #{lram_block_forward.17} parent=31 // pred_check
              _
            $region34: #{lram_block_forward.17} parent=31 // pred_check_branch
              %198 = sbr.rel (0) target = $region36
            $region35: #{lram_block_forward.17} parent=31 // pred_region
              // Predicated region
              $region48: #{lram_block_forward.17} parent=35 // pred_check
                _
              $region49: #{lram_block_forward.17} parent=35 // pred_check_branch
                %225 = sbr.rel (0) target = $region51
              $region50: #{lram_block_forward.17} parent=35 // pred_region
                loop: start=0, step=1, limit=1
                $region52: #{lram_block_forward.17} parent=50 // loop_pre_header
                  _
                $region53: #{lram_block_forward.17} parent=50 // loop_header
                  %s227 = sphi 0, %s231
                  %p228 = scmp.ge.s32.totalorder %s227, 1
                  %s232 = sphi %s194, %s194
                  %s233 = sphi %s191, %s191
                $region54: #{lram_block_forward.17} parent=50 // loop_header_branch
                  %230 = sbr.rel (%p228) target = $region58
                $region55: #{lram_block_forward.17} parent=50 // loop_body
                  %v234 = vld [vmem:[%s232] sm:$0xff]
                  %235 = vst [vmem:[%s233] sm:$0xff] %v234
                  %v236 = vld [vmem:[%s232 + $0x10] sm:$0xff]
                  %237 = vst [vmem:[%s233 + $0x8] sm:$0xff] %v236
                  %v238 = vld [vmem:[%s232 + $0x20] sm:$0xff]
                  %239 = vst [vmem:[%s233 + $0x10] sm:$0xff] %v238
                  %v240 = vld [vmem:[%s232 + $0x30] sm:$0xff]
                  %241 = vst [vmem:[%s233 + $0x18] sm:$0xff] %v240
                  %v242 = vld [vmem:[%s232 + $0x40] sm:$0xff]
                  %243 = vst [vmem:[%s233 + $0x20] sm:$0xff] %v242
                  %v244 = vld [vmem:[%s232 + $0x50] sm:$0xff]
                  %245 = vst [vmem:[%s233 + $0x28] sm:$0xff] %v244
                  %v246 = vld [vmem:[%s232 + $0x60] sm:$0xff]
                  %247 = vst [vmem:[%s233 + $0x30] sm:$0xff] %v246
                $region56: #{lram_block_forward.17} parent=50 // loop_footer
                  %s231 = sadd.s32 1, %s227
                $region57: #{lram_block_forward.17} parent=50 // loop_footer_branch
                  %226 = sbr.rel target = $region53
                $region58: #{lram_block_forward.17} parent=50 // loop_exit
                  _
              $region51: #{lram_block_forward.17} parent=35 // pred_fallthru
                _
              // Predicated region
              $region59: #{lram_block_forward.17} parent=35 // pred_check
                _
              $region60: #{lram_block_forward.17} parent=35 // pred_check_branch
                %249 = sbr.rel target = $region62
              $region61: #{lram_block_forward.17} parent=35 // pred_region
                _
              $region62: #{lram_block_forward.17} parent=35 // pred_fallthru
                _
            $region36: #{lram_block_forward.17} parent=31 // pred_fallthru
              _
            // Predicated region
            $region37: #{lram_block_forward.17} parent=31 // pred_check
              _
            $region38: #{lram_block_forward.17} parent=31 // pred_check_branch
              %200 = sbr.rel target = $region40
            $region39: #{lram_block_forward.17} parent=31 // pred_region
              loop: start=0, step=1, limit=1
              $region41: #{lram_block_forward.17} parent=39 // loop_pre_header
                _
              $region42: #{lram_block_forward.17} parent=39 // loop_header
                %s203 = sphi 0, %s207
                %p204 = scmp.ge.s32.totalorder %s203, 1
                %s208 = sphi %s194, %s194
                %s209 = sphi %s191, %s191
              $region43: #{lram_block_forward.17} parent=39 // loop_header_branch
                %206 = sbr.rel (%p204) target = $region47
              $region44: #{lram_block_forward.17} parent=39 // loop_body
                %v210 = vld [vmem:[%s208] sm:$0xff]
                %211 = vst [vmem:[%s209] sm:$0xff] %v210
                %v212 = vld [vmem:[%s208 + $0x10] sm:$0xff]
                %213 = vst [vmem:[%s209 + $0x8] sm:$0xff] %v212
                %v214 = vld [vmem:[%s208 + $0x20] sm:$0xff]
                %215 = vst [vmem:[%s209 + $0x10] sm:$0xff] %v214
                %v216 = vld [vmem:[%s208 + $0x30] sm:$0xff]
                %217 = vst [vmem:[%s209 + $0x18] sm:$0xff] %v216
                %v218 = vld [vmem:[%s208 + $0x40] sm:$0xff]
                %219 = vst [vmem:[%s209 + $0x20] sm:$0xff] %v218
                %v220 = vld [vmem:[%s208 + $0x50] sm:$0xff]
                %221 = vst [vmem:[%s209 + $0x28] sm:$0xff] %v220
                %v222 = vld [vmem:[%s208 + $0x60] sm:$0xff]
                %223 = vst [vmem:[%s209 + $0x30] sm:$0xff] %v222
              $region45: #{lram_block_forward.17} parent=39 // loop_footer
                %s207 = sadd.s32 1, %s203
              $region46: #{lram_block_forward.17} parent=39 // loop_footer_branch
                %202 = sbr.rel target = $region42
              $region47: #{lram_block_forward.17} parent=39 // loop_exit
                _
            $region40: #{lram_block_forward.17} parent=31 // pred_fallthru
              _
          $region32: #{lram_block_forward.17} parent=27 // pred_fallthru
            _
          %250 = vnop
        $region28: #{lram_block_forward.17} parent=23 // pred_fallthru
          _
        // Predicated region
        $region63: #{lram_block_forward.17} parent=23 // pred_check
          %p251 = pneg %p102
        $region64: #{lram_block_forward.17} parent=23 // pred_check_branch
          %253 = sbr.rel (%p251) target = $region66
        $region65: #{lram_block_forward.17} parent=23 // pred_region
          %s254 = smul.u32 2, %s14
          %p255 = scmp.lt.s32.totalorder %s254, 3
          %s256 = scalar_select %p255, %s254, 3
          %s257 = smul.addr %s256, 4
          %s258 = scalar_lea.vmem %s3, %s257
          %s259 = smul.u32 2, %s14
        $region66: #{lram_block_forward.17} parent=23 // pred_fallthru
          _
      $region24: #{lram_block_forward.17} parent=5 // pred_fallthru
        _
      %p260 = scmp.le.s32.totalorder 1, %s14
      %p261 = scmp.lt.s32.totalorder %s14, 3
      %p262 = pnand %p260, %p261
      %p263 = pneg %p262
      // Predicated region
      $region67: #{lram_block_forward.17} parent=5 // pred_check
        _
      $region68: #{lram_block_forward.17} parent=5 // pred_check_branch
        %265 = sbr.rel (%p262) target = $region70
      $region69: #{lram_block_forward.17} parent=5 // pred_region
        %s266 = ssub.s32 %s14, 1
        %s267 = sand.u32 %s69, 1
        %s268 = sand.u32 %s69, 1
        %s269 = smul.addr %s268, 56
        %s270 = scalar_lea.vmem [#allocation3], %s269
        // Predicated region
        $region71: #{lram_block_forward.17} parent=69 // pred_check
          %p271 = pneg %p82
        $region72: #{lram_block_forward.17} parent=69 // pred_check_branch
          %273 = sbr.rel (%p271) target = $region74
        $region73: #{lram_block_forward.17} parent=69 // pred_region
          _
        $region74: #{lram_block_forward.17} parent=69 // pred_fallthru
          _
        %p274 = pneg %p35
        %p275 = pneg %p32
        %p276 = pneg %p56
        %p277 = pneg %p53
        %s278 = sand.u32 %s69, 1
        %s279 = sand.u32 %s69, 1
        %s280 = smul.addr %s279, 56
        %s281 = scalar_lea.vmem [#allocation3], %s280
        %p282 = pneg %p82
        %p283 = pneg %p79
        %s284 = smul.u32 2, %s19
        %p285 = scmp.lt.s32.totalorder %s284, 3
        %s286 = scalar_select %p285, %s284, 3
        %s287 = smul.addr %s286, 4
        %s288 = scalar_lea.vmem %s3, %s287
        %p289 = pneg %p108
        %p290 = pneg %p105
        %p291 = pneg %p134
        %p292 = pneg %p131
        %s293 = smul.u32 2, %s19
        %p294 = scmp.lt.s32.totalorder %s293, 3
        %s295 = scalar_select %p294, %s293, 3
        %s296 = scalar_lea.vmem %s4, %s295
        %p297 = pneg %p160
        %p298 = pneg %p157
        %s299 = smul.u32 2, %s19
        %p300 = scmp.lt.s32.totalorder %s299, 3
        %s301 = scalar_select %p300, %s299, 3
        %s302 = smul.addr %s301, 4
        %s303 = scalar_lea.vmem %s5, %s302
        %s304 = smul.u32 2, %s19
        %s305 = smul.u32 2, %s19
        %p306 = scmp.lt.s32.totalorder %s305, 3
        %s307 = scalar_select %p306, %s305, 3
        %s308 = smul.addr %s307, 4
        %s309 = scalar_lea.vmem %s3, %s308
        %s310 = smul.u32 2, %s19
        %s311 = smul.u32 2, %s19
        %p312 = scmp.lt.s32.totalorder %s311, 3
        %s313 = scalar_select %p312, %s311, 3
        %s314 = scalar_lea.vmem %s4, %s313
        %s315 = smul.u32 2, %s19
        %s316 = smul.u32 2, %s19
        %p317 = scmp.lt.s32.totalorder %s316, 3
        %s318 = scalar_select %p317, %s316, 3
        %s319 = smul.addr %s318, 4
        %s320 = scalar_lea.vmem %s5, %s319
        %s321 = smul.u32 2, %s19
        %v323 = vld [vmem:[%s0] sm:$0x1]
        %v324 = vld [vmem:[%s270] sm:$0xff]
        %v325 = vld [vmem:[%s270 + $0x8] sm:$0xff]
        %v326 = vld [vmem:[%s270 + $0x10] sm:$0xff]
        %v327 = vld [vmem:[%s270 + $0x18] sm:$0xff]
        %v328 = vld [vmem:[%s270 + $0x20] sm:$0xff]
        %v329 = vld [vmem:[%s270 + $0x28] sm:$0xff]
        %v330 = vld [vmem:[%s270 + $0x30] sm:$0x77]
        %v331 = vld [vmem:[#allocation2] sm:$0x1]
        %333 = vset.pattern.permute.xlu0 0
        %334 = vperm.xlu0 %333, %v331
        %v335 = vpop.permute.xlu0 %334
        %v337 = vlaneseq
        %v338 = vshrl.u32 %v337, 7
        %v339 = vsub.s32 0, %v338
        %v340 = vrot.slane %v335, %v339
        %v348 = vunpack.c.l.b16 %v324
        %v349 = vunpack.c.h.b16 %v324
        %v350 = vunpack.c.l.b16 %v325
        %v351 = vunpack.c.h.b16 %v325
        %v352 = vunpack.c.l.b16 %v326
        %v353 = vunpack.c.h.b16 %v326
        %v354 = vunpack.c.l.b16 %v327
        %v355 = vunpack.c.h.b16 %v327
        %v356 = vunpack.c.l.b16 %v328
        %v357 = vunpack.c.h.b16 %v328
        %v358 = vunpack.c.l.b16 %v329
        %v359 = vunpack.c.h.b16 %v329
        %v360 = vunpack.c.l.b16 %v330
        %v361 = vunpack.c.h.b16 %v330
        %v362 = vpack.c.b16 %v350, %v348
        %v363 = vpack.c.b16 %v351, %v349
        %v364 = vpack.c.b16 %v354, %v352
        %v365 = vpack.c.b16 %v355, %v353
        %v366 = vpack.c.b16 %v358, %v356
        %v367 = vpack.c.b16 %v359, %v357
        %v368 = vpack.c.b16 %v360, %v360
        %v369 = vpack.c.b16 %v361, %v361
        %vm376 = vcmask 441344
        %v378 = vsel %vm376, %v323, 0
        %vm380 = vcmask 1042432
        %v382 = vsel %vm380, %v368, 0
        %v385 = vsel %vm380, %v369, 0
        %387 = vmatprep.subr.bf16.mxu0 %v363
        %388 = vmatpush1.bf16.msra.mxu0 %v362
        %389 = vmatprep.subr.bf16.mxu0 %v365
        %390 = vmatpush1.bf16.msra.mxu0 %v364
        %391 = vmatprep.subr.bf16.mxu0 %v367
        %392 = vmatpush1.bf16.msra.mxu0 %v366
        %393 = vmatprep.subr.bf16.mxu0 %v385
        %394 = vmatpush1.bf16.msra.mxu0 %v382
        %395 = vmatprep.subr.bf16.mxu0 0
        %396 = vmatpush1.bf16.msra.mxu0 0
        %397 = vmatprep.subr.bf16.mxu0 0
        %398 = vmatpush1.bf16.msra.mxu0 0
        %399 = vmatprep.subr.bf16.mxu0 0
        %400 = vmatpush1.bf16.msra.mxu0 0
        %401 = vmatprep.subr.bf16.mxu0 0
        %402 = vmatpush1.bf16.msra.mxu0 0
        %403 = vmatprep.subr.bf16.mxu0 0
        %404 = vmatpush1.bf16.msra.mxu0 0
        %405 = vmatprep.subr.bf16.mxu0 0
        %406 = vmatpush1.bf16.msra.mxu0 0
        %407 = vmatprep.subr.bf16.mxu0 0
        %408 = vmatpush1.bf16.msra.mxu0 0
        %409 = vmatprep.subr.bf16.mxu0 0
        %410 = vmatpush1.bf16.msra.mxu0 0
        %411 = vmatprep.subr.bf16.mxu0 0
        %412 = vmatpush1.bf16.msra.mxu0 0
        %413 = vmatprep.subr.bf16.mxu0 0
        %414 = vmatpush1.bf16.msra.mxu0 0
        %415 = vmatprep.subr.bf16.mxu0 0
        %416 = vmatpush1.bf16.msra.mxu0 0
        %417 = vmatprep.subr.bf16.mxu0 0
        %418 = vmatpush1.bf16.msra.mxu0 0
        %419 = vmatprep.mubr.bf16.mxu0 0
        %420 = vmatmul.mubr.bf16.gmra.mrb[0].mxu0 %v378
        %v421 = vpop.f32.mrb[0].mxu0
        %v422 = vadd.f32 %v340, %v421
        %v423 = vpop.f32.mrb[0].mxu0
        %v424 = vadd.f32 %v340, %v423
        %v425 = vpop.f32.mrb[0].mxu0
        %v426 = vpop.f32.mrb[0].mxu0
        %427 = vdwg.mxu0
        %v430 = vcombine.low %v422, %v424
        %v432 = vunpack.c.l.s4 1966171168
        %v433 = vunpack.c.0.s8 %v432
        %v434 = vlaneseq
        %v435 = vshrl.u32 %v434, 7
        %v436 = vsub.s32 %v433, %v435
        %v437 = vrot.slane %v430, %v436
        %v439 = vunpack.c.l.s4 1966171168
        %v440 = vunpack.c.0.s8 %v439
        %v441 = vlaneseq
        %v442 = vshrl.u32 %v441, 7
        %v443 = vsub.s32 %v440, %v442
        %v444 = vrot.slane %v437, %v443
        %v446 = vlaneseq
        %vm447 = vcmp.ge.s32.totalorder %v446, 0
        %vm448 = vcmp.lt.s32.totalorder %v446, 256
        %vm449 = vmand %vm447, %vm448
        %450 = vst.msk [vmem:[%s314] sm:$0x3] %vm449, %v444
        %v451 = vld [vmem:[%s309] sm:$0x77]
        %v452 = vunpack.c.l.bf16 %v451
        %v453 = vunpack.c.h.bf16 %v451
        %v454 = vlaneseq
        %v455 = vshrl.u32 %v454, 7
        %v456 = vsub.s32 0, %v455
        %v457 = vrot.slane %v422, %v456
        %v458 = vlaneseq
        %v459 = vshrl.u32 %v458, 7
        %v460 = vsub.s32 0, %v459
        %v461 = vrot.slane %v424, %v460
        %v462 = vmul.f32 %v457, %v452
        %v463 = vmul.f32 %v461, %v453
        %v464 = vpack.c.bf16 %v462, %v462
        %v465 = vpack.c.bf16 %v463, %v463
        %v468 = vunpack.c.l.b16 %v464
        %v469 = vunpack.c.l.b16 %v465
        %v470 = vpack.c.b16 %v469, %v468
        %472 = vst [vmem:[%s320] sm:$0x77] %v470
        %s473 = smul.u32 2, %s19
        %p474 = scmp.lt.s32.totalorder %s473, 3
        %s475 = scalar_select %p474, %s473, 3
        %s476 = scalar_lea.vmem %s4, %s475
        %s477 = smul.u32 2, %s19
        %p478 = scmp.lt.s32.totalorder %s477, 3
        %s479 = scalar_select %p478, %s477, 3
        %s480 = smul.addr %s479, 4
        %s481 = scalar_lea.vmem %s5, %s480
        // Predicated region
        $region75: #{lram_block_forward.17} parent=69 // pred_check
          %p482 = pneg %p131
        $region76: #{lram_block_forward.17} parent=69 // pred_check_branch
          %484 = sbr.rel (%p482) target = $region78
        $region77: #{lram_block_forward.17} parent=69 // pred_region
          %s485 = smul.u32 2, %s19
        $region78: #{lram_block_forward.17} parent=69 // pred_fallthru
          _
        // Predicated region
        $region79: #{lram_block_forward.17} parent=69 // pred_check
          %p486 = pneg %p157
        $region80: #{lram_block_forward.17} parent=69 // pred_check_branch
          %488 = sbr.rel (%p486) target = $region82
        $region81: #{lram_block_forward.17} parent=69 // pred_region
          %s489 = smul.u32 2, %s19
        $region82: #{lram_block_forward.17} parent=69 // pred_fallthru
          _
      $region70: #{lram_block_forward.17} parent=5 // pred_fallthru
        _
      %p490 = scmp.le.s32.totalorder 2, %s14
      // Predicated region
      $region83: #{lram_block_forward.17} parent=5 // pred_check
        %p491 = pneg %p490
      $region84: #{lram_block_forward.17} parent=5 // pred_check_branch
        %493 = sbr.rel (%p491) target = $region86
      $region85: #{lram_block_forward.17} parent=5 // pred_region
        %s494 = ssub.s32 %s14, 2
        // Predicated region
        $region87: #{lram_block_forward.17} parent=85 // pred_check
          %p495 = pneg %p137
        $region88: #{lram_block_forward.17} parent=85 // pred_check_branch
          %497 = sbr.rel (%p495) target = $region90
        $region89: #{lram_block_forward.17} parent=85 // pred_region
          %s498 = smul.u32 2, %s20
          %p499 = scmp.lt.s32.totalorder %s498, 3
          %s500 = scalar_select %p499, %s498, 3
          %s501 = scalar_lea.vmem %s4, %s500
        $region90: #{lram_block_forward.17} parent=85 // pred_fallthru
          _
        // Predicated region
        $region91: #{lram_block_forward.17} parent=85 // pred_check
          %p502 = pneg %p163
        $region92: #{lram_block_forward.17} parent=85 // pred_check_branch
          %504 = sbr.rel (%p502) target = $region94
        $region93: #{lram_block_forward.17} parent=85 // pred_region
          %s505 = smul.u32 2, %s20
          %p506 = scmp.lt.s32.totalorder %s505, 3
          %s507 = scalar_select %p506, %s505, 3
          %s508 = smul.addr %s507, 4
          %s509 = scalar_lea.vmem %s5, %s508
        $region94: #{lram_block_forward.17} parent=85 // pred_fallthru
          _
      $region86: #{lram_block_forward.17} parent=5 // pred_fallthru
        _
    $region6: #{lram_block_forward.17} parent=1 // loop_footer
      %s18 = sadd.s32 1, %s14
    $region7: #{lram_block_forward.17} parent=1 // loop_footer_branch
      %13 = sbr.rel target = $region3
    $region8: #{lram_block_forward.17} parent=1 // loop_exit
      _

// kernel: lram_block_forward.18
$region0: #{lram_block_forward.18}
  #allocation0 [shape = 'u32[]', space=smem, size = 0x4, offset = 0x4, fixed_abs, tag = 'smem constant byte address 0x4 - core index']
  #allocation1 [shape = 'u32[144,128]{1,0:T(1,128)}', space=vmem, size = 0x12000, scoped, tag = 'internal scratch']
  %s0 = inlined_call_operand.vmem [shape: bf16[4,54], index: 0, kind: input, shape index: {}]
  %s1 = inlined_call_operand.vmem [shape: bf16[54,512], index: 1, kind: input, shape index: {}]
  %s2 = inlined_call_operand.vmem [shape: bf16[4,512], index: 2, kind: output, shape index: {0}]
  %s3 = inlined_call_operand.vmem [shape: f32[2,4,1], index: 3, kind: output, shape index: {1}]
  %s4 = inlined_call_operand.vmem [shape: f32[2,4,1], index: 4, kind: output, shape index: {2}]
  %5 = xla_tuple %s2, %s3, %s4
  %s6 = sld [smem:[#allocation0]]
  $region95: #{lram_block_forward.18} parent=0
    _
  %s8 = ssub.s32 1, %s6
  %s9 = scalar_select 0, %s8, %s6
  $region1: #{lram_block_forward.18} parent=0
    #allocation2 [shape = 'u8[57344]{0}', space=vmem, size = 0xe000, scoped, tag = 'input window, operand 1']
    loop: start=0, step=1, limit=4
    $region2: #{lram_block_forward.18} parent=1 // loop_pre_header
      _
    $region3: #{lram_block_forward.18} parent=1 // loop_header
      %s11 = sphi 0, %s15
      %p12 = scmp.ge.s32.totalorder %s11, 4
      %s19 = sphi 0, %s19
      %s21 = sphi 0, %s19
      %s22 = sphi 0, %s21
      %s36 = sphi 0, %s22
      %s42 = sphi 0, %s44
      %s45 = sphi 0, %s42
      %s46 = sphi 0, %s45
      %s62 = sphi 0, %s46
      %s68 = sphi 0, %s70
      %s71 = sphi 0, %s68
      %s72 = sphi 0, %s71
      %s88 = sphi 0, %s72
      %s94 = sphi 0, %s96
      %s97 = sphi 0, %s94
      %s98 = sphi 0, %s97
      %s114 = sphi 0, %s98
      %s120 = sphi 0, %s122
      %s123 = sphi 0, %s120
      %s124 = sphi 0, %s123
      %s140 = sphi 0, %s124
    $region4: #{lram_block_forward.18} parent=1 // loop_header_branch
      %14 = sbr.rel (%p12) target = $region8
    $region5: #{lram_block_forward.18} parent=1 // loop_body
      %s16 = ssub.s32 %s11, 1
      %s17 = ssub.s32 %s11, 2
      %s18 = sadd.s32 %s11, 1
      %s20 = sadd.s32 %s19, 1
      %p23 = scmp.eq.s32.totalorder %s11, 1
      %p24 = scmp.ne.s32.totalorder %s19, %s21
      %p25 = scmp.eq.s32.totalorder %s11, 0
      %p26 = por %p24, %p25
      %p27 = scmp.ne.s32.totalorder %s19, %s21
      %p28 = scmp.eq.s32.totalorder %s16, 1
      %p29 = por %p27, %p28
      %p30 = scmp.ne.s32.totalorder %s21, %s22
      %p31 = scmp.eq.s32.totalorder %s16, 0
      %p32 = por %p30, %p31
      %p33 = scmp.ne.s32.totalorder %s21, %s22
      %p34 = scmp.eq.s32.totalorder %s17, 1
      %p35 = por %p33, %p34
      %p37 = scmp.ne.s32.totalorder %s22, %s36
      %p38 = scmp.eq.s32.totalorder %s17, 0
      %p39 = por %p37, %p38
      %s40 = ssub.s32 %s11, %s18
      %p41 = scmp.eq.s32.totalorder %s40, 0
      %s43 = sadd.s32 %s42, 1
      %s44 = scalar_select %p41, %s42, %s43
      %p47 = pneg %p41
      %p48 = scmp.eq.s32.totalorder %s11, 1
      %p49 = por %p47, %p48
      %p50 = scmp.ne.s32.totalorder %s42, %s45
      %p51 = scmp.eq.s32.totalorder %s11, 0
      %p52 = por %p50, %p51
      %p53 = scmp.ne.s32.totalorder %s42, %s45
      %p54 = scmp.eq.s32.totalorder %s16, 1
      %p55 = por %p53, %p54
      %p56 = scmp.ne.s32.totalorder %s45, %s46
      %p57 = scmp.eq.s32.totalorder %s16, 0
      %p58 = por %p56, %p57
      %p59 = scmp.ne.s32.totalorder %s45, %s46
      %p60 = scmp.eq.s32.totalorder %s17, 1
      %p61 = por %p59, %p60
      %p63 = scmp.ne.s32.totalorder %s46, %s62
      %p64 = scmp.eq.s32.totalorder %s17, 0
      %p65 = por %p63, %p64
      %s66 = ssub.s32 %s11, %s18
      %p67 = scmp.eq.s32.totalorder %s66, 0
      %s69 = sadd.s32 %s68, 1
      %s70 = scalar_select %p67, %s68, %s69
      %p73 = pneg %p67
      %p74 = scmp.eq.s32.totalorder %s11, 1
      %p75 = por %p73, %p74
      %p76 = scmp.ne.s32.totalorder %s68, %s71
      %p77 = scmp.eq.s32.totalorder %s11, 0
      %p78 = por %p76, %p77
      %p79 = scmp.ne.s32.totalorder %s68, %s71
      %p80 = scmp.eq.s32.totalorder %s16, 1
      %p81 = por %p79, %p80
      %p82 = scmp.ne.s32.totalorder %s71, %s72
      %p83 = scmp.eq.s32.totalorder %s16, 0
      %p84 = por %p82, %p83
      %p85 = scmp.ne.s32.totalorder %s71, %s72
      %p86 = scmp.eq.s32.totalorder %s17, 1
      %p87 = por %p85, %p86
      %p89 = scmp.ne.s32.totalorder %s72, %s88
      %p90 = scmp.eq.s32.totalorder %s17, 0
      %p91 = por %p89, %p90
      %s92 = ssub.s32 %s11, %s18
      %p93 = scmp.eq.s32.totalorder %s92, 0
      %s95 = sadd.s32 %s94, 1
      %s96 = scalar_select %p93, %s94, %s95
      %p99 = pneg %p93
      %p100 = scmp.eq.s32.totalorder %s11, 1
      %p101 = por %p99, %p100
      %p102 = scmp.ne.s32.totalorder %s94, %s97
      %p103 = scmp.eq.s32.totalorder %s11, 0
      %p104 = por %p102, %p103
      %p105 = scmp.ne.s32.totalorder %s94, %s97
      %p106 = scmp.eq.s32.totalorder %s16, 1
      %p107 = por %p105, %p106
      %p108 = scmp.ne.s32.totalorder %s97, %s98
      %p109 = scmp.eq.s32.totalorder %s16, 0
      %p110 = por %p108, %p109
      %p111 = scmp.ne.s32.totalorder %s97, %s98
      %p112 = scmp.eq.s32.totalorder %s17, 1
      %p113 = por %p111, %p112
      %p115 = scmp.ne.s32.totalorder %s98, %s114
      %p116 = scmp.eq.s32.totalorder %s17, 0
      %p117 = por %p115, %p116
      %s118 = ssub.s32 %s11, %s18
      %p119 = scmp.eq.s32.totalorder %s118, 0
      %s121 = sadd.s32 %s120, 1
      %s122 = scalar_select %p119, %s120, %s121
      %p125 = pneg %p119
      %p126 = scmp.eq.s32.totalorder %s11, 1
      %p127 = por %p125, %p126
      %p128 = scmp.ne.s32.totalorder %s120, %s123
      %p129 = scmp.eq.s32.totalorder %s11, 0
      %p130 = por %p128, %p129
      %p131 = scmp.ne.s32.totalorder %s120, %s123
      %p132 = scmp.eq.s32.totalorder %s16, 1
      %p133 = por %p131, %p132
      %p134 = scmp.ne.s32.totalorder %s123, %s124
      %p135 = scmp.eq.s32.totalorder %s16, 0
      %p136 = por %p134, %p135
      %p137 = scmp.ne.s32.totalorder %s123, %s124
      %p138 = scmp.eq.s32.totalorder %s17, 1
      %p139 = por %p137, %p138
      %p141 = scmp.ne.s32.totalorder %s124, %s140
      %p142 = scmp.eq.s32.totalorder %s17, 0
      %p143 = por %p141, %p142
      %p144 = scmp.le.s32.totalorder 1, %s11
      %p145 = scmp.lt.s32.totalorder %s11, 3
      %p146 = pnand %p144, %p145
      %p147 = pneg %p146
      // Predicated region
      $region9: #{lram_block_forward.18} parent=5 // pred_check
        _
      $region10: #{lram_block_forward.18} parent=5 // pred_check_branch
        %149 = sbr.rel (%p146) target = $region12
      $region11: #{lram_block_forward.18} parent=5 // pred_region
        %s150 = ssub.s32 %s11, 1
        // Predicated region
        $region13: #{lram_block_forward.18} parent=11 // pred_check
          %p151 = pneg %p32
        $region14: #{lram_block_forward.18} parent=11 // pred_check_branch
          %153 = sbr.rel (%p151) target = $region16
        $region15: #{lram_block_forward.18} parent=11 // pred_region
          _
        $region16: #{lram_block_forward.18} parent=11 // pred_fallthru
          _
      $region12: #{lram_block_forward.18} parent=5 // pred_fallthru
        _
      %p154 = scmp.lt.s32.totalorder %s11, 2
      // Predicated region
      $region17: #{lram_block_forward.18} parent=5 // pred_check
        %p155 = pneg %p154
      $region18: #{lram_block_forward.18} parent=5 // pred_check_branch
        %157 = sbr.rel (%p155) target = $region20
      $region19: #{lram_block_forward.18} parent=5 // pred_region
        // Predicated region
        $region21: #{lram_block_forward.18} parent=19 // pred_check
          %p158 = pneg %p52
        $region22: #{lram_block_forward.18} parent=19 // pred_check_branch
          %160 = sbr.rel (%p158) target = $region24
        $region23: #{lram_block_forward.18} parent=19 // pred_region
          %s161 = sand.u32 %s42, 1
          %s162 = sand.u32 %s42, 1
          %s163 = smul.addr %s162, 56
          %s164 = scalar_lea.vmem [#allocation2], %s163
          %s165 = smul.u32 2, %s11
          %s166 = smul.addr %s165, 4
          %s167 = scalar_lea.vmem %s1, %s166
          // Predicated region
          $region25: #{lram_block_forward.18} parent=23 // pred_check
            _
          $region26: #{lram_block_forward.18} parent=23 // pred_check_branch
            %169 = sbr.rel (0) target = $region28
          $region27: #{lram_block_forward.18} parent=23 // pred_region
            // Predicated region
            $region29: #{lram_block_forward.18} parent=27 // pred_check
              _
            $region30: #{lram_block_forward.18} parent=27 // pred_check_branch
              %171 = sbr.rel (0) target = $region32
            $region31: #{lram_block_forward.18} parent=27 // pred_region
              // Predicated region
              $region44: #{lram_block_forward.18} parent=31 // pred_check
                _
              $region45: #{lram_block_forward.18} parent=31 // pred_check_branch
                %198 = sbr.rel (0) target = $region47
              $region46: #{lram_block_forward.18} parent=31 // pred_region
                loop: start=0, step=1, limit=1
                $region48: #{lram_block_forward.18} parent=46 // loop_pre_header
                  _
                $region49: #{lram_block_forward.18} parent=46 // loop_header
                  %s200 = sphi 0, %s204
                  %p201 = scmp.ge.s32.totalorder %s200, 1
                  %s205 = sphi %s167, %s167
                  %s206 = sphi %s164, %s164
                $region50: #{lram_block_forward.18} parent=46 // loop_header_branch
                  %203 = sbr.rel (%p201) target = $region54
                $region51: #{lram_block_forward.18} parent=46 // loop_body
                  %v207 = vld [vmem:[%s205] sm:$0xff]
                  %208 = vst [vmem:[%s206] sm:$0xff] %v207
                  %v209 = vld [vmem:[%s205 + $0x10] sm:$0xff]
                  %210 = vst [vmem:[%s206 + $0x8] sm:$0xff] %v209
                  %v211 = vld [vmem:[%s205 + $0x20] sm:$0xff]
                  %212 = vst [vmem:[%s206 + $0x10] sm:$0xff] %v211
                  %v213 = vld [vmem:[%s205 + $0x30] sm:$0xff]
                  %214 = vst [vmem:[%s206 + $0x18] sm:$0xff] %v213
                  %v215 = vld [vmem:[%s205 + $0x40] sm:$0xff]
                  %216 = vst [vmem:[%s206 + $0x20] sm:$0xff] %v215
                  %v217 = vld [vmem:[%s205 + $0x50] sm:$0xff]
                  %218 = vst [vmem:[%s206 + $0x28] sm:$0xff] %v217
                  %v219 = vld [vmem:[%s205 + $0x60] sm:$0xff]
                  %220 = vst [vmem:[%s206 + $0x30] sm:$0xff] %v219
                $region52: #{lram_block_forward.18} parent=46 // loop_footer
                  %s204 = sadd.s32 1, %s200
                $region53: #{lram_block_forward.18} parent=46 // loop_footer_branch
                  %199 = sbr.rel target = $region49
                $region54: #{lram_block_forward.18} parent=46 // loop_exit
                  _
              $region47: #{lram_block_forward.18} parent=31 // pred_fallthru
                _
              // Predicated region
              $region55: #{lram_block_forward.18} parent=31 // pred_check
                _
              $region56: #{lram_block_forward.18} parent=31 // pred_check_branch
                %222 = sbr.rel target = $region58
              $region57: #{lram_block_forward.18} parent=31 // pred_region
                _
              $region58: #{lram_block_forward.18} parent=31 // pred_fallthru
                _
            $region32: #{lram_block_forward.18} parent=27 // pred_fallthru
              _
            // Predicated region
            $region33: #{lram_block_forward.18} parent=27 // pred_check
              _
            $region34: #{lram_block_forward.18} parent=27 // pred_check_branch
              %173 = sbr.rel target = $region36
            $region35: #{lram_block_forward.18} parent=27 // pred_region
              loop: start=0, step=1, limit=1
              $region37: #{lram_block_forward.18} parent=35 // loop_pre_header
                _
              $region38: #{lram_block_forward.18} parent=35 // loop_header
                %s176 = sphi 0, %s180
                %p177 = scmp.ge.s32.totalorder %s176, 1
                %s181 = sphi %s167, %s167
                %s182 = sphi %s164, %s164
              $region39: #{lram_block_forward.18} parent=35 // loop_header_branch
                %179 = sbr.rel (%p177) target = $region43
              $region40: #{lram_block_forward.18} parent=35 // loop_body
                %v183 = vld [vmem:[%s181] sm:$0xff]
                %184 = vst [vmem:[%s182] sm:$0xff] %v183
                %v185 = vld [vmem:[%s181 + $0x10] sm:$0xff]
                %186 = vst [vmem:[%s182 + $0x8] sm:$0xff] %v185
                %v187 = vld [vmem:[%s181 + $0x20] sm:$0xff]
                %188 = vst [vmem:[%s182 + $0x10] sm:$0xff] %v187
                %v189 = vld [vmem:[%s181 + $0x30] sm:$0xff]
                %190 = vst [vmem:[%s182 + $0x18] sm:$0xff] %v189
                %v191 = vld [vmem:[%s181 + $0x40] sm:$0xff]
                %192 = vst [vmem:[%s182 + $0x20] sm:$0xff] %v191
                %v193 = vld [vmem:[%s181 + $0x50] sm:$0xff]
                %194 = vst [vmem:[%s182 + $0x28] sm:$0xff] %v193
                %v195 = vld [vmem:[%s181 + $0x60] sm:$0xff]
                %196 = vst [vmem:[%s182 + $0x30] sm:$0xff] %v195
              $region41: #{lram_block_forward.18} parent=35 // loop_footer
                %s180 = sadd.s32 1, %s176
              $region42: #{lram_block_forward.18} parent=35 // loop_footer_branch
                %175 = sbr.rel target = $region38
              $region43: #{lram_block_forward.18} parent=35 // loop_exit
                _
            $region36: #{lram_block_forward.18} parent=27 // pred_fallthru
              _
          $region28: #{lram_block_forward.18} parent=23 // pred_fallthru
            _
          %223 = vnop
        $region24: #{lram_block_forward.18} parent=19 // pred_fallthru
          _
      $region20: #{lram_block_forward.18} parent=5 // pred_fallthru
        _
      %p224 = scmp.le.s32.totalorder 1, %s11
      %p225 = scmp.lt.s32.totalorder %s11, 3
      %p226 = pnand %p224, %p225
      %p227 = pneg %p226
      // Predicated region
      $region59: #{lram_block_forward.18} parent=5 // pred_check
        _
      $region60: #{lram_block_forward.18} parent=5 // pred_check_branch
        %229 = sbr.rel (%p226) target = $region62
      $region61: #{lram_block_forward.18} parent=5 // pred_region
        %s230 = ssub.s32 %s11, 1
        %s231 = sand.u32 %s45, 1
        %s232 = sand.u32 %s45, 1
        %s233 = smul.addr %s232, 56
        %s234 = scalar_lea.vmem [#allocation2], %s233
        // Predicated region
        $region63: #{lram_block_forward.18} parent=61 // pred_check
          %p235 = pneg %p58
        $region64: #{lram_block_forward.18} parent=61 // pred_check_branch
          %237 = sbr.rel (%p235) target = $region66
        $region65: #{lram_block_forward.18} parent=61 // pred_region
          _
        $region66: #{lram_block_forward.18} parent=61 // pred_fallthru
          _
        %p238 = pneg %p32
        %p239 = pneg %p29
        %s240 = sand.u32 %s45, 1
        %s241 = sand.u32 %s45, 1
        %s242 = smul.addr %s241, 56
        %s243 = scalar_lea.vmem [#allocation2], %s242
        %p244 = pneg %p58
        %p245 = pneg %p55
        %p246 = pneg %p84
        %p247 = pneg %p81
        %s248 = smul.u32 2, %s16
        %p249 = scmp.lt.s32.totalorder %s248, 3
        %s250 = scalar_select %p249, %s248, 3
        %s251 = smul.addr %s250, 2
        %s252 = scalar_lea.vmem %s2, %s251
        %p253 = pneg %p110
        %p254 = pneg %p107
        %p255 = scmp.lt.s32.totalorder %s16, 1
        %s256 = scalar_select %p255, %s16, 1
        %s257 = smul.addr %s256, 4
        %s258 = scalar_lea.vmem %s3, %s257
        %p259 = pneg %p136
        %p260 = pneg %p133
        %p261 = scmp.lt.s32.totalorder %s16, 1
        %s262 = scalar_select %p261, %s16, 1
        %s263 = smul.addr %s262, 4
        %s264 = scalar_lea.vmem %s4, %s263
        %s265 = smul.u32 2, %s16
        %s266 = smul.u32 2, %s16
        %p267 = scmp.lt.s32.totalorder %s266, 3
        %s268 = scalar_select %p267, %s266, 3
        %s269 = smul.addr %s268, 2
        %s270 = scalar_lea.vmem %s2, %s269
        %s271 = smul.u32 2, %s16
        %p272 = scmp.lt.s32.totalorder %s16, 1
        %s273 = scalar_select %p272, %s16, 1
        %s274 = smul.addr %s273, 4
        %s275 = scalar_lea.vmem %s3, %s274
        %p276 = scmp.lt.s32.totalorder %s16, 1
        %s277 = scalar_select %p276, %s16, 1
        %s278 = smul.addr %s277, 4
        %s279 = scalar_lea.vmem %s4, %s278
        %v281 = vld [vmem:[%s0] sm:$0x3]
        %v282 = vld [vmem:[%s234] sm:$0xff]
        %v283 = vld [vmem:[%s234 + $0x8] sm:$0xff]
        %v284 = vld [vmem:[%s234 + $0x10] sm:$0xff]
        %v285 = vld [vmem:[%s234 + $0x18] sm:$0xff]
        %v286 = vld [vmem:[%s234 + $0x20] sm:$0xff]
        %v287 = vld [vmem:[%s234 + $0x28] sm:$0xff]
        %v288 = vld [vmem:[%s234 + $0x30] sm:$0x77]
        %v296 = vunpack.c.l.b16 %v282
        %v297 = vunpack.c.h.b16 %v282
        %v298 = vunpack.c.l.b16 %v283
        %v299 = vunpack.c.h.b16 %v283
        %v300 = vunpack.c.l.b16 %v284
        %v301 = vunpack.c.h.b16 %v284
        %v302 = vunpack.c.l.b16 %v285
        %v303 = vunpack.c.h.b16 %v285
        %v304 = vunpack.c.l.b16 %v286
        %v305 = vunpack.c.h.b16 %v286
        %v306 = vunpack.c.l.b16 %v287
        %v307 = vunpack.c.h.b16 %v287
        %v308 = vunpack.c.l.b16 %v288
        %v309 = vunpack.c.h.b16 %v288
        %v310 = vpack.c.b16 %v298, %v296
        %v311 = vpack.c.b16 %v299, %v297
        %v312 = vpack.c.b16 %v302, %v300
        %v313 = vpack.c.b16 %v303, %v301
        %v314 = vpack.c.b16 %v306, %v304
        %v315 = vpack.c.b16 %v307, %v305
        %v316 = vpack.c.b16 %v308, %v308
        %v317 = vpack.c.b16 %v309, %v309
        %vm324 = vcmask 441344
        %v326 = vsel %vm324, %v281, 0
        %vm328 = vcmask 1042432
        %v330 = vsel %vm328, %v316, 0
        %v333 = vsel %vm328, %v317, 0
        %335 = vmatprep.subr.bf16.mxu0 %v311
        %336 = vmatpush1.bf16.msra.mxu0 %v310
        %337 = vmatprep.subr.bf16.mxu0 %v313
        %338 = vmatpush1.bf16.msra.mxu0 %v312
        %339 = vmatprep.subr.bf16.mxu0 %v315
        %340 = vmatpush1.bf16.msra.mxu0 %v314
        %341 = vmatprep.subr.bf16.mxu0 %v333
        %342 = vmatpush1.bf16.msra.mxu0 %v330
        %343 = vmatprep.subr.bf16.mxu0 0
        %344 = vmatpush1.bf16.msra.mxu0 0
        %345 = vmatprep.subr.bf16.mxu0 0
        %346 = vmatpush1.bf16.msra.mxu0 0
        %347 = vmatprep.subr.bf16.mxu0 0
        %348 = vmatpush1.bf16.msra.mxu0 0
        %349 = vmatprep.subr.bf16.mxu0 0
        %350 = vmatpush1.bf16.msra.mxu0 0
        %351 = vmatprep.subr.bf16.mxu0 0
        %352 = vmatpush1.bf16.msra.mxu0 0
        %353 = vmatprep.subr.bf16.mxu0 0
        %354 = vmatpush1.bf16.msra.mxu0 0
        %355 = vmatprep.subr.bf16.mxu0 0
        %356 = vmatpush1.bf16.msra.mxu0 0
        %357 = vmatprep.subr.bf16.mxu0 0
        %358 = vmatpush1.bf16.msra.mxu0 0
        %359 = vmatprep.subr.bf16.mxu0 0
        %360 = vmatpush1.bf16.msra.mxu0 0
        %361 = vmatprep.subr.bf16.mxu0 0
        %362 = vmatpush1.bf16.msra.mxu0 0
        %363 = vmatprep.subr.bf16.mxu0 0
        %364 = vmatpush1.bf16.msra.mxu0 0
        %365 = vmatprep.subr.bf16.mxu0 0
        %366 = vmatpush1.bf16.msra.mxu0 0
        %367 = vmatprep.mubr.bf16.mxu0 0
        %368 = vmatmul.mubr.bf16.gmra.mrb[0].mxu0 %v326
        %v369 = vpop.f32.mrb[0].mxu0
        %v370 = vadd.f32 0.0, %v369
        %v371 = vpop.f32.mrb[0].mxu0
        %v372 = vadd.f32 0.0, %v371
        %v373 = vpop.f32.mrb[0].mxu0
        %v374 = vpop.f32.mrb[0].mxu0
        %375 = vdwg.mxu0
        %v376 = vpack.c.bf16 %v370, %v370
        %v377 = vpack.c.bf16 %v372, %v372
        %v380 = vcombine.low %v376, %v377
        %v382 = vunpack.c.l.s4 1983009808
        %v383 = vunpack.c.0.s8 %v382
        %v384 = vlaneseq
        %v385 = vshrl.u32 %v384, 7
        %v386 = vsub.s32 %v383, %v385
        %v387 = vrot.slane %v380, %v386
        %389 = vst [vmem:[%s270] sm:$0xf] %v387
        %vm390 = vcmask 1043456
        %v391 = vsel %vm390, %v370, 0.0
        %v392 = vsel %vm390, %v372, 0.0
        %v393 = vadd.f32 %v391, %v392
        %394 = vadd.xlane.f32.xlu0 %v393
        %v395 = vpop.xlane.xlu0 %394
        %vm396 = vcmask 3072
        %397 = vst.msk [vmem:[%s275] sm:$0xf] %vm396, %v395
        %v398 = vmul.f32 %v370, %v370
        %v399 = vmul.f32 %v372, %v372
        %v400 = vsel %vm390, %v398, 0.0
        %v401 = vsel %vm390, %v399, 0.0
        %v402 = vadd.f32 %v400, %v401
        %403 = vadd.xlane.f32.xlu0 %v402
        %v404 = vpop.xlane.xlu0 %403
        %405 = vst.msk [vmem:[%s279] sm:$0xf] %vm396, %v404
        %s406 = smul.u32 2, %s16
        %p407 = scmp.lt.s32.totalorder %s406, 3
        %s408 = scalar_select %p407, %s406, 3
        %s409 = smul.addr %s408, 2
        %s410 = scalar_lea.vmem %s2, %s409
        %p411 = scmp.lt.s32.totalorder %s16, 1
        %s412 = scalar_select %p411, %s16, 1
        %s413 = smul.addr %s412, 4
        %s414 = scalar_lea.vmem %s3, %s413
        %p415 = scmp.lt.s32.totalorder %s16, 1
        %s416 = scalar_select %p415, %s16, 1
        %s417 = smul.addr %s416, 4
        %s418 = scalar_lea.vmem %s4, %s417
        // Predicated region
        $region67: #{lram_block_forward.18} parent=61 // pred_check
          %p419 = pneg %p81
        $region68: #{lram_block_forward.18} parent=61 // pred_check_branch
          %421 = sbr.rel (%p419) target = $region70
        $region69: #{lram_block_forward.18} parent=61 // pred_region
          %s422 = smul.u32 2, %s16
        $region70: #{lram_block_forward.18} parent=61 // pred_fallthru
          _
        // Predicated region
        $region71: #{lram_block_forward.18} parent=61 // pred_check
          %p423 = pneg %p107
        $region72: #{lram_block_forward.18} parent=61 // pred_check_branch
          %425 = sbr.rel (%p423) target = $region74
        $region73: #{lram_block_forward.18} parent=61 // pred_region
          _
        $region74: #{lram_block_forward.18} parent=61 // pred_fallthru
          _
        // Predicated region
        $region75: #{lram_block_forward.18} parent=61 // pred_check
          %p426 = pneg %p133
        $region76: #{lram_block_forward.18} parent=61 // pred_check_branch
          %428 = sbr.rel (%p426) target = $region78
        $region77: #{lram_block_forward.18} parent=61 // pred_region
          _
        $region78: #{lram_block_forward.18} parent=61 // pred_fallthru
          _
      $region62: #{lram_block_forward.18} parent=5 // pred_fallthru
        _
      %p429 = scmp.le.s32.totalorder 2, %s11
      // Predicated region
      $region79: #{lram_block_forward.18} parent=5 // pred_check
        %p430 = pneg %p429
      $region80: #{lram_block_forward.18} parent=5 // pred_check_branch
        %432 = sbr.rel (%p430) target = $region82
      $region81: #{lram_block_forward.18} parent=5 // pred_region
        %s433 = ssub.s32 %s11, 2
        // Predicated region
        $region83: #{lram_block_forward.18} parent=81 // pred_check
          %p434 = pneg %p87
        $region84: #{lram_block_forward.18} parent=81 // pred_check_branch
          %436 = sbr.rel (%p434) target = $region86
        $region85: #{lram_block_forward.18} parent=81 // pred_region
          %s437 = smul.u32 2, %s17
          %p438 = scmp.lt.s32.totalorder %s437, 3
          %s439 = scalar_select %p438, %s437, 3
          %s440 = smul.addr %s439, 2
          %s441 = scalar_lea.vmem %s2, %s440
        $region86: #{lram_block_forward.18} parent=81 // pred_fallthru
          _
        // Predicated region
        $region87: #{lram_block_forward.18} parent=81 // pred_check
          %p442 = pneg %p113
        $region88: #{lram_block_forward.18} parent=81 // pred_check_branch
          %444 = sbr.rel (%p442) target = $region90
        $region89: #{lram_block_forward.18} parent=81 // pred_region
          %p445 = scmp.lt.s32.totalorder %s17, 1
          %s446 = scalar_select %p445, %s17, 1
          %s447 = smul.addr %s446, 4
          %s448 = scalar_lea.vmem %s3, %s447
        $region90: #{lram_block_forward.18} parent=81 // pred_fallthru
          _
        // Predicated region
        $region91: #{lram_block_forward.18} parent=81 // pred_check
          %p449 = pneg %p139
        $region92: #{lram_block_forward.18} parent=81 // pred_check_branch
          %451 = sbr.rel (%p449) target = $region94
        $region93: #{lram_block_forward.18} parent=81 // pred_region
          %p452 = scmp.lt.s32.totalorder %s17, 1
          %s453 = scalar_select %p452, %s17, 1
          %s454 = smul.addr %s453, 4
          %s455 = scalar_lea.vmem %s4, %s454
        $region94: #{lram_block_forward.18} parent=81 // pred_fallthru
          _
      $region82: #{lram_block_forward.18} parent=5 // pred_fallthru
        _
    $region6: #{lram_block_forward.18} parent=1 // loop_footer
      %s15 = sadd.s32 1, %s11
    $region7: #{lram_block_forward.18} parent=1 // loop_footer_branch
      %10 = sbr.rel target = $region3
    $region8: #{lram_block_forward.18} parent=1 // loop_exit
      _

// kernel: lram_block_forward.19
$region0: #{lram_block_forward.19}
  #allocation0 [shape = 'u32[]', space=smem, size = 0x4, offset = 0x4, fixed_abs, tag = 'smem constant byte address 0x4 - core index']
  #allocation1 [shape = 'u32[144,128]{1,0:T(1,128)}', space=vmem, size = 0x12000, scoped, tag = 'internal scratch']
  %s0 = inlined_call_operand.vmem [shape: bf16[4,512], index: 0, kind: input, shape index: {}]
  %s1 = inlined_call_operand.vmem [shape: f32[4,1], index: 1, kind: input, shape index: {}]
  %s2 = inlined_call_operand.vmem [shape: f32[4,1], index: 2, kind: input, shape index: {}]
  %s3 = inlined_call_operand.vmem [shape: f32[4,512], index: 3, kind: input, shape index: {}]
  %s4 = inlined_call_operand.vmem [shape: f32[4,512], index: 4, kind: output, shape index: {}]
  %s5 = sld [smem:[#allocation0]]
  $region49: #{lram_block_forward.19} parent=0
    _
  %s7 = ssub.s32 1, %s5
  %s8 = scalar_select 0, %s7, %s5
  loop: start=0, step=1, limit=4
  $region2: #{lram_block_forward.19} parent=0 // loop_pre_header
    _
  $region3: #{lram_block_forward.19} parent=0 // loop_header
    %s10 = sphi 0, %s14
    %p11 = scmp.ge.s32.totalorder %s10, 4
    %s20 = sphi 0, %s22
    %s23 = sphi 0, %s20
    %s24 = sphi 0, %s23
    %s40 = sphi 0, %s24
    %s44 = sphi 0, %s44
    %s46 = sphi 0, %s44
    %s47 = sphi 0, %s46
    %s61 = sphi 0, %s47
    %s65 = sphi 0, %s65
    %s67 = sphi 0, %s65
    %s68 = sphi 0, %s67
    %s82 = sphi 0, %s68
    %s88 = sphi 0, %s90
    %s91 = sphi 0, %s88
    %s92 = sphi 0, %s91
    %s108 = sphi 0, %s92
    %s114 = sphi 0, %s116
    %s117 = sphi 0, %s114
    %s118 = sphi 0, %s117
    %s134 = sphi 0, %s118
  $region4: #{lram_block_forward.19} parent=0 // loop_header_branch
    %13 = sbr.rel (%p11) target = $region8
  $region5: #{lram_block_forward.19} parent=0 // loop_body
    %s15 = ssub.s32 %s10, 1
    %s16 = ssub.s32 %s10, 2
    %s17 = sadd.s32 %s10, 1
    %s18 = ssub.s32 %s10, %s17
    %p19 = scmp.eq.s32.totalorder %s18, 0
    %s21 = sadd.s32 %s20, 1
    %s22 = scalar_select %p19, %s20, %s21
    %p25 = pneg %p19
    %p26 = scmp.eq.s32.totalorder %s10, 1
    %p27 = por %p25, %p26
    %p28 = scmp.ne.s32.totalorder %s20, %s23
    %p29 = scmp.eq.s32.totalorder %s10, 0
    %p30 = por %p28, %p29
    %p31 = scmp.ne.s32.totalorder %s20, %s23
    %p32 = scmp.eq.s32.totalorder %s15, 1
    %p33 = por %p31, %p32
    %p34 = scmp.ne.s32.totalorder %s23, %s24
    %p35 = scmp.eq.s32.totalorder %s15, 0
    %p36 = por %p34, %p35
    %p37 = scmp.ne.s32.totalorder %s23, %s24
    %p38 = scmp.eq.s32.totalorder %s16, 1
    %p39 = por %p37, %p38
    %p41 = scmp.ne.s32.totalorder %s24, %s40
    %p42 = scmp.eq.s32.totalorder %s16, 0
    %p43 = por %p41, %p42
    %s45 = sadd.s32 %s44, 1
    %p48 = scmp.eq.s32.totalorder %s10, 1
    %p49 = scmp.ne.s32.totalorder %s44, %s46
    %p50 = scmp.eq.s32.totalorder %s10, 0
    %p51 = por %p49, %p50
    %p52 = scmp.ne.s32.totalorder %s44, %s46
    %p53 = scmp.eq.s32.totalorder %s15, 1
    %p54 = por %p52, %p53
    %p55 = scmp.ne.s32.totalorder %s46, %s47
    %p56 = scmp.eq.s32.totalorder %s15, 0
    %p57 = por %p55, %p56
    %p58 = scmp.ne.s32.totalorder %s46, %s47
    %p59 = scmp.eq.s32.totalorder %s16, 1
    %p60 = por %p58, %p59
    %p62 = scmp.ne.s32.totalorder %s47, %s61
    %p63 = scmp.eq.s32.totalorder %s16, 0
    %p64 = por %p62, %p63
    %s66 = sadd.s32 %s65, 1
    %p69 = scmp.eq.s32.totalorder %s10, 1
    %p70 = scmp.ne.s32.totalorder %s65, %s67
    %p71 = scmp.eq.s32.totalorder %s10, 0
    %p72 = por %p70, %p71
    %p73 = scmp.ne.s32.totalorder %s65, %s67
    %p74 = scmp.eq.s32.totalorder %s15, 1
    %p75 = por %p73, %p74
    %p76 = scmp.ne.s32.totalorder %s67, %s68
    %p77 = scmp.eq.s32.totalorder %s15, 0
    %p78 = por %p76, %p77
    %p79 = scmp.ne.s32.totalorder %s67, %s68
    %p80 = scmp.eq.s32.totalorder %s16, 1
    %p81 = por %p79, %p80
    %p83 = scmp.ne.s32.totalorder %s68, %s82
    %p84 = scmp.eq.s32.totalorder %s16, 0
    %p85 = por %p83, %p84
    %s86 = ssub.s32 %s10, %s17
    %p87 = scmp.eq.s32.totalorder %s86, 0
    %s89 = sadd.s32 %s88, 1
    %s90 = scalar_select %p87, %s88, %s89
    %p93 = pneg %p87
    %p94 = scmp.eq.s32.totalorder %s10, 1
    %p95 = por %p93, %p94
    %p96 = scmp.ne.s32.totalorder %s88, %s91
    %p97 = scmp.eq.s32.totalorder %s10, 0
    %p98 = por %p96, %p97
    %p99 = scmp.ne.s32.totalorder %s88, %s91
    %p100 = scmp.eq.s32.totalorder %s15, 1
    %p101 = por %p99, %p100
    %p102 = scmp.ne.s32.totalorder %s91, %s92
    %p103 = scmp.eq.s32.totalorder %s15, 0
    %p104 = por %p102, %p103
    %p105 = scmp.ne.s32.totalorder %s91, %s92
    %p106 = scmp.eq.s32.totalorder %s16, 1
    %p107 = por %p105, %p106
    %p109 = scmp.ne.s32.totalorder %s92, %s108
    %p110 = scmp.eq.s32.totalorder %s16, 0
    %p111 = por %p109, %p110
    %s112 = ssub.s32 %s10, %s17
    %p113 = scmp.eq.s32.totalorder %s112, 0
    %s115 = sadd.s32 %s114, 1
    %s116 = scalar_select %p113, %s114, %s115
    %p119 = pneg %p113
    %p120 = scmp.eq.s32.totalorder %s10, 1
    %p121 = por %p119, %p120
    %p122 = scmp.ne.s32.totalorder %s114, %s117
    %p123 = scmp.eq.s32.totalorder %s10, 0
    %p124 = por %p122, %p123
    %p125 = scmp.ne.s32.totalorder %s114, %s117
    %p126 = scmp.eq.s32.totalorder %s15, 1
    %p127 = por %p125, %p126
    %p128 = scmp.ne.s32.totalorder %s117, %s118
    %p129 = scmp.eq.s32.totalorder %s15, 0
    %p130 = por %p128, %p129
    %p131 = scmp.ne.s32.totalorder %s117, %s118
    %p132 = scmp.eq.s32.totalorder %s16, 1
    %p133 = por %p131, %p132
    %p135 = scmp.ne.s32.totalorder %s118, %s134
    %p136 = scmp.eq.s32.totalorder %s16, 0
    %p137 = por %p135, %p136
    %p138 = scmp.le.s32.totalorder 1, %s10
    %p139 = scmp.lt.s32.totalorder %s10, 3
    %p140 = pnand %p138, %p139
    %p141 = pneg %p140
    // Predicated region
    $region9: #{lram_block_forward.19} parent=5 // pred_check
      _
    $region10: #{lram_block_forward.19} parent=5 // pred_check_branch
      %143 = sbr.rel (%p140) target = $region12
    $region11: #{lram_block_forward.19} parent=5 // pred_region
      %s144 = ssub.s32 %s10, 1
      // Predicated region
      $region13: #{lram_block_forward.19} parent=11 // pred_check
        %p145 = pneg %p57
      $region14: #{lram_block_forward.19} parent=11 // pred_check_branch
        %147 = sbr.rel (%p145) target = $region16
      $region15: #{lram_block_forward.19} parent=11 // pred_region
        _
      $region16: #{lram_block_forward.19} parent=11 // pred_fallthru
        _
      // Predicated region
      $region17: #{lram_block_forward.19} parent=11 // pred_check
        %p148 = pneg %p78
      $region18: #{lram_block_forward.19} parent=11 // pred_check_branch
        %150 = sbr.rel (%p148) target = $region20
      $region19: #{lram_block_forward.19} parent=11 // pred_region
        _
      $region20: #{lram_block_forward.19} parent=11 // pred_fallthru
        _
    $region12: #{lram_block_forward.19} parent=5 // pred_fallthru
      _
    %p151 = scmp.lt.s32.totalorder %s10, 2
    // Predicated region
    $region21: #{lram_block_forward.19} parent=5 // pred_check
      %p152 = pneg %p151
    $region22: #{lram_block_forward.19} parent=5 // pred_check_branch
      %154 = sbr.rel (%p152) target = $region24
    $region23: #{lram_block_forward.19} parent=5 // pred_region
      // Predicated region
      $region25: #{lram_block_forward.19} parent=23 // pred_check
        %p155 = pneg %p30
      $region26: #{lram_block_forward.19} parent=23 // pred_check_branch
        %157 = sbr.rel (%p155) target = $region28
      $region27: #{lram_block_forward.19} parent=23 // pred_region
        %s158 = smul.u32 2, %s10
        %p159 = scmp.lt.s32.totalorder %s158, 3
        %s160 = scalar_select %p159, %s158, 3
        %s161 = smul.addr %s160, 2
        %s162 = scalar_lea.vmem %s0, %s161
        %s163 = smul.u32 2, %s10
      $region28: #{lram_block_forward.19} parent=23 // pred_fallthru
        _
      // Predicated region
      $region29: #{lram_block_forward.19} parent=23 // pred_check
        %p164 = pneg %p98
      $region30: #{lram_block_forward.19} parent=23 // pred_check_branch
        %166 = sbr.rel (%p164) target = $region32
      $region31: #{lram_block_forward.19} parent=23 // pred_region
        %s167 = smul.u32 2, %s10
        %p168 = scmp.lt.s32.totalorder %s167, 3
        %s169 = scalar_select %p168, %s167, 3
        %s170 = smul.addr %s169, 4
        %s171 = scalar_lea.vmem %s3, %s170
        %s172 = smul.u32 2, %s10
      $region32: #{lram_block_forward.19} parent=23 // pred_fallthru
        _
    $region24: #{lram_block_forward.19} parent=5 // pred_fallthru
      _
    %p173 = scmp.le.s32.totalorder 1, %s10
    %p174 = scmp.lt.s32.totalorder %s10, 3
    %p175 = pnand %p173, %p174
    %p176 = pneg %p175
    // Predicated region
    $region33: #{lram_block_forward.19} parent=5 // pred_check
      _
    $region34: #{lram_block_forward.19} parent=5 // pred_check_branch
      %178 = sbr.rel (%p175) target = $region36
    $region35: #{lram_block_forward.19} parent=5 // pred_region
      %s179 = ssub.s32 %s10, 1
      %s180 = smul.u32 2, %s15
      %p181 = scmp.lt.s32.totalorder %s180, 3
      %s182 = scalar_select %p181, %s180, 3
      %s183 = smul.addr %s182, 2
      %s184 = scalar_lea.vmem %s0, %s183
      %p185 = pneg %p36
      %p186 = pneg %p33
      %p187 = pneg %p57
      %p188 = pneg %p54
      %p189 = pneg %p78
      %p190 = pneg %p75
      %s191 = smul.u32 2, %s15
      %p192 = scmp.lt.s32.totalorder %s191, 3
      %s193 = scalar_select %p192, %s191, 3
      %s194 = smul.addr %s193, 4
      %s195 = scalar_lea.vmem %s3, %s194
      %p196 = pneg %p104
      %p197 = pneg %p101
      %p198 = pneg %p130
      %p199 = pneg %p127
      %s200 = smul.u32 2, %s15
      %p201 = scmp.lt.s32.totalorder %s200, 3
      %s202 = scalar_select %p201, %s200, 3
      %s203 = smul.addr %s202, 4
      %s204 = scalar_lea.vmem %s4, %s203
      %s205 = smul.u32 2, %s15
      %p206 = scmp.lt.s32.totalorder %s205, 3
      %s207 = scalar_select %p206, %s205, 3
      %s208 = smul.addr %s207, 2
      %s209 = scalar_lea.vmem %s0, %s208
      %s210 = smul.u32 2, %s15
      %s211 = smul.u32 2, %s15
      %p212 = scmp.lt.s32.totalorder %s211, 3
      %s213 = scalar_select %p212, %s211, 3
      %s214 = smul.addr %s213, 4
      %s215 = scalar_lea.vmem %s3, %s214
      %s216 = smul.u32 2, %s15
      %s217 = smul.u32 2, %s15
      %p218 = scmp.lt.s32.totalorder %s217, 3
      %s219 = scalar_select %p218, %s217, 3
      %s220 = smul.addr %s219, 4
      %s221 = scalar_lea.vmem %s4, %s220
      %s222 = smul.u32 2, %s15
      %v223 = vld [vmem:[%s209] sm:$0xf]
      %v224 = vunpack.c.l.bf16 %v223
      %v225 = vld [vmem:[%s1] sm:$0xf]
      %227 = vset.pattern.permute.xlu0 0
      %228 = vperm.xlu0 %227, %v225
      %v229 = vpop.permute.xlu0 %228
      %v231 = vunpack.c.l.s4 839922192
      %v232 = vunpack.c.0.s8 %v231
      %v233 = vlaneseq
      %v234 = vshrl.u32 %v233, 7
      %v235 = vsub.s32 %v232, %v234
      %v236 = vrot.slane %v229, %v235
      %v238 = vmul.f32 %v224, %v236
      %v239 = vld [vmem:[%s2] sm:$0xf]
      %241 = vset.pattern.permute.xlu0 0
      %242 = vperm.xlu0 %241, %v239
      %v243 = vpop.permute.xlu0 %242
      %v245 = vunpack.c.l.s4 839922192
      %v246 = vunpack.c.0.s8 %v245
      %v247 = vlaneseq
      %v248 = vshrl.u32 %v247, 7
      %v249 = vsub.s32 %v246, %v248
      %v250 = vrot.slane %v243, %v249
      %v252 = vadd.f32 %v238, %v250
      %v253 = vmax.f32 %v252, 0.0
      %v254 = vld [vmem:[%s215] sm:$0xff]
      %v255 = vadd.f32 %v253, %v254
      %256 = vst [vmem:[%s221] sm:$0xff] %v255
      %s257 = smul.u32 2, %s15
      %p258 = scmp.lt.s32.totalorder %s257, 3
      %s259 = scalar_select %p258, %s257, 3
      %s260 = smul.addr %s259, 4
      %s261 = scalar_lea.vmem %s4, %s260
      // Predicated region
      $region37: #{lram_block_forward.19} parent=35 // pred_check
        %p262 = pneg %p127
      $region38: #{lram_block_forward.19} parent=35 // pred_check_branch
        %264 = sbr.rel (%p262) target = $region40
      $region39: #{lram_block_forward.19} parent=35 // pred_region
        %s265 = smul.u32 2, %s15
      $region40: #{lram_block_forward.19} parent=35 // pred_fallthru
        _
    $region36: #{lram_block_forward.19} parent=5 // pred_fallthru
      _
    %p266 = scmp.le.s32.totalorder 2, %s10
    // Predicated region
    $region41: #{lram_block_forward.19} parent=5 // pred_check
      %p267 = pneg %p266
    $region42: #{lram_block_forward.19} parent=5 // pred_check_branch
      %269 = sbr.rel (%p267) target = $region44
    $region43: #{lram_block_forward.19} parent=5 // pred_region
      %s270 = ssub.s32 %s10, 2
      // Predicated region
      $region45: #{lram_block_forward.19} parent=43 // pred_check
        %p271 = pneg %p133
      $region46: #{lram_block_forward.19} parent=43 // pred_check_branch
        %273 = sbr.rel (%p271) target = $region48
      $region47: #{lram_block_forward.19} parent=43 // pred_region
        %s274 = smul.u32 2, %s16
        %p275 = scmp.lt.s32.totalorder %s274, 3
        %s276 = scalar_select %p275, %s274, 3
        %s277 = smul.addr %s276, 4
        %s278 = scalar_lea.vmem %s4, %s277
      $region48: #{lram_block_forward.19} parent=43 // pred_fallthru
        _
    $region44: #{lram_block_forward.19} parent=5 // pred_fallthru
      _
  $region6: #{lram_block_forward.19} parent=0 // loop_footer
    %s14 = sadd.s32 1, %s10
  $region7: #{lram_block_forward.19} parent=0 // loop_footer_branch
    %9 = sbr.rel target = $region3
  $region8: #{lram_block_forward.19} parent=0 // loop_exit
    _

</llo_original>
